<compile_context>
chip_gen: v5e
topology: v5e:2x2
jax: 0.10.0
libtpu: 0.0.40
codegen_flags: <defaults>
</compile_context>

<pallas_src>
import functools

import jax
import jax.numpy as jnp
from jax.experimental import pallas as pl
from jax.experimental.pallas import tpu as pltpu


def transformer_kernel(x_ref, ln1_g_ref, ln1_b_ref, w_qkv_ref, w_fc_ref, b_fc_ref,
                       ln2_g_ref, ln2_b_ref, w1_ref, b1_ref, w2_ref, b2_ref,
                       o_ref, *, heads, seq_len):
    f32 = jnp.float32
    x = x_ref[...].astype(f32)                       # (rows, D), rows = bb * seq_len
    rows, _ = x.shape
    bb = rows // seq_len                             # sequences per grid step
    depth = w_qkv_ref.shape[0]

    def layer_norm(h, g, b):
        mu = jnp.mean(h, axis=-1, keepdims=True)
        c = h - mu
        var = jnp.mean(c * c, axis=-1, keepdims=True)
        return c * jax.lax.rsqrt(var + 1e-5) * g + b          # rsqrt -> EUP

    for l in range(depth):                                    # static unroll over encoder blocks
        # ---------------- Residual(PreNorm(Attention)) ----------------
        h = layer_norm(x, ln1_g_ref[l], ln1_b_ref[l])

        fc_acc = None
        for hi in range(heads):                               # static unroll; per-head weight slabs
            # Per-head projections over ALL rows in the block (A @ B^T form, no relayouts):
            # weights are stored (d, D) i.e. torch (out, in) layout.
            q_h = jnp.einsum("rk,dk->rd", h, w_qkv_ref[l, 0, hi], preferred_element_type=f32)
            k_h = jnp.einsum("rk,dk->rd", h, w_qkv_ref[l, 1, hi], preferred_element_type=f32)
            v_h = jnp.einsum("rk,dk->rd", h, w_qkv_ref[l, 2, hi], preferred_element_type=f32)

            o_parts = []
            for bi in range(bb):                              # sequences in the row block
                sl = slice(bi * seq_len, (bi + 1) * seq_len)  # sublane-aligned row slice (cheap)
                qs, ks, vs = q_h[sl], k_h[sl], v_h[sl]
                # NOTE: reference forward applies NO 1/sqrt(d) scaling.
                s = jnp.einsum("nd,md->nm", qs, ks, preferred_element_type=f32)
                s = s - jnp.max(s, axis=-1, keepdims=True)
                p = jnp.exp(s)                                # EUP
                a = p * pl.reciprocal(jnp.sum(p, axis=-1, keepdims=True), approx=True)  # EUP, no VALU divide
                o_parts.append(jnp.dot(a, vs, preferred_element_type=f32))              # (N, d)
            o_h = o_parts[0] if bb == 1 else jnp.concatenate(o_parts, axis=0)           # row concat (sublane)

            # fc contribution of this head: (rows, d) @ (d, D); avoids lane concat of head outputs.
            contrib = jnp.dot(o_h, w_fc_ref[l, hi], preferred_element_type=f32)
            fc_acc = contrib if fc_acc is None else fc_acc + contrib
        x = x + fc_acc + b_fc_ref[l]

        # ---------------- Residual(PreNorm(Mlp)) ----------------
        h = layer_norm(x, ln2_g_ref[l], ln2_b_ref[l])
        z = jnp.dot(h, w1_ref[l], preferred_element_type=f32) + b1_ref[l]
        z = jax.nn.gelu(z, approximate=True)                  # tanh approx (see module TODO)
        x = x + jnp.dot(z, w2_ref[l], preferred_element_type=f32) + b2_ref[l]

    # dropout(p=0.0) layers are the identity and are omitted.
    o_ref[...] = x.astype(o_ref.dtype)


def transformer_forward(x, kernel_params, heads, *, grid_blocks=None):
    B, N, D = x.shape
    p = kernel_params
    depth = p["w_qkv"].shape[0]
    mlp_hidden = p["w1"].shape[-1]

    if grid_blocks is None:
        # 2 grid steps keep both v7x TensorCores busy; on single-core v5e/v6e this is only one
        # extra ~0.35us pipeline step vs a fully collapsed grid.
        grid_blocks = 2 if (B % 2 == 0 and B >= 2) else 1
    assert B % grid_blocks == 0
    bb = B // grid_blocks
    rows = bb * N                                 # rows per grid step (multiple of 8 here)

    x2 = x.reshape(B * N, D)                      # dense 2-D row slab per grid step

    weight_order = ["ln1_g", "ln1_b", "w_qkv", "w_fc", "b_fc",
                    "ln2_g", "ln2_b", "w1", "b1", "w2", "b2"]
    weights = [p[k] for k in weight_order]

    def full_spec(arr):                           # resident, grid-invariant block
        zeros = (0,) * arr.ndim
        return pl.BlockSpec(arr.shape, lambda g, _z=zeros: _z)

    # Advisory cost estimate so XLA schedules the custom call sensibly.
    flops = depth * B * (8 * N * D * D + 4 * N * N * D + 4 * N * D * mlp_hidden)
    transcendentals = depth * B * (heads * N * N + N * mlp_hidden + heads * N + 2 * N)
    bytes_accessed = 4 * (2 * int(x.size) + sum(int(w.size) for w in weights))

    kernel = functools.partial(transformer_kernel, heads=heads, seq_len=N)

    out = pl.pallas_call(
        kernel,
        out_shape=jax.ShapeDtypeStruct((B * N, D), x.dtype),
        grid_spec=pltpu.PrefetchScalarGridSpec(
            num_scalar_prefetch=0,
            grid=(grid_blocks,),
            in_specs=[pl.BlockSpec((rows, D), lambda g: (g, 0))] + [full_spec(w) for w in weights],
            out_specs=pl.BlockSpec((rows, D), lambda g: (g, 0)),
        ),
        compiler_params=pltpu.CompilerParams(
            dimension_semantics=("parallel",),
        ),
        cost_estimate=pl.CostEstimate(
            flops=flops, transcendentals=transcendentals, bytes_accessed=bytes_accessed),
    )(x2, *weights)
    return out.reshape(B, N, D)


def pack_params(torch_params, heads):
    """Repack torch-layout per-layer params into the kernel's stacked, head-pre-split layout."""
    D = torch_params[0]["w_fc"].shape[0]
    d = D // heads

    def stack(fn):
        return jnp.stack([fn(p) for p in torch_params], axis=0)

    return dict(
        ln1_g=stack(lambda p: p["ln1_g"][None, :]),                    # (depth, 1, D)
        ln1_b=stack(lambda p: p["ln1_b"][None, :]),
        # qkv weight: torch (3D, D) with output channels ordered (chunk, head, d) -> (3, H, d, D)
        w_qkv=stack(lambda p: p["w_qkv"].reshape(3, heads, d, D)),     # (depth, 3, H, d, D)
        # fc weight in math layout (in, out) = w_fc.T; input features ordered (head, d) -> (H, d, D)
        w_fc=stack(lambda p: p["w_fc"].T.reshape(heads, d, D)),        # (depth, H, d, D)
        b_fc=stack(lambda p: p["b_fc"][None, :]),                      # (depth, 1, D)
        ln2_g=stack(lambda p: p["ln2_g"][None, :]),
        ln2_b=stack(lambda p: p["ln2_b"][None, :]),
        w1=stack(lambda p: p["w1"].T),                                 # (depth, D, mlp_hidden)
        b1=stack(lambda p: p["b1"][None, :]),                          # (depth, 1, mlp_hidden)
        w2=stack(lambda p: p["w2"].T),                                 # (depth, mlp_hidden, D)
        b2=stack(lambda p: p["b2"][None, :]),                          # (depth, 1, D)
    )


def transformer_reference(x, torch_params, heads):
    """Plain-JAX reference mirroring the PyTorch Transformer forward."""
    B, N, D = x.shape
    d = D // heads

    def ln(h, g, b):
        mu = jnp.mean(h, axis=-1, keepdims=True)
        var = jnp.mean((h - mu) ** 2, axis=-1, keepdims=True)
        return (h - mu) * jax.lax.rsqrt(var + 1e-5) * g + b

    for p in torch_params:
        h = ln(x, p["ln1_g"], p["ln1_b"])
        qkv = h @ p["w_qkv"].T                                   # (B, N, 3D)
        q, k, v = jnp.split(qkv, 3, axis=-1)

        def heads_split(t):                                      # 'b n (h d) -> b h n d'
            return t.reshape(B, N, heads, d).transpose(0, 2, 1, 3)

        qh, kh, vh = heads_split(q), heads_split(k), heads_split(v)
        s = jnp.einsum("bhnd,bhmd->bhnm", qh, kh)                # NOTE: no 1/sqrt(d) scale in the module
        a = jax.nn.softmax(s, axis=-1)
        o = jnp.einsum("bhnm,bhmd->bhnd", a, vh)
        o = o.transpose(0, 2, 1, 3).reshape(B, N, D)             # 'b h n d -> b n (h d)'
        x = x + (o @ p["w_fc"].T + p["b_fc"])

        h = ln(x, p["ln2_g"], p["ln2_b"])
        z = jax.nn.gelu(h @ p["w1"].T + p["b1"], approximate=True)
        x = x + (z @ p["w2"].T + p["b2"])
    return x


if __name__ == "__main__":
    # Small shapes consistent with the module: dim=32, heads=4 (head_dim=8), seq=8, batch=2,
    # depth=2 encoder blocks, mlp_hidden=64, all dropout probabilities = 0.
    B, N, D, H = 2, 8, 32, 4
    depth, mlp_hidden = 2, 64

    key = jax.random.PRNGKey(0)
    kx, key = jax.random.split(key)
    x = jax.random.normal(kx, (B, N, D), dtype=jnp.float32)

    torch_params = []
    bd, bh = 1.0 / (D ** 0.5), 1.0 / (mlp_hidden ** 0.5)
    for _ in range(depth):
        keys = jax.random.split(key, 12)
        key = keys[0]
        torch_params.append(dict(
            # LayerNorm params perturbed from the (1, 0) default so the scale/shift is exercised.
            ln1_g=1.0 + 0.1 * jax.random.normal(keys[1], (D,), jnp.float32),
            ln1_b=0.1 * jax.random.normal(keys[2], (D,), jnp.float32),
            w_qkv=jax.random.uniform(keys[3], (3 * D, D), jnp.float32, -bd, bd),   # bias=False
            w_fc=jax.random.uniform(keys[4], (D, D), jnp.float32, -bd, bd),
            b_fc=jax.random.uniform(keys[5], (D,), jnp.float32, -bd, bd),
            ln2_g=1.0 + 0.1 * jax.random.normal(keys[6], (D,), jnp.float32),
            ln2_b=0.1 * jax.random.normal(keys[7], (D,), jnp.float32),
            w1=jax.random.uniform(keys[8], (mlp_hidden, D), jnp.float32, -bd, bd),
            b1=jax.random.uniform(keys[9], (mlp_hidden,), jnp.float32, -bd, bd),
            w2=jax.random.uniform(keys[10], (D, mlp_hidden), jnp.float32, -bh, bh),
            b2=jax.random.uniform(keys[11], (D,), jnp.float32, -bh, bh),
        ))

    kernel_params = pack_params(torch_params, H)

    out = transformer_forward(x, kernel_params, H)
    out = jax.block_until_ready(out)

    ref = transformer_reference(x, torch_params, H)
    assert out.shape == (B, N, D)
    # Tolerance covers the EUP approximate reciprocal used for the softmax normalization.
    assert jnp.allclose(out, ref, atol=5e-3, rtol=5e-3), "mismatch vs reference"

    print("KERNEL_OK")
</pallas_src>

<mosaic_0001>
module attributes {stable_mosaic.version = 11 : i64} {
  func.func @transformer_kernel(%arg0: i32, %arg1: memref<8x32xf32, #tpu.memory_space<vmem>>, %arg2: memref<2x1x32xf32, #tpu.memory_space<vmem>>, %arg3: memref<2x1x32xf32, #tpu.memory_space<vmem>>, %arg4: memref<2x3x4x8x32xf32, #tpu.memory_space<vmem>>, %arg5: memref<2x4x8x32xf32, #tpu.memory_space<vmem>>, %arg6: memref<2x1x32xf32, #tpu.memory_space<vmem>>, %arg7: memref<2x1x32xf32, #tpu.memory_space<vmem>>, %arg8: memref<2x1x32xf32, #tpu.memory_space<vmem>>, %arg9: memref<2x32x64xf32, #tpu.memory_space<vmem>>, %arg10: memref<2x1x64xf32, #tpu.memory_space<vmem>>, %arg11: memref<2x64x32xf32, #tpu.memory_space<vmem>>, %arg12: memref<2x1x32xf32, #tpu.memory_space<vmem>>, %arg13: memref<8x32xf32, #tpu.memory_space<vmem>>) attributes {dimension_semantics = [#tpu.dimension_semantics<parallel>], iteration_bounds = array<i64: 2>, scalar_prefetch = 0 : i64, scratch_operands = 0 : i64, tpu.core_type = #tpu.core_type<tc>, window_params = [{transform_indices = @transform_0, window_bounds = array<i64: 8, 32>}, {pipeline_mode = #tpu.pipeline_mode<synchronous>, transform_indices = @transform_1, window_bounds = array<i64: 2, 1, 32>}, {pipeline_mode = #tpu.pipeline_mode<synchronous>, transform_indices = @transform_2, window_bounds = array<i64: 2, 1, 32>}, {pipeline_mode = #tpu.pipeline_mode<synchronous>, transform_indices = @transform_3, window_bounds = array<i64: 2, 3, 4, 8, 32>}, {pipeline_mode = #tpu.pipeline_mode<synchronous>, transform_indices = @transform_4, window_bounds = array<i64: 2, 4, 8, 32>}, {pipeline_mode = #tpu.pipeline_mode<synchronous>, transform_indices = @transform_5, window_bounds = array<i64: 2, 1, 32>}, {pipeline_mode = #tpu.pipeline_mode<synchronous>, transform_indices = @transform_6, window_bounds = array<i64: 2, 1, 32>}, {pipeline_mode = #tpu.pipeline_mode<synchronous>, transform_indices = @transform_7, window_bounds = array<i64: 2, 1, 32>}, {pipeline_mode = #tpu.pipeline_mode<synchronous>, transform_indices = @transform_8, window_bounds = array<i64: 2, 32, 64>}, {pipeline_mode = #tpu.pipeline_mode<synchronous>, transform_indices = @transform_9, window_bounds = array<i64: 2, 1, 64>}, {pipeline_mode = #tpu.pipeline_mode<synchronous>, transform_indices = @transform_10, window_bounds = array<i64: 2, 64, 32>}, {pipeline_mode = #tpu.pipeline_mode<synchronous>, transform_indices = @transform_11, window_bounds = array<i64: 2, 1, 32>}, {transform_indices = @transform_12, window_bounds = array<i64: 8, 32>}]} {
    %c0 = arith.constant 0 : index
    %c0_0 = arith.constant 0 : index
    %0 = vector.load %arg1[%c0, %c0_0] : memref<8x32xf32, #tpu.memory_space<vmem>>, vector<8x32xf32>
    %c0_1 = arith.constant 0 : index
    %c0_2 = arith.constant 0 : index
    %c0_3 = arith.constant 0 : index
    %1 = vector.load %arg2[%c0_1, %c0_2, %c0_3] : memref<2x1x32xf32, #tpu.memory_space<vmem>>, vector<1x1x32xf32>
    %2 = vector.shape_cast %1 : vector<1x1x32xf32> to vector<1x32xf32>
    %c0_4 = arith.constant 0 : index
    %c0_5 = arith.constant 0 : index
    %c0_6 = arith.constant 0 : index
    %3 = vector.load %arg3[%c0_4, %c0_5, %c0_6] : memref<2x1x32xf32, #tpu.memory_space<vmem>>, vector<1x1x32xf32>
    %4 = vector.shape_cast %3 : vector<1x1x32xf32> to vector<1x32xf32>
    %cst = arith.constant dense<0.000000e+00> : vector<8xf32>
    %5 = vector.multi_reduction <add>, %0, %cst [1] : vector<8x32xf32> to vector<8xf32>
    %6 = vector.shape_cast %5 : vector<8xf32> to vector<8x1xf32>
    %cst_7 = arith.constant 3.200000e+01 : f32
    %7 = vector.broadcast %cst_7 : f32 to vector<8x1xf32>
    %8 = arith.divf %6, %7 : vector<8x1xf32>
    %9 = vector.broadcast %8 : vector<8x1xf32> to vector<8x32xf32>
    %10 = arith.subf %0, %9 : vector<8x32xf32>
    %11 = arith.mulf %10, %10 : vector<8x32xf32>
    %cst_8 = arith.constant dense<0.000000e+00> : vector<8xf32>
    %12 = vector.multi_reduction <add>, %11, %cst_8 [1] : vector<8x32xf32> to vector<8xf32>
    %13 = vector.shape_cast %12 : vector<8xf32> to vector<8x1xf32>
    %cst_9 = arith.constant 3.200000e+01 : f32
    %14 = vector.broadcast %cst_9 : f32 to vector<8x1xf32>
    %15 = arith.divf %13, %14 : vector<8x1xf32>
    %cst_10 = arith.constant 9.99999974E-6 : f32
    %16 = vector.broadcast %cst_10 : f32 to vector<8x1xf32>
    %17 = arith.addf %15, %16 : vector<8x1xf32>
    %18 = math.rsqrt %17 : vector<8x1xf32>
    %19 = vector.broadcast %18 : vector<8x1xf32> to vector<8x32xf32>
    %20 = arith.mulf %10, %19 : vector<8x32xf32>
    %21 = vector.broadcast %2 : vector<1x32xf32> to vector<8x32xf32>
    %22 = arith.mulf %20, %21 : vector<8x32xf32>
    %23 = vector.broadcast %4 : vector<1x32xf32> to vector<8x32xf32>
    %24 = arith.addf %22, %23 : vector<8x32xf32>
    %c0_11 = arith.constant 0 : index
    %c0_12 = arith.constant 0 : index
    %c0_13 = arith.constant 0 : index
    %c0_14 = arith.constant 0 : index
    %c0_15 = arith.constant 0 : index
    %25 = vector.load %arg4[%c0_11, %c0_12, %c0_13, %c0_14, %c0_15] : memref<2x3x4x8x32xf32, #tpu.memory_space<vmem>>, vector<1x1x1x8x32xf32>
    %26 = vector.shape_cast %25 : vector<1x1x1x8x32xf32> to vector<8x32xf32>
    "tpu.trace_start"() <{level = 10 : i32, message = "rk,dk->rd"}> : () -> ()
    %cst_16 = arith.constant dense<0.000000e+00> : vector<8x8xf32>
    %27 = tpu.matmul %24, %26, %cst_16 {dimension_numbers = #tpu.dot_dimension_numbers<[1], [1], [0], [0], [0, 0, 1, 0], [], []>} : vector<8x32xf32>, vector<8x32xf32>, vector<8x8xf32> -> vector<8x8xf32>
    "tpu.trace_stop"() : () -> ()
    %c0_17 = arith.constant 0 : index
    %c1 = arith.constant 1 : index
    %c0_18 = arith.constant 0 : index
    %c0_19 = arith.constant 0 : index
    %c0_20 = arith.constant 0 : index
    %28 = vector.load %arg4[%c0_17, %c1, %c0_18, %c0_19, %c0_20] : memref<2x3x4x8x32xf32, #tpu.memory_space<vmem>>, vector<1x1x1x8x32xf32>
    %29 = vector.shape_cast %28 : vector<1x1x1x8x32xf32> to vector<8x32xf32>
    "tpu.trace_start"() <{level = 10 : i32, message = "rk,dk->rd"}> : () -> ()
    %cst_21 = arith.constant dense<0.000000e+00> : vector<8x8xf32>
    %30 = tpu.matmul %24, %29, %cst_21 {dimension_numbers = #tpu.dot_dimension_numbers<[1], [1], [0], [0], [0, 0, 1, 0], [], []>} : vector<8x32xf32>, vector<8x32xf32>, vector<8x8xf32> -> vector<8x8xf32>
    "tpu.trace_stop"() : () -> ()
    %c0_22 = arith.constant 0 : index
    %c2 = arith.constant 2 : index
    %c0_23 = arith.constant 0 : index
    %c0_24 = arith.constant 0 : index
    %c0_25 = arith.constant 0 : index
    %31 = vector.load %arg4[%c0_22, %c2, %c0_23, %c0_24, %c0_25] : memref<2x3x4x8x32xf32, #tpu.memory_space<vmem>>, vector<1x1x1x8x32xf32>
    %32 = vector.shape_cast %31 : vector<1x1x1x8x32xf32> to vector<8x32xf32>
    "tpu.trace_start"() <{level = 10 : i32, message = "rk,dk->rd"}> : () -> ()
    %cst_26 = arith.constant dense<0.000000e+00> : vector<8x8xf32>
    %33 = tpu.matmul %24, %32, %cst_26 {dimension_numbers = #tpu.dot_dimension_numbers<[1], [1], [0], [0], [0, 0, 1, 0], [], []>} : vector<8x32xf32>, vector<8x32xf32>, vector<8x8xf32> -> vector<8x8xf32>
    "tpu.trace_stop"() : () -> ()
    "tpu.trace_start"() <{level = 10 : i32, message = "nd,md->nm"}> : () -> ()
    %cst_27 = arith.constant dense<0.000000e+00> : vector<8x8xf32>
    %34 = tpu.matmul %27, %30, %cst_27 {dimension_numbers = #tpu.dot_dimension_numbers<[1], [1], [0], [0], [0, 0, 1, 0], [], []>} : vector<8x8xf32>, vector<8x8xf32>, vector<8x8xf32> -> vector<8x8xf32>
    "tpu.trace_stop"() : () -> ()
    %cst_28 = arith.constant dense<0xFF800000> : vector<8xf32>
    %35 = vector.multi_reduction <maximumf>, %34, %cst_28 [1] : vector<8x8xf32> to vector<8xf32>
    %36 = vector.shape_cast %35 : vector<8xf32> to vector<8x1xf32>
    %37 = vector.broadcast %36 : vector<8x1xf32> to vector<8x8xf32>
    %38 = arith.subf %34, %37 : vector<8x8xf32>
    %39 = math.exp %38 : vector<8x8xf32>
    %cst_29 = arith.constant dense<0.000000e+00> : vector<8xf32>
    %40 = vector.multi_reduction <add>, %39, %cst_29 [1] : vector<8x8xf32> to vector<8xf32>
    %41 = vector.shape_cast %40 : vector<8xf32> to vector<8x1xf32>
    %42 = tpu.reciprocal %41 {approx = true} : vector<8x1xf32> -> vector<8x1xf32>
    %43 = vector.broadcast %42 : vector<8x1xf32> to vector<8x8xf32>
    %44 = arith.mulf %39, %43 : vector<8x8xf32>
    %cst_30 = arith.constant dense<0.000000e+00> : vector<8x8xf32>
    %45 = tpu.matmul %44, %33, %cst_30 {dimension_numbers = #tpu.dot_dimension_numbers<[1], [0], [0], [1], [0, 0, 1, 1], [], []>} : vector<8x8xf32>, vector<8x8xf32>, vector<8x8xf32> -> vector<8x8xf32>
    %c0_31 = arith.constant 0 : index
    %c0_32 = arith.constant 0 : index
    %c0_33 = arith.constant 0 : index
    %c0_34 = arith.constant 0 : index
    %46 = vector.load %arg5[%c0_31, %c0_32, %c0_33, %c0_34] : memref<2x4x8x32xf32, #tpu.memory_space<vmem>>, vector<1x1x8x32xf32>
    %47 = vector.shape_cast %46 : vector<1x1x8x32xf32> to vector<8x32xf32>
    %cst_35 = arith.constant dense<0.000000e+00> : vector<8x32xf32>
    %48 = tpu.matmul %45, %47, %cst_35 {dimension_numbers = #tpu.dot_dimension_numbers<[1], [0], [0], [1], [0, 0, 1, 1], [], []>} : vector<8x8xf32>, vector<8x32xf32>, vector<8x32xf32> -> vector<8x32xf32>
    %c0_36 = arith.constant 0 : index
    %c0_37 = arith.constant 0 : index
    %c1_38 = arith.constant 1 : index
    %c0_39 = arith.constant 0 : index
    %c0_40 = arith.constant 0 : index
    %49 = vector.load %arg4[%c0_36, %c0_37, %c1_38, %c0_39, %c0_40] : memref<2x3x4x8x32xf32, #tpu.memory_space<vmem>>, vector<1x1x1x8x32xf32>
    %50 = vector.shape_cast %49 : vector<1x1x1x8x32xf32> to vector<8x32xf32>
    "tpu.trace_start"() <{level = 10 : i32, message = "rk,dk->rd"}> : () -> ()
    %cst_41 = arith.constant dense<0.000000e+00> : vector<8x8xf32>
    %51 = tpu.matmul %24, %50, %cst_41 {dimension_numbers = #tpu.dot_dimension_numbers<[1], [1], [0], [0], [0, 0, 1, 0], [], []>} : vector<8x32xf32>, vector<8x32xf32>, vector<8x8xf32> -> vector<8x8xf32>
    "tpu.trace_stop"() : () -> ()
    %c0_42 = arith.constant 0 : index
    %c1_43 = arith.constant 1 : index
    %c1_44 = arith.constant 1 : index
    %c0_45 = arith.constant 0 : index
    %c0_46 = arith.constant 0 : index
    %52 = vector.load %arg4[%c0_42, %c1_43, %c1_44, %c0_45, %c0_46] : memref<2x3x4x8x32xf32, #tpu.memory_space<vmem>>, vector<1x1x1x8x32xf32>
    %53 = vector.shape_cast %52 : vector<1x1x1x8x32xf32> to vector<8x32xf32>
    "tpu.trace_start"() <{level = 10 : i32, message = "rk,dk->rd"}> : () -> ()
    %cst_47 = arith.constant dense<0.000000e+00> : vector<8x8xf32>
    %54 = tpu.matmul %24, %53, %cst_47 {dimension_numbers = #tpu.dot_dimension_numbers<[1], [1], [0], [0], [0, 0, 1, 0], [], []>} : vector<8x32xf32>, vector<8x32xf32>, vector<8x8xf32> -> vector<8x8xf32>
    "tpu.trace_stop"() : () -> ()
    %c0_48 = arith.constant 0 : index
    %c2_49 = arith.constant 2 : index
    %c1_50 = arith.constant 1 : index
    %c0_51 = arith.constant 0 : index
    %c0_52 = arith.constant 0 : index
    %55 = vector.load %arg4[%c0_48, %c2_49, %c1_50, %c0_51, %c0_52] : memref<2x3x4x8x32xf32, #tpu.memory_space<vmem>>, vector<1x1x1x8x32xf32>
    %56 = vector.shape_cast %55 : vector<1x1x1x8x32xf32> to vector<8x32xf32>
    "tpu.trace_start"() <{level = 10 : i32, message = "rk,dk->rd"}> : () -> ()
    %cst_53 = arith.constant dense<0.000000e+00> : vector<8x8xf32>
    %57 = tpu.matmul %24, %56, %cst_53 {dimension_numbers = #tpu.dot_dimension_numbers<[1], [1], [0], [0], [0, 0, 1, 0], [], []>} : vector<8x32xf32>, vector<8x32xf32>, vector<8x8xf32> -> vector<8x8xf32>
    "tpu.trace_stop"() : () -> ()
    "tpu.trace_start"() <{level = 10 : i32, message = "nd,md->nm"}> : () -> ()
    %cst_54 = arith.constant dense<0.000000e+00> : vector<8x8xf32>
    %58 = tpu.matmul %51, %54, %cst_54 {dimension_numbers = #tpu.dot_dimension_numbers<[1], [1], [0], [0], [0, 0, 1, 0], [], []>} : vector<8x8xf32>, vector<8x8xf32>, vector<8x8xf32> -> vector<8x8xf32>
    "tpu.trace_stop"() : () -> ()
    %cst_55 = arith.constant dense<0xFF800000> : vector<8xf32>
    %59 = vector.multi_reduction <maximumf>, %58, %cst_55 [1] : vector<8x8xf32> to vector<8xf32>
    %60 = vector.shape_cast %59 : vector<8xf32> to vector<8x1xf32>
    %61 = vector.broadcast %60 : vector<8x1xf32> to vector<8x8xf32>
    %62 = arith.subf %58, %61 : vector<8x8xf32>
    %63 = math.exp %62 : vector<8x8xf32>
    %cst_56 = arith.constant dense<0.000000e+00> : vector<8xf32>
    %64 = vector.multi_reduction <add>, %63, %cst_56 [1] : vector<8x8xf32> to vector<8xf32>
    %65 = vector.shape_cast %64 : vector<8xf32> to vector<8x1xf32>
    %66 = tpu.reciprocal %65 {approx = true} : vector<8x1xf32> -> vector<8x1xf32>
    %67 = vector.broadcast %66 : vector<8x1xf32> to vector<8x8xf32>
    %68 = arith.mulf %63, %67 : vector<8x8xf32>
    %cst_57 = arith.constant dense<0.000000e+00> : vector<8x8xf32>
    %69 = tpu.matmul %68, %57, %cst_57 {dimension_numbers = #tpu.dot_dimension_numbers<[1], [0], [0], [1], [0, 0, 1, 1], [], []>} : vector<8x8xf32>, vector<8x8xf32>, vector<8x8xf32> -> vector<8x8xf32>
    %c0_58 = arith.constant 0 : index
    %c1_59 = arith.constant 1 : index
    %c0_60 = arith.constant 0 : index
    %c0_61 = arith.constant 0 : index
    %70 = vector.load %arg5[%c0_58, %c1_59, %c0_60, %c0_61] : memref<2x4x8x32xf32, #tpu.memory_space<vmem>>, vector<1x1x8x32xf32>
    %71 = vector.shape_cast %70 : vector<1x1x8x32xf32> to vector<8x32xf32>
    %cst_62 = arith.constant dense<0.000000e+00> : vector<8x32xf32>
    %72 = tpu.matmul %69, %71, %cst_62 {dimension_numbers = #tpu.dot_dimension_numbers<[1], [0], [0], [1], [0, 0, 1, 1], [], []>} : vector<8x8xf32>, vector<8x32xf32>, vector<8x32xf32> -> vector<8x32xf32>
    %73 = arith.addf %48, %72 : vector<8x32xf32>
    %c0_63 = arith.constant 0 : index
    %c0_64 = arith.constant 0 : index
    %c2_65 = arith.constant 2 : index
    %c0_66 = arith.constant 0 : index
    %c0_67 = arith.constant 0 : index
    %74 = vector.load %arg4[%c0_63, %c0_64, %c2_65, %c0_66, %c0_67] : memref<2x3x4x8x32xf32, #tpu.memory_space<vmem>>, vector<1x1x1x8x32xf32>
    %75 = vector.shape_cast %74 : vector<1x1x1x8x32xf32> to vector<8x32xf32>
    "tpu.trace_start"() <{level = 10 : i32, message = "rk,dk->rd"}> : () -> ()
    %cst_68 = arith.constant dense<0.000000e+00> : vector<8x8xf32>
    %76 = tpu.matmul %24, %75, %cst_68 {dimension_numbers = #tpu.dot_dimension_numbers<[1], [1], [0], [0], [0, 0, 1, 0], [], []>} : vector<8x32xf32>, vector<8x32xf32>, vector<8x8xf32> -> vector<8x8xf32>
    "tpu.trace_stop"() : () -> ()
    %c0_69 = arith.constant 0 : index
    %c1_70 = arith.constant 1 : index
    %c2_71 = arith.constant 2 : index
    %c0_72 = arith.constant 0 : index
    %c0_73 = arith.constant 0 : index
    %77 = vector.load %arg4[%c0_69, %c1_70, %c2_71, %c0_72, %c0_73] : memref<2x3x4x8x32xf32, #tpu.memory_space<vmem>>, vector<1x1x1x8x32xf32>
    %78 = vector.shape_cast %77 : vector<1x1x1x8x32xf32> to vector<8x32xf32>
    "tpu.trace_start"() <{level = 10 : i32, message = "rk,dk->rd"}> : () -> ()
    %cst_74 = arith.constant dense<0.000000e+00> : vector<8x8xf32>
    %79 = tpu.matmul %24, %78, %cst_74 {dimension_numbers = #tpu.dot_dimension_numbers<[1], [1], [0], [0], [0, 0, 1, 0], [], []>} : vector<8x32xf32>, vector<8x32xf32>, vector<8x8xf32> -> vector<8x8xf32>
    "tpu.trace_stop"() : () -> ()
    %c0_75 = arith.constant 0 : index
    %c2_76 = arith.constant 2 : index
    %c2_77 = arith.constant 2 : index
    %c0_78 = arith.constant 0 : index
    %c0_79 = arith.constant 0 : index
    %80 = vector.load %arg4[%c0_75, %c2_76, %c2_77, %c0_78, %c0_79] : memref<2x3x4x8x32xf32, #tpu.memory_space<vmem>>, vector<1x1x1x8x32xf32>
    %81 = vector.shape_cast %80 : vector<1x1x1x8x32xf32> to vector<8x32xf32>
    "tpu.trace_start"() <{level = 10 : i32, message = "rk,dk->rd"}> : () -> ()
    %cst_80 = arith.constant dense<0.000000e+00> : vector<8x8xf32>
    %82 = tpu.matmul %24, %81, %cst_80 {dimension_numbers = #tpu.dot_dimension_numbers<[1], [1], [0], [0], [0, 0, 1, 0], [], []>} : vector<8x32xf32>, vector<8x32xf32>, vector<8x8xf32> -> vector<8x8xf32>
    "tpu.trace_stop"() : () -> ()
    "tpu.trace_start"() <{level = 10 : i32, message = "nd,md->nm"}> : () -> ()
    %cst_81 = arith.constant dense<0.000000e+00> : vector<8x8xf32>
    %83 = tpu.matmul %76, %79, %cst_81 {dimension_numbers = #tpu.dot_dimension_numbers<[1], [1], [0], [0], [0, 0, 1, 0], [], []>} : vector<8x8xf32>, vector<8x8xf32>, vector<8x8xf32> -> vector<8x8xf32>
    "tpu.trace_stop"() : () -> ()
    %cst_82 = arith.constant dense<0xFF800000> : vector<8xf32>
    %84 = vector.multi_reduction <maximumf>, %83, %cst_82 [1] : vector<8x8xf32> to vector<8xf32>
    %85 = vector.shape_cast %84 : vector<8xf32> to vector<8x1xf32>
    %86 = vector.broadcast %85 : vector<8x1xf32> to vector<8x8xf32>
    %87 = arith.subf %83, %86 : vector<8x8xf32>
    %88 = math.exp %87 : vector<8x8xf32>
    %cst_83 = arith.constant dense<0.000000e+00> : vector<8xf32>
    %89 = vector.multi_reduction <add>, %88, %cst_83 [1] : vector<8x8xf32> to vector<8xf32>
    %90 = vector.shape_cast %89 : vector<8xf32> to vector<8x1xf32>
    %91 = tpu.reciprocal %90 {approx = true} : vector<8x1xf32> -> vector<8x1xf32>
    %92 = vector.broadcast %91 : vector<8x1xf32> to vector<8x8xf32>
    %93 = arith.mulf %88, %92 : vector<8x8xf32>
    %cst_84 = arith.constant dense<0.000000e+00> : vector<8x8xf32>
    %94 = tpu.matmul %93, %82, %cst_84 {dimension_numbers = #tpu.dot_dimension_numbers<[1], [0], [0], [1], [0, 0, 1, 1], [], []>} : vector<8x8xf32>, vector<8x8xf32>, vector<8x8xf32> -> vector<8x8xf32>
    %c0_85 = arith.constant 0 : index
    %c2_86 = arith.constant 2 : index
    %c0_87 = arith.constant 0 : index
    %c0_88 = arith.constant 0 : index
    %95 = vector.load %arg5[%c0_85, %c2_86, %c0_87, %c0_88] : memref<2x4x8x32xf32, #tpu.memory_space<vmem>>, vector<1x1x8x32xf32>
    %96 = vector.shape_cast %95 : vector<1x1x8x32xf32> to vector<8x32xf32>
    %cst_89 = arith.constant dense<0.000000e+00> : vector<8x32xf32>
    %97 = tpu.matmul %94, %96, %cst_89 {dimension_numbers = #tpu.dot_dimension_numbers<[1], [0], [0], [1], [0, 0, 1, 1], [], []>} : vector<8x8xf32>, vector<8x32xf32>, vector<8x32xf32> -> vector<8x32xf32>
    %98 = arith.addf %73, %97 : vector<8x32xf32>
    %c0_90 = arith.constant 0 : index
    %c0_91 = arith.constant 0 : index
    %c3 = arith.constant 3 : index
    %c0_92 = arith.constant 0 : index
    %c0_93 = arith.constant 0 : index
    %99 = vector.load %arg4[%c0_90, %c0_91, %c3, %c0_92, %c0_93] : memref<2x3x4x8x32xf32, #tpu.memory_space<vmem>>, vector<1x1x1x8x32xf32>
    %100 = vector.shape_cast %99 : vector<1x1x1x8x32xf32> to vector<8x32xf32>
    "tpu.trace_start"() <{level = 10 : i32, message = "rk,dk->rd"}> : () -> ()
    %cst_94 = arith.constant dense<0.000000e+00> : vector<8x8xf32>
    %101 = tpu.matmul %24, %100, %cst_94 {dimension_numbers = #tpu.dot_dimension_numbers<[1], [1], [0], [0], [0, 0, 1, 0], [], []>} : vector<8x32xf32>, vector<8x32xf32>, vector<8x8xf32> -> vector<8x8xf32>
    "tpu.trace_stop"() : () -> ()
    %c0_95 = arith.constant 0 : index
    %c1_96 = arith.constant 1 : index
    %c3_97 = arith.constant 3 : index
    %c0_98 = arith.constant 0 : index
    %c0_99 = arith.constant 0 : index
    %102 = vector.load %arg4[%c0_95, %c1_96, %c3_97, %c0_98, %c0_99] : memref<2x3x4x8x32xf32, #tpu.memory_space<vmem>>, vector<1x1x1x8x32xf32>
    %103 = vector.shape_cast %102 : vector<1x1x1x8x32xf32> to vector<8x32xf32>
    "tpu.trace_start"() <{level = 10 : i32, message = "rk,dk->rd"}> : () -> ()
    %cst_100 = arith.constant dense<0.000000e+00> : vector<8x8xf32>
    %104 = tpu.matmul %24, %103, %cst_100 {dimension_numbers = #tpu.dot_dimension_numbers<[1], [1], [0], [0], [0, 0, 1, 0], [], []>} : vector<8x32xf32>, vector<8x32xf32>, vector<8x8xf32> -> vector<8x8xf32>
    "tpu.trace_stop"() : () -> ()
    %c0_101 = arith.constant 0 : index
    %c2_102 = arith.constant 2 : index
    %c3_103 = arith.constant 3 : index
    %c0_104 = arith.constant 0 : index
    %c0_105 = arith.constant 0 : index
    %105 = vector.load %arg4[%c0_101, %c2_102, %c3_103, %c0_104, %c0_105] : memref<2x3x4x8x32xf32, #tpu.memory_space<vmem>>, vector<1x1x1x8x32xf32>
    %106 = vector.shape_cast %105 : vector<1x1x1x8x32xf32> to vector<8x32xf32>
    "tpu.trace_start"() <{level = 10 : i32, message = "rk,dk->rd"}> : () -> ()
    %cst_106 = arith.constant dense<0.000000e+00> : vector<8x8xf32>
    %107 = tpu.matmul %24, %106, %cst_106 {dimension_numbers = #tpu.dot_dimension_numbers<[1], [1], [0], [0], [0, 0, 1, 0], [], []>} : vector<8x32xf32>, vector<8x32xf32>, vector<8x8xf32> -> vector<8x8xf32>
    "tpu.trace_stop"() : () -> ()
    "tpu.trace_start"() <{level = 10 : i32, message = "nd,md->nm"}> : () -> ()
    %cst_107 = arith.constant dense<0.000000e+00> : vector<8x8xf32>
    %108 = tpu.matmul %101, %104, %cst_107 {dimension_numbers = #tpu.dot_dimension_numbers<[1], [1], [0], [0], [0, 0, 1, 0], [], []>} : vector<8x8xf32>, vector<8x8xf32>, vector<8x8xf32> -> vector<8x8xf32>
    "tpu.trace_stop"() : () -> ()
    %cst_108 = arith.constant dense<0xFF800000> : vector<8xf32>
    %109 = vector.multi_reduction <maximumf>, %108, %cst_108 [1] : vector<8x8xf32> to vector<8xf32>
    %110 = vector.shape_cast %109 : vector<8xf32> to vector<8x1xf32>
    %111 = vector.broadcast %110 : vector<8x1xf32> to vector<8x8xf32>
    %112 = arith.subf %108, %111 : vector<8x8xf32>
    %113 = math.exp %112 : vector<8x8xf32>
    %cst_109 = arith.constant dense<0.000000e+00> : vector<8xf32>
    %114 = vector.multi_reduction <add>, %113, %cst_109 [1] : vector<8x8xf32> to vector<8xf32>
    %115 = vector.shape_cast %114 : vector<8xf32> to vector<8x1xf32>
    %116 = tpu.reciprocal %115 {approx = true} : vector<8x1xf32> -> vector<8x1xf32>
    %117 = vector.broadcast %116 : vector<8x1xf32> to vector<8x8xf32>
    %118 = arith.mulf %113, %117 : vector<8x8xf32>
    %cst_110 = arith.constant dense<0.000000e+00> : vector<8x8xf32>
    %119 = tpu.matmul %118, %107, %cst_110 {dimension_numbers = #tpu.dot_dimension_numbers<[1], [0], [0], [1], [0, 0, 1, 1], [], []>} : vector<8x8xf32>, vector<8x8xf32>, vector<8x8xf32> -> vector<8x8xf32>
    %c0_111 = arith.constant 0 : index
    %c3_112 = arith.constant 3 : index
    %c0_113 = arith.constant 0 : index
    %c0_114 = arith.constant 0 : index
    %120 = vector.load %arg5[%c0_111, %c3_112, %c0_113, %c0_114] : memref<2x4x8x32xf32, #tpu.memory_space<vmem>>, vector<1x1x8x32xf32>
    %121 = vector.shape_cast %120 : vector<1x1x8x32xf32> to vector<8x32xf32>
    %cst_115 = arith.constant dense<0.000000e+00> : vector<8x32xf32>
    %122 = tpu.matmul %119, %121, %cst_115 {dimension_numbers = #tpu.dot_dimension_numbers<[1], [0], [0], [1], [0, 0, 1, 1], [], []>} : vector<8x8xf32>, vector<8x32xf32>, vector<8x32xf32> -> vector<8x32xf32>
    %123 = arith.addf %98, %122 : vector<8x32xf32>
    %124 = arith.addf %0, %123 : vector<8x32xf32>
    %c0_116 = arith.constant 0 : index
    %c0_117 = arith.constant 0 : index
    %c0_118 = arith.constant 0 : index
    %125 = vector.load %arg6[%c0_116, %c0_117, %c0_118] : memref<2x1x32xf32, #tpu.memory_space<vmem>>, vector<1x1x32xf32>
    %126 = vector.shape_cast %125 : vector<1x1x32xf32> to vector<1x32xf32>
    %127 = vector.broadcast %126 : vector<1x32xf32> to vector<8x32xf32>
    %128 = arith.addf %124, %127 : vector<8x32xf32>
    %c0_119 = arith.constant 0 : index
    %c0_120 = arith.constant 0 : index
    %c0_121 = arith.constant 0 : index
    %129 = vector.load %arg7[%c0_119, %c0_120, %c0_121] : memref<2x1x32xf32, #tpu.memory_space<vmem>>, vector<1x1x32xf32>
    %130 = vector.shape_cast %129 : vector<1x1x32xf32> to vector<1x32xf32>
    %c0_122 = arith.constant 0 : index
    %c0_123 = arith.constant 0 : index
    %c0_124 = arith.constant 0 : index
    %131 = vector.load %arg8[%c0_122, %c0_123, %c0_124] : memref<2x1x32xf32, #tpu.memory_space<vmem>>, vector<1x1x32xf32>
    %132 = vector.shape_cast %131 : vector<1x1x32xf32> to vector<1x32xf32>
    %cst_125 = arith.constant dense<0.000000e+00> : vector<8xf32>
    %133 = vector.multi_reduction <add>, %128, %cst_125 [1] : vector<8x32xf32> to vector<8xf32>
    %134 = vector.shape_cast %133 : vector<8xf32> to vector<8x1xf32>
    %cst_126 = arith.constant 3.200000e+01 : f32
    %135 = vector.broadcast %cst_126 : f32 to vector<8x1xf32>
    %136 = arith.divf %134, %135 : vector<8x1xf32>
    %137 = vector.broadcast %136 : vector<8x1xf32> to vector<8x32xf32>
    %138 = arith.subf %128, %137 : vector<8x32xf32>
    %139 = arith.mulf %138, %138 : vector<8x32xf32>
    %cst_127 = arith.constant dense<0.000000e+00> : vector<8xf32>
    %140 = vector.multi_reduction <add>, %139, %cst_127 [1] : vector<8x32xf32> to vector<8xf32>
    %141 = vector.shape_cast %140 : vector<8xf32> to vector<8x1xf32>
    %cst_128 = arith.constant 3.200000e+01 : f32
    %142 = vector.broadcast %cst_128 : f32 to vector<8x1xf32>
    %143 = arith.divf %141, %142 : vector<8x1xf32>
    %cst_129 = arith.constant 9.99999974E-6 : f32
    %144 = vector.broadcast %cst_129 : f32 to vector<8x1xf32>
    %145 = arith.addf %143, %144 : vector<8x1xf32>
    %146 = math.rsqrt %145 : vector<8x1xf32>
    %147 = vector.broadcast %146 : vector<8x1xf32> to vector<8x32xf32>
    %148 = arith.mulf %138, %147 : vector<8x32xf32>
    %149 = vector.broadcast %130 : vector<1x32xf32> to vector<8x32xf32>
    %150 = arith.mulf %148, %149 : vector<8x32xf32>
    %151 = vector.broadcast %132 : vector<1x32xf32> to vector<8x32xf32>
    %152 = arith.addf %150, %151 : vector<8x32xf32>
    %c0_130 = arith.constant 0 : index
    %c0_131 = arith.constant 0 : index
    %c0_132 = arith.constant 0 : index
    %153 = vector.load %arg9[%c0_130, %c0_131, %c0_132] : memref<2x32x64xf32, #tpu.memory_space<vmem>>, vector<1x32x64xf32>
    %154 = vector.shape_cast %153 : vector<1x32x64xf32> to vector<32x64xf32>
    %cst_133 = arith.constant dense<0.000000e+00> : vector<8x64xf32>
    %155 = tpu.matmul %152, %154, %cst_133 {dimension_numbers = #tpu.dot_dimension_numbers<[1], [0], [0], [1], [0, 0, 1, 1], [], []>} : vector<8x32xf32>, vector<32x64xf32>, vector<8x64xf32> -> vector<8x64xf32>
    %c0_134 = arith.constant 0 : index
    %c0_135 = arith.constant 0 : index
    %c0_136 = arith.constant 0 : index
    %156 = vector.load %arg10[%c0_134, %c0_135, %c0_136] : memref<2x1x64xf32, #tpu.memory_space<vmem>>, vector<1x1x64xf32>
    %157 = vector.shape_cast %156 : vector<1x1x64xf32> to vector<1x64xf32>
    %158 = vector.broadcast %157 : vector<1x64xf32> to vector<8x64xf32>
    %159 = arith.addf %155, %158 : vector<8x64xf32>
    %160 = arith.mulf %159, %159 : vector<8x64xf32>
    %161 = arith.mulf %159, %160 : vector<8x64xf32>
    %cst_137 = arith.constant 4.471500e-02 : f32
    %162 = vector.broadcast %cst_137 : f32 to vector<8x64xf32>
    %163 = arith.mulf %162, %161 : vector<8x64xf32>
    %164 = arith.addf %159, %163 : vector<8x64xf32>
    %cst_138 = arith.constant 0.797884583 : f32
    %165 = vector.broadcast %cst_138 : f32 to vector<8x64xf32>
    %166 = arith.mulf %165, %164 : vector<8x64xf32>
    %167 = math.tanh %166 : vector<8x64xf32>
    %cst_139 = arith.constant 1.000000e+00 : f32
    %168 = vector.broadcast %cst_139 : f32 to vector<8x64xf32>
    %169 = arith.addf %168, %167 : vector<8x64xf32>
    %cst_140 = arith.constant 5.000000e-01 : f32
    %170 = vector.broadcast %cst_140 : f32 to vector<8x64xf32>
    %171 = arith.mulf %170, %169 : vector<8x64xf32>
    %172 = arith.mulf %159, %171 : vector<8x64xf32>
    %c0_141 = arith.constant 0 : index
    %c0_142 = arith.constant 0 : index
    %c0_143 = arith.constant 0 : index
    %173 = vector.load %arg11[%c0_141, %c0_142, %c0_143] : memref<2x64x32xf32, #tpu.memory_space<vmem>>, vector<1x64x32xf32>
    %174 = vector.shape_cast %173 : vector<1x64x32xf32> to vector<64x32xf32>
    %cst_144 = arith.constant dense<0.000000e+00> : vector<8x32xf32>
    %175 = tpu.matmul %172, %174, %cst_144 {dimension_numbers = #tpu.dot_dimension_numbers<[1], [0], [0], [1], [0, 0, 1, 1], [], []>} : vector<8x64xf32>, vector<64x32xf32>, vector<8x32xf32> -> vector<8x32xf32>
    %176 = arith.addf %128, %175 : vector<8x32xf32>
    %c0_145 = arith.constant 0 : index
    %c0_146 = arith.constant 0 : index
    %c0_147 = arith.constant 0 : index
    %177 = vector.load %arg12[%c0_145, %c0_146, %c0_147] : memref<2x1x32xf32, #tpu.memory_space<vmem>>, vector<1x1x32xf32>
    %178 = vector.shape_cast %177 : vector<1x1x32xf32> to vector<1x32xf32>
    %179 = vector.broadcast %178 : vector<1x32xf32> to vector<8x32xf32>
    %180 = arith.addf %176, %179 : vector<8x32xf32>
    %c1_148 = arith.constant 1 : index
    %c0_149 = arith.constant 0 : index
    %c0_150 = arith.constant 0 : index
    %181 = vector.load %arg2[%c1_148, %c0_149, %c0_150] : memref<2x1x32xf32, #tpu.memory_space<vmem>>, vector<1x1x32xf32>
    %182 = vector.shape_cast %181 : vector<1x1x32xf32> to vector<1x32xf32>
    %c1_151 = arith.constant 1 : index
    %c0_152 = arith.constant 0 : index
    %c0_153 = arith.constant 0 : index
    %183 = vector.load %arg3[%c1_151, %c0_152, %c0_153] : memref<2x1x32xf32, #tpu.memory_space<vmem>>, vector<1x1x32xf32>
    %184 = vector.shape_cast %183 : vector<1x1x32xf32> to vector<1x32xf32>
    %cst_154 = arith.constant dense<0.000000e+00> : vector<8xf32>
    %185 = vector.multi_reduction <add>, %180, %cst_154 [1] : vector<8x32xf32> to vector<8xf32>
    %186 = vector.shape_cast %185 : vector<8xf32> to vector<8x1xf32>
    %cst_155 = arith.constant 3.200000e+01 : f32
    %187 = vector.broadcast %cst_155 : f32 to vector<8x1xf32>
    %188 = arith.divf %186, %187 : vector<8x1xf32>
    %189 = vector.broadcast %188 : vector<8x1xf32> to vector<8x32xf32>
    %190 = arith.subf %180, %189 : vector<8x32xf32>
    %191 = arith.mulf %190, %190 : vector<8x32xf32>
    %cst_156 = arith.constant dense<0.000000e+00> : vector<8xf32>
    %192 = vector.multi_reduction <add>, %191, %cst_156 [1] : vector<8x32xf32> to vector<8xf32>
    %193 = vector.shape_cast %192 : vector<8xf32> to vector<8x1xf32>
    %cst_157 = arith.constant 3.200000e+01 : f32
    %194 = vector.broadcast %cst_157 : f32 to vector<8x1xf32>
    %195 = arith.divf %193, %194 : vector<8x1xf32>
    %cst_158 = arith.constant 9.99999974E-6 : f32
    %196 = vector.broadcast %cst_158 : f32 to vector<8x1xf32>
    %197 = arith.addf %195, %196 : vector<8x1xf32>
    %198 = math.rsqrt %197 : vector<8x1xf32>
    %199 = vector.broadcast %198 : vector<8x1xf32> to vector<8x32xf32>
    %200 = arith.mulf %190, %199 : vector<8x32xf32>
    %201 = vector.broadcast %182 : vector<1x32xf32> to vector<8x32xf32>
    %202 = arith.mulf %200, %201 : vector<8x32xf32>
    %203 = vector.broadcast %184 : vector<1x32xf32> to vector<8x32xf32>
    %204 = arith.addf %202, %203 : vector<8x32xf32>
    %c1_159 = arith.constant 1 : index
    %c0_160 = arith.constant 0 : index
    %c0_161 = arith.constant 0 : index
    %c0_162 = arith.constant 0 : index
    %c0_163 = arith.constant 0 : index
    %205 = vector.load %arg4[%c1_159, %c0_160, %c0_161, %c0_162, %c0_163] : memref<2x3x4x8x32xf32, #tpu.memory_space<vmem>>, vector<1x1x1x8x32xf32>
    %206 = vector.shape_cast %205 : vector<1x1x1x8x32xf32> to vector<8x32xf32>
    "tpu.trace_start"() <{level = 10 : i32, message = "rk,dk->rd"}> : () -> ()
    %cst_164 = arith.constant dense<0.000000e+00> : vector<8x8xf32>
    %207 = tpu.matmul %204, %206, %cst_164 {dimension_numbers = #tpu.dot_dimension_numbers<[1], [1], [0], [0], [0, 0, 1, 0], [], []>} : vector<8x32xf32>, vector<8x32xf32>, vector<8x8xf32> -> vector<8x8xf32>
    "tpu.trace_stop"() : () -> ()
    %c1_165 = arith.constant 1 : index
    %c1_166 = arith.constant 1 : index
    %c0_167 = arith.constant 0 : index
    %c0_168 = arith.constant 0 : index
    %c0_169 = arith.constant 0 : index
    %208 = vector.load %arg4[%c1_165, %c1_166, %c0_167, %c0_168, %c0_169] : memref<2x3x4x8x32xf32, #tpu.memory_space<vmem>>, vector<1x1x1x8x32xf32>
    %209 = vector.shape_cast %208 : vector<1x1x1x8x32xf32> to vector<8x32xf32>
    "tpu.trace_start"() <{level = 10 : i32, message = "rk,dk->rd"}> : () -> ()
    %cst_170 = arith.constant dense<0.000000e+00> : vector<8x8xf32>
    %210 = tpu.matmul %204, %209, %cst_170 {dimension_numbers = #tpu.dot_dimension_numbers<[1], [1], [0], [0], [0, 0, 1, 0], [], []>} : vector<8x32xf32>, vector<8x32xf32>, vector<8x8xf32> -> vector<8x8xf32>
    "tpu.trace_stop"() : () -> ()
    %c1_171 = arith.constant 1 : index
    %c2_172 = arith.constant 2 : index
    %c0_173 = arith.constant 0 : index
    %c0_174 = arith.constant 0 : index
    %c0_175 = arith.constant 0 : index
    %211 = vector.load %arg4[%c1_171, %c2_172, %c0_173, %c0_174, %c0_175] : memref<2x3x4x8x32xf32, #tpu.memory_space<vmem>>, vector<1x1x1x8x32xf32>
    %212 = vector.shape_cast %211 : vector<1x1x1x8x32xf32> to vector<8x32xf32>
    "tpu.trace_start"() <{level = 10 : i32, message = "rk,dk->rd"}> : () -> ()
    %cst_176 = arith.constant dense<0.000000e+00> : vector<8x8xf32>
    %213 = tpu.matmul %204, %212, %cst_176 {dimension_numbers = #tpu.dot_dimension_numbers<[1], [1], [0], [0], [0, 0, 1, 0], [], []>} : vector<8x32xf32>, vector<8x32xf32>, vector<8x8xf32> -> vector<8x8xf32>
    "tpu.trace_stop"() : () -> ()
    "tpu.trace_start"() <{level = 10 : i32, message = "nd,md->nm"}> : () -> ()
    %cst_177 = arith.constant dense<0.000000e+00> : vector<8x8xf32>
    %214 = tpu.matmul %207, %210, %cst_177 {dimension_numbers = #tpu.dot_dimension_numbers<[1], [1], [0], [0], [0, 0, 1, 0], [], []>} : vector<8x8xf32>, vector<8x8xf32>, vector<8x8xf32> -> vector<8x8xf32>
    "tpu.trace_stop"() : () -> ()
    %cst_178 = arith.constant dense<0xFF800000> : vector<8xf32>
    %215 = vector.multi_reduction <maximumf>, %214, %cst_178 [1] : vector<8x8xf32> to vector<8xf32>
    %216 = vector.shape_cast %215 : vector<8xf32> to vector<8x1xf32>
    %217 = vector.broadcast %216 : vector<8x1xf32> to vector<8x8xf32>
    %218 = arith.subf %214, %217 : vector<8x8xf32>
    %219 = math.exp %218 : vector<8x8xf32>
    %cst_179 = arith.constant dense<0.000000e+00> : vector<8xf32>
    %220 = vector.multi_reduction <add>, %219, %cst_179 [1] : vector<8x8xf32> to vector<8xf32>
    %221 = vector.shape_cast %220 : vector<8xf32> to vector<8x1xf32>
    %222 = tpu.reciprocal %221 {approx = true} : vector<8x1xf32> -> vector<8x1xf32>
    %223 = vector.broadcast %222 : vector<8x1xf32> to vector<8x8xf32>
    %224 = arith.mulf %219, %223 : vector<8x8xf32>
    %cst_180 = arith.constant dense<0.000000e+00> : vector<8x8xf32>
    %225 = tpu.matmul %224, %213, %cst_180 {dimension_numbers = #tpu.dot_dimension_numbers<[1], [0], [0], [1], [0, 0, 1, 1], [], []>} : vector<8x8xf32>, vector<8x8xf32>, vector<8x8xf32> -> vector<8x8xf32>
    %c1_181 = arith.constant 1 : index
    %c0_182 = arith.constant 0 : index
    %c0_183 = arith.constant 0 : index
    %c0_184 = arith.constant 0 : index
    %226 = vector.load %arg5[%c1_181, %c0_182, %c0_183, %c0_184] : memref<2x4x8x32xf32, #tpu.memory_space<vmem>>, vector<1x1x8x32xf32>
    %227 = vector.shape_cast %226 : vector<1x1x8x32xf32> to vector<8x32xf32>
    %cst_185 = arith.constant dense<0.000000e+00> : vector<8x32xf32>
    %228 = tpu.matmul %225, %227, %cst_185 {dimension_numbers = #tpu.dot_dimension_numbers<[1], [0], [0], [1], [0, 0, 1, 1], [], []>} : vector<8x8xf32>, vector<8x32xf32>, vector<8x32xf32> -> vector<8x32xf32>
    %c1_186 = arith.constant 1 : index
    %c0_187 = arith.constant 0 : index
    %c1_188 = arith.constant 1 : index
    %c0_189 = arith.constant 0 : index
    %c0_190 = arith.constant 0 : index
    %229 = vector.load %arg4[%c1_186, %c0_187, %c1_188, %c0_189, %c0_190] : memref<2x3x4x8x32xf32, #tpu.memory_space<vmem>>, vector<1x1x1x8x32xf32>
    %230 = vector.shape_cast %229 : vector<1x1x1x8x32xf32> to vector<8x32xf32>
    "tpu.trace_start"() <{level = 10 : i32, message = "rk,dk->rd"}> : () -> ()
    %cst_191 = arith.constant dense<0.000000e+00> : vector<8x8xf32>
    %231 = tpu.matmul %204, %230, %cst_191 {dimension_numbers = #tpu.dot_dimension_numbers<[1], [1], [0], [0], [0, 0, 1, 0], [], []>} : vector<8x32xf32>, vector<8x32xf32>, vector<8x8xf32> -> vector<8x8xf32>
    "tpu.trace_stop"() : () -> ()
    %c1_192 = arith.constant 1 : index
    %c1_193 = arith.constant 1 : index
    %c1_194 = arith.constant 1 : index
    %c0_195 = arith.constant 0 : index
    %c0_196 = arith.constant 0 : index
    %232 = vector.load %arg4[%c1_192, %c1_193, %c1_194, %c0_195, %c0_196] : memref<2x3x4x8x32xf32, #tpu.memory_space<vmem>>, vector<1x1x1x8x32xf32>
    %233 = vector.shape_cast %232 : vector<1x1x1x8x32xf32> to vector<8x32xf32>
    "tpu.trace_start"() <{level = 10 : i32, message = "rk,dk->rd"}> : () -> ()
    %cst_197 = arith.constant dense<0.000000e+00> : vector<8x8xf32>
    %234 = tpu.matmul %204, %233, %cst_197 {dimension_numbers = #tpu.dot_dimension_numbers<[1], [1], [0], [0], [0, 0, 1, 0], [], []>} : vector<8x32xf32>, vector<8x32xf32>, vector<8x8xf32> -> vector<8x8xf32>
    "tpu.trace_stop"() : () -> ()
    %c1_198 = arith.constant 1 : index
    %c2_199 = arith.constant 2 : index
    %c1_200 = arith.constant 1 : index
    %c0_201 = arith.constant 0 : index
    %c0_202 = arith.constant 0 : index
    %235 = vector.load %arg4[%c1_198, %c2_199, %c1_200, %c0_201, %c0_202] : memref<2x3x4x8x32xf32, #tpu.memory_space<vmem>>, vector<1x1x1x8x32xf32>
    %236 = vector.shape_cast %235 : vector<1x1x1x8x32xf32> to vector<8x32xf32>
    "tpu.trace_start"() <{level = 10 : i32, message = "rk,dk->rd"}> : () -> ()
    %cst_203 = arith.constant dense<0.000000e+00> : vector<8x8xf32>
    %237 = tpu.matmul %204, %236, %cst_203 {dimension_numbers = #tpu.dot_dimension_numbers<[1], [1], [0], [0], [0, 0, 1, 0], [], []>} : vector<8x32xf32>, vector<8x32xf32>, vector<8x8xf32> -> vector<8x8xf32>
    "tpu.trace_stop"() : () -> ()
    "tpu.trace_start"() <{level = 10 : i32, message = "nd,md->nm"}> : () -> ()
    %cst_204 = arith.constant dense<0.000000e+00> : vector<8x8xf32>
    %238 = tpu.matmul %231, %234, %cst_204 {dimension_numbers = #tpu.dot_dimension_numbers<[1], [1], [0], [0], [0, 0, 1, 0], [], []>} : vector<8x8xf32>, vector<8x8xf32>, vector<8x8xf32> -> vector<8x8xf32>
    "tpu.trace_stop"() : () -> ()
    %cst_205 = arith.constant dense<0xFF800000> : vector<8xf32>
    %239 = vector.multi_reduction <maximumf>, %238, %cst_205 [1] : vector<8x8xf32> to vector<8xf32>
    %240 = vector.shape_cast %239 : vector<8xf32> to vector<8x1xf32>
    %241 = vector.broadcast %240 : vector<8x1xf32> to vector<8x8xf32>
    %242 = arith.subf %238, %241 : vector<8x8xf32>
    %243 = math.exp %242 : vector<8x8xf32>
    %cst_206 = arith.constant dense<0.000000e+00> : vector<8xf32>
    %244 = vector.multi_reduction <add>, %243, %cst_206 [1] : vector<8x8xf32> to vector<8xf32>
    %245 = vector.shape_cast %244 : vector<8xf32> to vector<8x1xf32>
    %246 = tpu.reciprocal %245 {approx = true} : vector<8x1xf32> -> vector<8x1xf32>
    %247 = vector.broadcast %246 : vector<8x1xf32> to vector<8x8xf32>
    %248 = arith.mulf %243, %247 : vector<8x8xf32>
    %cst_207 = arith.constant dense<0.000000e+00> : vector<8x8xf32>
    %249 = tpu.matmul %248, %237, %cst_207 {dimension_numbers = #tpu.dot_dimension_numbers<[1], [0], [0], [1], [0, 0, 1, 1], [], []>} : vector<8x8xf32>, vector<8x8xf32>, vector<8x8xf32> -> vector<8x8xf32>
    %c1_208 = arith.constant 1 : index
    %c1_209 = arith.constant 1 : index
    %c0_210 = arith.constant 0 : index
    %c0_211 = arith.constant 0 : index
    %250 = vector.load %arg5[%c1_208, %c1_209, %c0_210, %c0_211] : memref<2x4x8x32xf32, #tpu.memory_space<vmem>>, vector<1x1x8x32xf32>
    %251 = vector.shape_cast %250 : vector<1x1x8x32xf32> to vector<8x32xf32>
    %cst_212 = arith.constant dense<0.000000e+00> : vector<8x32xf32>
    %252 = tpu.matmul %249, %251, %cst_212 {dimension_numbers = #tpu.dot_dimension_numbers<[1], [0], [0], [1], [0, 0, 1, 1], [], []>} : vector<8x8xf32>, vector<8x32xf32>, vector<8x32xf32> -> vector<8x32xf32>
    %253 = arith.addf %228, %252 : vector<8x32xf32>
    %c1_213 = arith.constant 1 : index
    %c0_214 = arith.constant 0 : index
    %c2_215 = arith.constant 2 : index
    %c0_216 = arith.constant 0 : index
    %c0_217 = arith.constant 0 : index
    %254 = vector.load %arg4[%c1_213, %c0_214, %c2_215, %c0_216, %c0_217] : memref<2x3x4x8x32xf32, #tpu.memory_space<vmem>>, vector<1x1x1x8x32xf32>
    %255 = vector.shape_cast %254 : vector<1x1x1x8x32xf32> to vector<8x32xf32>
    "tpu.trace_start"() <{level = 10 : i32, message = "rk,dk->rd"}> : () -> ()
    %cst_218 = arith.constant dense<0.000000e+00> : vector<8x8xf32>
    %256 = tpu.matmul %204, %255, %cst_218 {dimension_numbers = #tpu.dot_dimension_numbers<[1], [1], [0], [0], [0, 0, 1, 0], [], []>} : vector<8x32xf32>, vector<8x32xf32>, vector<8x8xf32> -> vector<8x8xf32>
    "tpu.trace_stop"() : () -> ()
    %c1_219 = arith.constant 1 : index
    %c1_220 = arith.constant 1 : index
    %c2_221 = arith.constant 2 : index
    %c0_222 = arith.constant 0 : index
    %c0_223 = arith.constant 0 : index
    %257 = vector.load %arg4[%c1_219, %c1_220, %c2_221, %c0_222, %c0_223] : memref<2x3x4x8x32xf32, #tpu.memory_space<vmem>>, vector<1x1x1x8x32xf32>
    %258 = vector.shape_cast %257 : vector<1x1x1x8x32xf32> to vector<8x32xf32>
    "tpu.trace_start"() <{level = 10 : i32, message = "rk,dk->rd"}> : () -> ()
    %cst_224 = arith.constant dense<0.000000e+00> : vector<8x8xf32>
    %259 = tpu.matmul %204, %258, %cst_224 {dimension_numbers = #tpu.dot_dimension_numbers<[1], [1], [0], [0], [0, 0, 1, 0], [], []>} : vector<8x32xf32>, vector<8x32xf32>, vector<8x8xf32> -> vector<8x8xf32>
    "tpu.trace_stop"() : () -> ()
    %c1_225 = arith.constant 1 : index
    %c2_226 = arith.constant 2 : index
    %c2_227 = arith.constant 2 : index
    %c0_228 = arith.constant 0 : index
    %c0_229 = arith.constant 0 : index
    %260 = vector.load %arg4[%c1_225, %c2_226, %c2_227, %c0_228, %c0_229] : memref<2x3x4x8x32xf32, #tpu.memory_space<vmem>>, vector<1x1x1x8x32xf32>
    %261 = vector.shape_cast %260 : vector<1x1x1x8x32xf32> to vector<8x32xf32>
    "tpu.trace_start"() <{level = 10 : i32, message = "rk,dk->rd"}> : () -> ()
    %cst_230 = arith.constant dense<0.000000e+00> : vector<8x8xf32>
    %262 = tpu.matmul %204, %261, %cst_230 {dimension_numbers = #tpu.dot_dimension_numbers<[1], [1], [0], [0], [0, 0, 1, 0], [], []>} : vector<8x32xf32>, vector<8x32xf32>, vector<8x8xf32> -> vector<8x8xf32>
    "tpu.trace_stop"() : () -> ()
    "tpu.trace_start"() <{level = 10 : i32, message = "nd,md->nm"}> : () -> ()
    %cst_231 = arith.constant dense<0.000000e+00> : vector<8x8xf32>
    %263 = tpu.matmul %256, %259, %cst_231 {dimension_numbers = #tpu.dot_dimension_numbers<[1], [1], [0], [0], [0, 0, 1, 0], [], []>} : vector<8x8xf32>, vector<8x8xf32>, vector<8x8xf32> -> vector<8x8xf32>
    "tpu.trace_stop"() : () -> ()
    %cst_232 = arith.constant dense<0xFF800000> : vector<8xf32>
    %264 = vector.multi_reduction <maximumf>, %263, %cst_232 [1] : vector<8x8xf32> to vector<8xf32>
    %265 = vector.shape_cast %264 : vector<8xf32> to vector<8x1xf32>
    %266 = vector.broadcast %265 : vector<8x1xf32> to vector<8x8xf32>
    %267 = arith.subf %263, %266 : vector<8x8xf32>
    %268 = math.exp %267 : vector<8x8xf32>
    %cst_233 = arith.constant dense<0.000000e+00> : vector<8xf32>
    %269 = vector.multi_reduction <add>, %268, %cst_233 [1] : vector<8x8xf32> to vector<8xf32>
    %270 = vector.shape_cast %269 : vector<8xf32> to vector<8x1xf32>
    %271 = tpu.reciprocal %270 {approx = true} : vector<8x1xf32> -> vector<8x1xf32>
    %272 = vector.broadcast %271 : vector<8x1xf32> to vector<8x8xf32>
    %273 = arith.mulf %268, %272 : vector<8x8xf32>
    %cst_234 = arith.constant dense<0.000000e+00> : vector<8x8xf32>
    %274 = tpu.matmul %273, %262, %cst_234 {dimension_numbers = #tpu.dot_dimension_numbers<[1], [0], [0], [1], [0, 0, 1, 1], [], []>} : vector<8x8xf32>, vector<8x8xf32>, vector<8x8xf32> -> vector<8x8xf32>
    %c1_235 = arith.constant 1 : index
    %c2_236 = arith.constant 2 : index
    %c0_237 = arith.constant 0 : index
    %c0_238 = arith.constant 0 : index
    %275 = vector.load %arg5[%c1_235, %c2_236, %c0_237, %c0_238] : memref<2x4x8x32xf32, #tpu.memory_space<vmem>>, vector<1x1x8x32xf32>
    %276 = vector.shape_cast %275 : vector<1x1x8x32xf32> to vector<8x32xf32>
    %cst_239 = arith.constant dense<0.000000e+00> : vector<8x32xf32>
    %277 = tpu.matmul %274, %276, %cst_239 {dimension_numbers = #tpu.dot_dimension_numbers<[1], [0], [0], [1], [0, 0, 1, 1], [], []>} : vector<8x8xf32>, vector<8x32xf32>, vector<8x32xf32> -> vector<8x32xf32>
    %278 = arith.addf %253, %277 : vector<8x32xf32>
    %c1_240 = arith.constant 1 : index
    %c0_241 = arith.constant 0 : index
    %c3_242 = arith.constant 3 : index
    %c0_243 = arith.constant 0 : index
    %c0_244 = arith.constant 0 : index
    %279 = vector.load %arg4[%c1_240, %c0_241, %c3_242, %c0_243, %c0_244] : memref<2x3x4x8x32xf32, #tpu.memory_space<vmem>>, vector<1x1x1x8x32xf32>
    %280 = vector.shape_cast %279 : vector<1x1x1x8x32xf32> to vector<8x32xf32>
    "tpu.trace_start"() <{level = 10 : i32, message = "rk,dk->rd"}> : () -> ()
    %cst_245 = arith.constant dense<0.000000e+00> : vector<8x8xf32>
    %281 = tpu.matmul %204, %280, %cst_245 {dimension_numbers = #tpu.dot_dimension_numbers<[1], [1], [0], [0], [0, 0, 1, 0], [], []>} : vector<8x32xf32>, vector<8x32xf32>, vector<8x8xf32> -> vector<8x8xf32>
    "tpu.trace_stop"() : () -> ()
    %c1_246 = arith.constant 1 : index
    %c1_247 = arith.constant 1 : index
    %c3_248 = arith.constant 3 : index
    %c0_249 = arith.constant 0 : index
    %c0_250 = arith.constant 0 : index
    %282 = vector.load %arg4[%c1_246, %c1_247, %c3_248, %c0_249, %c0_250] : memref<2x3x4x8x32xf32, #tpu.memory_space<vmem>>, vector<1x1x1x8x32xf32>
    %283 = vector.shape_cast %282 : vector<1x1x1x8x32xf32> to vector<8x32xf32>
    "tpu.trace_start"() <{level = 10 : i32, message = "rk,dk->rd"}> : () -> ()
    %cst_251 = arith.constant dense<0.000000e+00> : vector<8x8xf32>
    %284 = tpu.matmul %204, %283, %cst_251 {dimension_numbers = #tpu.dot_dimension_numbers<[1], [1], [0], [0], [0, 0, 1, 0], [], []>} : vector<8x32xf32>, vector<8x32xf32>, vector<8x8xf32> -> vector<8x8xf32>
    "tpu.trace_stop"() : () -> ()
    %c1_252 = arith.constant 1 : index
    %c2_253 = arith.constant 2 : index
    %c3_254 = arith.constant 3 : index
    %c0_255 = arith.constant 0 : index
    %c0_256 = arith.constant 0 : index
    %285 = vector.load %arg4[%c1_252, %c2_253, %c3_254, %c0_255, %c0_256] : memref<2x3x4x8x32xf32, #tpu.memory_space<vmem>>, vector<1x1x1x8x32xf32>
    %286 = vector.shape_cast %285 : vector<1x1x1x8x32xf32> to vector<8x32xf32>
    "tpu.trace_start"() <{level = 10 : i32, message = "rk,dk->rd"}> : () -> ()
    %cst_257 = arith.constant dense<0.000000e+00> : vector<8x8xf32>
    %287 = tpu.matmul %204, %286, %cst_257 {dimension_numbers = #tpu.dot_dimension_numbers<[1], [1], [0], [0], [0, 0, 1, 0], [], []>} : vector<8x32xf32>, vector<8x32xf32>, vector<8x8xf32> -> vector<8x8xf32>
    "tpu.trace_stop"() : () -> ()
    "tpu.trace_start"() <{level = 10 : i32, message = "nd,md->nm"}> : () -> ()
    %cst_258 = arith.constant dense<0.000000e+00> : vector<8x8xf32>
    %288 = tpu.matmul %281, %284, %cst_258 {dimension_numbers = #tpu.dot_dimension_numbers<[1], [1], [0], [0], [0, 0, 1, 0], [], []>} : vector<8x8xf32>, vector<8x8xf32>, vector<8x8xf32> -> vector<8x8xf32>
    "tpu.trace_stop"() : () -> ()
    %cst_259 = arith.constant dense<0xFF800000> : vector<8xf32>
    %289 = vector.multi_reduction <maximumf>, %288, %cst_259 [1] : vector<8x8xf32> to vector<8xf32>
    %290 = vector.shape_cast %289 : vector<8xf32> to vector<8x1xf32>
    %291 = vector.broadcast %290 : vector<8x1xf32> to vector<8x8xf32>
    %292 = arith.subf %288, %291 : vector<8x8xf32>
    %293 = math.exp %292 : vector<8x8xf32>
    %cst_260 = arith.constant dense<0.000000e+00> : vector<8xf32>
    %294 = vector.multi_reduction <add>, %293, %cst_260 [1] : vector<8x8xf32> to vector<8xf32>
    %295 = vector.shape_cast %294 : vector<8xf32> to vector<8x1xf32>
    %296 = tpu.reciprocal %295 {approx = true} : vector<8x1xf32> -> vector<8x1xf32>
    %297 = vector.broadcast %296 : vector<8x1xf32> to vector<8x8xf32>
    %298 = arith.mulf %293, %297 : vector<8x8xf32>
    %cst_261 = arith.constant dense<0.000000e+00> : vector<8x8xf32>
    %299 = tpu.matmul %298, %287, %cst_261 {dimension_numbers = #tpu.dot_dimension_numbers<[1], [0], [0], [1], [0, 0, 1, 1], [], []>} : vector<8x8xf32>, vector<8x8xf32>, vector<8x8xf32> -> vector<8x8xf32>
    %c1_262 = arith.constant 1 : index
    %c3_263 = arith.constant 3 : index
    %c0_264 = arith.constant 0 : index
    %c0_265 = arith.constant 0 : index
    %300 = vector.load %arg5[%c1_262, %c3_263, %c0_264, %c0_265] : memref<2x4x8x32xf32, #tpu.memory_space<vmem>>, vector<1x1x8x32xf32>
    %301 = vector.shape_cast %300 : vector<1x1x8x32xf32> to vector<8x32xf32>
    %cst_266 = arith.constant dense<0.000000e+00> : vector<8x32xf32>
    %302 = tpu.matmul %299, %301, %cst_266 {dimension_numbers = #tpu.dot_dimension_numbers<[1], [0], [0], [1], [0, 0, 1, 1], [], []>} : vector<8x8xf32>, vector<8x32xf32>, vector<8x32xf32> -> vector<8x32xf32>
    %303 = arith.addf %278, %302 : vector<8x32xf32>
    %304 = arith.addf %180, %303 : vector<8x32xf32>
    %c1_267 = arith.constant 1 : index
    %c0_268 = arith.constant 0 : index
    %c0_269 = arith.constant 0 : index
    %305 = vector.load %arg6[%c1_267, %c0_268, %c0_269] : memref<2x1x32xf32, #tpu.memory_space<vmem>>, vector<1x1x32xf32>
    %306 = vector.shape_cast %305 : vector<1x1x32xf32> to vector<1x32xf32>
    %307 = vector.broadcast %306 : vector<1x32xf32> to vector<8x32xf32>
    %308 = arith.addf %304, %307 : vector<8x32xf32>
    %c1_270 = arith.constant 1 : index
    %c0_271 = arith.constant 0 : index
    %c0_272 = arith.constant 0 : index
    %309 = vector.load %arg7[%c1_270, %c0_271, %c0_272] : memref<2x1x32xf32, #tpu.memory_space<vmem>>, vector<1x1x32xf32>
    %310 = vector.shape_cast %309 : vector<1x1x32xf32> to vector<1x32xf32>
    %c1_273 = arith.constant 1 : index
    %c0_274 = arith.constant 0 : index
    %c0_275 = arith.constant 0 : index
    %311 = vector.load %arg8[%c1_273, %c0_274, %c0_275] : memref<2x1x32xf32, #tpu.memory_space<vmem>>, vector<1x1x32xf32>
    %312 = vector.shape_cast %311 : vector<1x1x32xf32> to vector<1x32xf32>
    %cst_276 = arith.constant dense<0.000000e+00> : vector<8xf32>
    %313 = vector.multi_reduction <add>, %308, %cst_276 [1] : vector<8x32xf32> to vector<8xf32>
    %314 = vector.shape_cast %313 : vector<8xf32> to vector<8x1xf32>
    %cst_277 = arith.constant 3.200000e+01 : f32
    %315 = vector.broadcast %cst_277 : f32 to vector<8x1xf32>
    %316 = arith.divf %314, %315 : vector<8x1xf32>
    %317 = vector.broadcast %316 : vector<8x1xf32> to vector<8x32xf32>
    %318 = arith.subf %308, %317 : vector<8x32xf32>
    %319 = arith.mulf %318, %318 : vector<8x32xf32>
    %cst_278 = arith.constant dense<0.000000e+00> : vector<8xf32>
    %320 = vector.multi_reduction <add>, %319, %cst_278 [1] : vector<8x32xf32> to vector<8xf32>
    %321 = vector.shape_cast %320 : vector<8xf32> to vector<8x1xf32>
    %cst_279 = arith.constant 3.200000e+01 : f32
    %322 = vector.broadcast %cst_279 : f32 to vector<8x1xf32>
    %323 = arith.divf %321, %322 : vector<8x1xf32>
    %cst_280 = arith.constant 9.99999974E-6 : f32
    %324 = vector.broadcast %cst_280 : f32 to vector<8x1xf32>
    %325 = arith.addf %323, %324 : vector<8x1xf32>
    %326 = math.rsqrt %325 : vector<8x1xf32>
    %327 = vector.broadcast %326 : vector<8x1xf32> to vector<8x32xf32>
    %328 = arith.mulf %318, %327 : vector<8x32xf32>
    %329 = vector.broadcast %310 : vector<1x32xf32> to vector<8x32xf32>
    %330 = arith.mulf %328, %329 : vector<8x32xf32>
    %331 = vector.broadcast %312 : vector<1x32xf32> to vector<8x32xf32>
    %332 = arith.addf %330, %331 : vector<8x32xf32>
    %c1_281 = arith.constant 1 : index
    %c0_282 = arith.constant 0 : index
    %c0_283 = arith.constant 0 : index
    %333 = vector.load %arg9[%c1_281, %c0_282, %c0_283] : memref<2x32x64xf32, #tpu.memory_space<vmem>>, vector<1x32x64xf32>
    %334 = vector.shape_cast %333 : vector<1x32x64xf32> to vector<32x64xf32>
    %cst_284 = arith.constant dense<0.000000e+00> : vector<8x64xf32>
    %335 = tpu.matmul %332, %334, %cst_284 {dimension_numbers = #tpu.dot_dimension_numbers<[1], [0], [0], [1], [0, 0, 1, 1], [], []>} : vector<8x32xf32>, vector<32x64xf32>, vector<8x64xf32> -> vector<8x64xf32>
    %c1_285 = arith.constant 1 : index
    %c0_286 = arith.constant 0 : index
    %c0_287 = arith.constant 0 : index
    %336 = vector.load %arg10[%c1_285, %c0_286, %c0_287] : memref<2x1x64xf32, #tpu.memory_space<vmem>>, vector<1x1x64xf32>
    %337 = vector.shape_cast %336 : vector<1x1x64xf32> to vector<1x64xf32>
    %338 = vector.broadcast %337 : vector<1x64xf32> to vector<8x64xf32>
    %339 = arith.addf %335, %338 : vector<8x64xf32>
    %340 = arith.mulf %339, %339 : vector<8x64xf32>
    %341 = arith.mulf %339, %340 : vector<8x64xf32>
    %cst_288 = arith.constant 4.471500e-02 : f32
    %342 = vector.broadcast %cst_288 : f32 to vector<8x64xf32>
    %343 = arith.mulf %342, %341 : vector<8x64xf32>
    %344 = arith.addf %339, %343 : vector<8x64xf32>
    %cst_289 = arith.constant 0.797884583 : f32
    %345 = vector.broadcast %cst_289 : f32 to vector<8x64xf32>
    %346 = arith.mulf %345, %344 : vector<8x64xf32>
    %347 = math.tanh %346 : vector<8x64xf32>
    %cst_290 = arith.constant 1.000000e+00 : f32
    %348 = vector.broadcast %cst_290 : f32 to vector<8x64xf32>
    %349 = arith.addf %348, %347 : vector<8x64xf32>
    %cst_291 = arith.constant 5.000000e-01 : f32
    %350 = vector.broadcast %cst_291 : f32 to vector<8x64xf32>
    %351 = arith.mulf %350, %349 : vector<8x64xf32>
    %352 = arith.mulf %339, %351 : vector<8x64xf32>
    %c1_292 = arith.constant 1 : index
    %c0_293 = arith.constant 0 : index
    %c0_294 = arith.constant 0 : index
    %353 = vector.load %arg11[%c1_292, %c0_293, %c0_294] : memref<2x64x32xf32, #tpu.memory_space<vmem>>, vector<1x64x32xf32>
    %354 = vector.shape_cast %353 : vector<1x64x32xf32> to vector<64x32xf32>
    %cst_295 = arith.constant dense<0.000000e+00> : vector<8x32xf32>
    %355 = tpu.matmul %352, %354, %cst_295 {dimension_numbers = #tpu.dot_dimension_numbers<[1], [0], [0], [1], [0, 0, 1, 1], [], []>} : vector<8x64xf32>, vector<64x32xf32>, vector<8x32xf32> -> vector<8x32xf32>
    %356 = arith.addf %308, %355 : vector<8x32xf32>
    %c1_296 = arith.constant 1 : index
    %c0_297 = arith.constant 0 : index
    %c0_298 = arith.constant 0 : index
    %357 = vector.load %arg12[%c1_296, %c0_297, %c0_298] : memref<2x1x32xf32, #tpu.memory_space<vmem>>, vector<1x1x32xf32>
    %358 = vector.shape_cast %357 : vector<1x1x32xf32> to vector<1x32xf32>
    %359 = vector.broadcast %358 : vector<1x32xf32> to vector<8x32xf32>
    %360 = arith.addf %356, %359 : vector<8x32xf32>
    %c0_299 = arith.constant 0 : index
    %c0_300 = arith.constant 0 : index
    %361 = vector.load %arg13[%c0_299, %c0_300] : memref<8x32xf32, #tpu.memory_space<vmem>>, vector<8x32xf32>
    tpu.vector_store %arg13[%c0_299, %c0_300], %360 {strides = array<i32>} : memref<8x32xf32, #tpu.memory_space<vmem>>, vector<8x32xf32>,
    return
  }
  func.func @transform_0(%arg0: i32) -> (i32, i32) {
    %c0_i32 = arith.constant 0 : i32
    %c0_i32_0 = arith.constant 0 : i32
    return %arg0, %c0_i32 : i32, i32
  }
  func.func @transform_1(%arg0: i32) -> (i32, i32, i32) {
    %c0_i32 = arith.constant 0 : i32
    %c0_i32_0 = arith.constant 0 : i32
    %c0_i32_1 = arith.constant 0 : i32
    %c0_i32_2 = arith.constant 0 : i32
    return %c0_i32, %c0_i32_0, %c0_i32_1 : i32, i32, i32
  }
  func.func @transform_2(%arg0: i32) -> (i32, i32, i32) {
    %c0_i32 = arith.constant 0 : i32
    %c0_i32_0 = arith.constant 0 : i32
    %c0_i32_1 = arith.constant 0 : i32
    %c0_i32_2 = arith.constant 0 : i32
    return %c0_i32, %c0_i32_0, %c0_i32_1 : i32, i32, i32
  }
  func.func @transform_3(%arg0: i32) -> (i32, i32, i32, i32, i32) {
    %c0_i32 = arith.constant 0 : i32
    %c0_i32_0 = arith.constant 0 : i32
    %c0_i32_1 = arith.constant 0 : i32
    %c0_i32_2 = arith.constant 0 : i32
    %c0_i32_3 = arith.constant 0 : i32
    %c0_i32_4 = arith.constant 0 : i32
    return %c0_i32, %c0_i32_0, %c0_i32_1, %c0_i32_2, %c0_i32_3 : i32, i32, i32, i32, i32
  }
  func.func @transform_4(%arg0: i32) -> (i32, i32, i32, i32) {
    %c0_i32 = arith.constant 0 : i32
    %c0_i32_0 = arith.constant 0 : i32
    %c0_i32_1 = arith.constant 0 : i32
    %c0_i32_2 = arith.constant 0 : i32
    %c0_i32_3 = arith.constant 0 : i32
    return %c0_i32, %c0_i32_0, %c0_i32_1, %c0_i32_2 : i32, i32, i32, i32
  }
  func.func @transform_5(%arg0: i32) -> (i32, i32, i32) {
    %c0_i32 = arith.constant 0 : i32
    %c0_i32_0 = arith.constant 0 : i32
    %c0_i32_1 = arith.constant 0 : i32
    %c0_i32_2 = arith.constant 0 : i32
    return %c0_i32, %c0_i32_0, %c0_i32_1 : i32, i32, i32
  }
  func.func @transform_6(%arg0: i32) -> (i32, i32, i32) {
    %c0_i32 = arith.constant 0 : i32
    %c0_i32_0 = arith.constant 0 : i32
    %c0_i32_1 = arith.constant 0 : i32
    %c0_i32_2 = arith.constant 0 : i32
    return %c0_i32, %c0_i32_0, %c0_i32_1 : i32, i32, i32
  }
  func.func @transform_7(%arg0: i32) -> (i32, i32, i32) {
    %c0_i32 = arith.constant 0 : i32
    %c0_i32_0 = arith.constant 0 : i32
    %c0_i32_1 = arith.constant 0 : i32
    %c0_i32_2 = arith.constant 0 : i32
    return %c0_i32, %c0_i32_0, %c0_i32_1 : i32, i32, i32
  }
  func.func @transform_8(%arg0: i32) -> (i32, i32, i32) {
    %c0_i32 = arith.constant 0 : i32
    %c0_i32_0 = arith.constant 0 : i32
    %c0_i32_1 = arith.constant 0 : i32
    %c0_i32_2 = arith.constant 0 : i32
    return %c0_i32, %c0_i32_0, %c0_i32_1 : i32, i32, i32
  }
  func.func @transform_9(%arg0: i32) -> (i32, i32, i32) {
    %c0_i32 = arith.constant 0 : i32
    %c0_i32_0 = arith.constant 0 : i32
    %c0_i32_1 = arith.constant 0 : i32
    %c0_i32_2 = arith.constant 0 : i32
    return %c0_i32, %c0_i32_0, %c0_i32_1 : i32, i32, i32
  }
  func.func @transform_10(%arg0: i32) -> (i32, i32, i32) {
    %c0_i32 = arith.constant 0 : i32
    %c0_i32_0 = arith.constant 0 : i32
    %c0_i32_1 = arith.constant 0 : i32
    %c0_i32_2 = arith.constant 0 : i32
    return %c0_i32, %c0_i32_0, %c0_i32_1 : i32, i32, i32
  }
  func.func @transform_11(%arg0: i32) -> (i32, i32, i32) {
    %c0_i32 = arith.constant 0 : i32
    %c0_i32_0 = arith.constant 0 : i32
    %c0_i32_1 = arith.constant 0 : i32
    %c0_i32_2 = arith.constant 0 : i32
    return %c0_i32, %c0_i32_0, %c0_i32_1 : i32, i32, i32
  }
  func.func @transform_12(%arg0: i32) -> (i32, i32) {
    %c0_i32 = arith.constant 0 : i32
    %c0_i32_0 = arith.constant 0 : i32
    return %arg0, %c0_i32 : i32, i32
  }
}

</mosaic_0001>

<llo_original>
// kernel: tpu_custom_call.1
$region0: #{tpu_custom_call.1}
  #allocation0 [shape = 'u32[]', space=smem, size = 0x4, offset = 0x4, fixed_abs, tag = 'smem constant byte address 0x4 - core index']
  #allocation1 [shape = 'u32[72,128]{1,0:T(1,128)}', space=vmem, size = 0x9000, scoped, tag = 'internal scratch']
  %s0 = inlined_call_operand.hbm [shape: f32[16,32], index: 0, kind: input, shape index: {}]
  %s1 = inlined_call_operand.vmem [shape: f32[2,1,32], index: 1, kind: input, shape index: {}]
  %s2 = inlined_call_operand.hbm [shape: f32[2,1,32], index: 2, kind: input, shape index: {}]
  %s3 = inlined_call_operand.vmem [shape: f32[2,3,4,8,32], index: 3, kind: input, shape index: {}]
  %s4 = inlined_call_operand.hbm [shape: f32[2,4,8,32], index: 4, kind: input, shape index: {}]
  %s5 = inlined_call_operand.hbm [shape: f32[2,1,32], index: 5, kind: input, shape index: {}]
  %s6 = inlined_call_operand.vmem [shape: f32[2,1,32], index: 6, kind: input, shape index: {}]
  %s7 = inlined_call_operand.hbm [shape: f32[2,1,32], index: 7, kind: input, shape index: {}]
  %s8 = inlined_call_operand.hbm [shape: f32[2,32,64], index: 8, kind: input, shape index: {}]
  %s9 = inlined_call_operand.vmem [shape: f32[2,1,64], index: 9, kind: input, shape index: {}]
  %s10 = inlined_call_operand.vmem [shape: f32[2,64,32], index: 10, kind: input, shape index: {}]
  %s11 = inlined_call_operand.vmem [shape: f32[2,1,32], index: 11, kind: input, shape index: {}]
  %s12 = inlined_call_operand.hbm [shape: f32[16,32], index: 12, kind: output, shape index: {}]
  %s13 = sld [smem:[#allocation0]]
  $region105: #{tpu_custom_call.1} parent=0
    _
  %s15 = ssub.s32 1, %s13
  %s16 = scalar_select 0, %s15, %s13
  $region1: #{tpu_custom_call.1} parent=0
    #allocation2 [shape = 'u8[8192]{0}', space=vmem, size = 0x2000, scoped, tag = 'input window, operand 0']
    #allocation3 [shape = 's32[2]{0}', space=sflag, size = 0x8, scoped, tag = 'scoped memory for tpu_custom_call.1']
    #allocation4 [shape = 's32[2]{0}', space=sflag, size = 0x8, scoped, tag = 'scoped memory for tpu_custom_call.1']
    #allocation5 [shape = 'u8[1024]{0}', space=vmem, size = 0x400, scoped, tag = 'input window, operand 2, single buffered']
    #allocation6 [shape = 's32[1]{0}', space=sflag, size = 0x4, scoped, tag = 'scoped memory for tpu_custom_call.1']
    #allocation7 [shape = 'u8[32768]{0}', space=vmem, size = 0x8000, scoped, tag = 'input window, operand 4, single buffered']
    #allocation8 [shape = 'u8[1024]{0}', space=vmem, size = 0x400, scoped, tag = 'input window, operand 5, single buffered']
    #allocation9 [shape = 's32[1]{0}', space=sflag, size = 0x4, scoped, tag = 'scoped memory for tpu_custom_call.1']
    #allocation10 [shape = 'u8[1024]{0}', space=vmem, size = 0x400, scoped, tag = 'input window, operand 7, single buffered']
    #allocation11 [shape = 'u8[32768]{0}', space=vmem, size = 0x8000, scoped, tag = 'input window, operand 8, single buffered']
    #allocation12 [shape = 's32[1]{0}', space=sflag, size = 0x4, scoped, tag = 'scoped memory for tpu_custom_call.1']
    #allocation13 [shape = 'u8[8192]{0}', space=vmem, size = 0x2000, scoped, tag = 'output window, operand 0']
    %17 = vsyncpa [#allocation3], 0
    %s18 = scalar_lea.sflag [#allocation3], 1
    %19 = vsyncpa %s18, 0
    %20 = vsyncpa [#allocation6], 0
    %21 = vsyncpa [#allocation9], 0
    %22 = vsyncpa [#allocation12], 0
    %23 = vsyncpa [#allocation4], 0
    %s24 = scalar_lea.sflag [#allocation4], 1
    %25 = vsyncpa %s24, 0
    loop: start=0, step=1, limit=4
    $region2: #{tpu_custom_call.1} parent=1 // loop_pre_header
      _
    $region3: #{tpu_custom_call.1} parent=1 // loop_header
      %s27 = sphi 0, %s31
      %p28 = scmp.ge.s32.totalorder %s27, 4
      %s37 = sphi 0, %s39
      %s40 = sphi 0, %s37
      %s41 = sphi 0, %s40
      %s57 = sphi 0, %s41
      %s61 = sphi 0, %s61
      %s63 = sphi 0, %s61
      %s64 = sphi 0, %s63
      %s78 = sphi 0, %s64
      %s82 = sphi 0, %s82
      %s84 = sphi 0, %s82
      %s85 = sphi 0, %s84
      %s99 = sphi 0, %s85
      %s103 = sphi 0, %s103
      %s105 = sphi 0, %s103
      %s106 = sphi 0, %s105
      %s120 = sphi 0, %s106
      %s124 = sphi 0, %s124
      %s126 = sphi 0, %s124
      %s127 = sphi 0, %s126
      %s141 = sphi 0, %s127
      %s145 = sphi 0, %s145
      %s147 = sphi 0, %s145
      %s148 = sphi 0, %s147
      %s162 = sphi 0, %s148
      %s166 = sphi 0, %s166
      %s168 = sphi 0, %s166
      %s169 = sphi 0, %s168
      %s183 = sphi 0, %s169
      %s187 = sphi 0, %s187
      %s189 = sphi 0, %s187
      %s190 = sphi 0, %s189
      %s204 = sphi 0, %s190
      %s208 = sphi 0, %s208
      %s210 = sphi 0, %s208
      %s211 = sphi 0, %s210
      %s225 = sphi 0, %s211
      %s229 = sphi 0, %s229
      %s231 = sphi 0, %s229
      %s232 = sphi 0, %s231
      %s246 = sphi 0, %s232
      %s250 = sphi 0, %s250
      %s252 = sphi 0, %s250
      %s253 = sphi 0, %s252
      %s267 = sphi 0, %s253
      %s271 = sphi 0, %s271
      %s273 = sphi 0, %s271
      %s274 = sphi 0, %s273
      %s288 = sphi 0, %s274
      %s294 = sphi 0, %s296
      %s297 = sphi 0, %s294
      %s298 = sphi 0, %s297
      %s314 = sphi 0, %s298
    $region4: #{tpu_custom_call.1} parent=1 // loop_header_branch
      %30 = sbr.rel (%p28) target = $region8
    $region5: #{tpu_custom_call.1} parent=1 // loop_body
      %s32 = ssub.s32 %s27, 1
      %s33 = ssub.s32 %s27, 2
      %s34 = sadd.s32 %s27, 1
      %s35 = ssub.s32 %s27, %s34
      %p36 = scmp.eq.s32.totalorder %s35, 0
      %s38 = sadd.s32 %s37, 1
      %s39 = scalar_select %p36, %s37, %s38
      %p42 = pneg %p36
      %p43 = scmp.eq.s32.totalorder %s27, 1
      %p44 = por %p42, %p43
      %p45 = scmp.ne.s32.totalorder %s37, %s40
      %p46 = scmp.eq.s32.totalorder %s27, 0
      %p47 = por %p45, %p46
      %p48 = scmp.ne.s32.totalorder %s37, %s40
      %p49 = scmp.eq.s32.totalorder %s32, 1
      %p50 = por %p48, %p49
      %p51 = scmp.ne.s32.totalorder %s40, %s41
      %p52 = scmp.eq.s32.totalorder %s32, 0
      %p53 = por %p51, %p52
      %p54 = scmp.ne.s32.totalorder %s40, %s41
      %p55 = scmp.eq.s32.totalorder %s33, 1
      %p56 = por %p54, %p55
      %p58 = scmp.ne.s32.totalorder %s41, %s57
      %p59 = scmp.eq.s32.totalorder %s33, 0
      %p60 = por %p58, %p59
      %s62 = sadd.s32 %s61, 1
      %p65 = scmp.eq.s32.totalorder %s27, 1
      %p66 = scmp.ne.s32.totalorder %s61, %s63
      %p67 = scmp.eq.s32.totalorder %s27, 0
      %p68 = por %p66, %p67
      %p69 = scmp.ne.s32.totalorder %s61, %s63
      %p70 = scmp.eq.s32.totalorder %s32, 1
      %p71 = por %p69, %p70
      %p72 = scmp.ne.s32.totalorder %s63, %s64
      %p73 = scmp.eq.s32.totalorder %s32, 0
      %p74 = por %p72, %p73
      %p75 = scmp.ne.s32.totalorder %s63, %s64
      %p76 = scmp.eq.s32.totalorder %s33, 1
      %p77 = por %p75, %p76
      %p79 = scmp.ne.s32.totalorder %s64, %s78
      %p80 = scmp.eq.s32.totalorder %s33, 0
      %p81 = por %p79, %p80
      %s83 = sadd.s32 %s82, 1
      %p86 = scmp.eq.s32.totalorder %s27, 1
      %p87 = scmp.ne.s32.totalorder %s82, %s84
      %p88 = scmp.eq.s32.totalorder %s27, 0
      %p89 = por %p87, %p88
      %p90 = scmp.ne.s32.totalorder %s82, %s84
      %p91 = scmp.eq.s32.totalorder %s32, 1
      %p92 = por %p90, %p91
      %p93 = scmp.ne.s32.totalorder %s84, %s85
      %p94 = scmp.eq.s32.totalorder %s32, 0
      %p95 = por %p93, %p94
      %p96 = scmp.ne.s32.totalorder %s84, %s85
      %p97 = scmp.eq.s32.totalorder %s33, 1
      %p98 = por %p96, %p97
      %p100 = scmp.ne.s32.totalorder %s85, %s99
      %p101 = scmp.eq.s32.totalorder %s33, 0
      %p102 = por %p100, %p101
      %s104 = sadd.s32 %s103, 1
      %p107 = scmp.eq.s32.totalorder %s27, 1
      %p108 = scmp.ne.s32.totalorder %s103, %s105
      %p109 = scmp.eq.s32.totalorder %s27, 0
      %p110 = por %p108, %p109
      %p111 = scmp.ne.s32.totalorder %s103, %s105
      %p112 = scmp.eq.s32.totalorder %s32, 1
      %p113 = por %p111, %p112
      %p114 = scmp.ne.s32.totalorder %s105, %s106
      %p115 = scmp.eq.s32.totalorder %s32, 0
      %p116 = por %p114, %p115
      %p117 = scmp.ne.s32.totalorder %s105, %s106
      %p118 = scmp.eq.s32.totalorder %s33, 1
      %p119 = por %p117, %p118
      %p121 = scmp.ne.s32.totalorder %s106, %s120
      %p122 = scmp.eq.s32.totalorder %s33, 0
      %p123 = por %p121, %p122
      %s125 = sadd.s32 %s124, 1
      %p128 = scmp.eq.s32.totalorder %s27, 1
      %p129 = scmp.ne.s32.totalorder %s124, %s126
      %p130 = scmp.eq.s32.totalorder %s27, 0
      %p131 = por %p129, %p130
      %p132 = scmp.ne.s32.totalorder %s124, %s126
      %p133 = scmp.eq.s32.totalorder %s32, 1
      %p134 = por %p132, %p133
      %p135 = scmp.ne.s32.totalorder %s126, %s127
      %p136 = scmp.eq.s32.totalorder %s32, 0
      %p137 = por %p135, %p136
      %p138 = scmp.ne.s32.totalorder %s126, %s127
      %p139 = scmp.eq.s32.totalorder %s33, 1
      %p140 = por %p138, %p139
      %p142 = scmp.ne.s32.totalorder %s127, %s141
      %p143 = scmp.eq.s32.totalorder %s33, 0
      %p144 = por %p142, %p143
      %s146 = sadd.s32 %s145, 1
      %p149 = scmp.eq.s32.totalorder %s27, 1
      %p150 = scmp.ne.s32.totalorder %s145, %s147
      %p151 = scmp.eq.s32.totalorder %s27, 0
      %p152 = por %p150, %p151
      %p153 = scmp.ne.s32.totalorder %s145, %s147
      %p154 = scmp.eq.s32.totalorder %s32, 1
      %p155 = por %p153, %p154
      %p156 = scmp.ne.s32.totalorder %s147, %s148
      %p157 = scmp.eq.s32.totalorder %s32, 0
      %p158 = por %p156, %p157
      %p159 = scmp.ne.s32.totalorder %s147, %s148
      %p160 = scmp.eq.s32.totalorder %s33, 1
      %p161 = por %p159, %p160
      %p163 = scmp.ne.s32.totalorder %s148, %s162
      %p164 = scmp.eq.s32.totalorder %s33, 0
      %p165 = por %p163, %p164
      %s167 = sadd.s32 %s166, 1
      %p170 = scmp.eq.s32.totalorder %s27, 1
      %p171 = scmp.ne.s32.totalorder %s166, %s168
      %p172 = scmp.eq.s32.totalorder %s27, 0
      %p173 = por %p171, %p172
      %p174 = scmp.ne.s32.totalorder %s166, %s168
      %p175 = scmp.eq.s32.totalorder %s32, 1
      %p176 = por %p174, %p175
      %p177 = scmp.ne.s32.totalorder %s168, %s169
      %p178 = scmp.eq.s32.totalorder %s32, 0
      %p179 = por %p177, %p178
      %p180 = scmp.ne.s32.totalorder %s168, %s169
      %p181 = scmp.eq.s32.totalorder %s33, 1
      %p182 = por %p180, %p181
      %p184 = scmp.ne.s32.totalorder %s169, %s183
      %p185 = scmp.eq.s32.totalorder %s33, 0
      %p186 = por %p184, %p185
      %s188 = sadd.s32 %s187, 1
      %p191 = scmp.eq.s32.totalorder %s27, 1
      %p192 = scmp.ne.s32.totalorder %s187, %s189
      %p193 = scmp.eq.s32.totalorder %s27, 0
      %p194 = por %p192, %p193
      %p195 = scmp.ne.s32.totalorder %s187, %s189
      %p196 = scmp.eq.s32.totalorder %s32, 1
      %p197 = por %p195, %p196
      %p198 = scmp.ne.s32.totalorder %s189, %s190
      %p199 = scmp.eq.s32.totalorder %s32, 0
      %p200 = por %p198, %p199
      %p201 = scmp.ne.s32.totalorder %s189, %s190
      %p202 = scmp.eq.s32.totalorder %s33, 1
      %p203 = por %p201, %p202
      %p205 = scmp.ne.s32.totalorder %s190, %s204
      %p206 = scmp.eq.s32.totalorder %s33, 0
      %p207 = por %p205, %p206
      %s209 = sadd.s32 %s208, 1
      %p212 = scmp.eq.s32.totalorder %s27, 1
      %p213 = scmp.ne.s32.totalorder %s208, %s210
      %p214 = scmp.eq.s32.totalorder %s27, 0
      %p215 = por %p213, %p214
      %p216 = scmp.ne.s32.totalorder %s208, %s210
      %p217 = scmp.eq.s32.totalorder %s32, 1
      %p218 = por %p216, %p217
      %p219 = scmp.ne.s32.totalorder %s210, %s211
      %p220 = scmp.eq.s32.totalorder %s32, 0
      %p221 = por %p219, %p220
      %p222 = scmp.ne.s32.totalorder %s210, %s211
      %p223 = scmp.eq.s32.totalorder %s33, 1
      %p224 = por %p222, %p223
      %p226 = scmp.ne.s32.totalorder %s211, %s225
      %p227 = scmp.eq.s32.totalorder %s33, 0
      %p228 = por %p226, %p227
      %s230 = sadd.s32 %s229, 1
      %p233 = scmp.eq.s32.totalorder %s27, 1
      %p234 = scmp.ne.s32.totalorder %s229, %s231
      %p235 = scmp.eq.s32.totalorder %s27, 0
      %p236 = por %p234, %p235
      %p237 = scmp.ne.s32.totalorder %s229, %s231
      %p238 = scmp.eq.s32.totalorder %s32, 1
      %p239 = por %p237, %p238
      %p240 = scmp.ne.s32.totalorder %s231, %s232
      %p241 = scmp.eq.s32.totalorder %s32, 0
      %p242 = por %p240, %p241
      %p243 = scmp.ne.s32.totalorder %s231, %s232
      %p244 = scmp.eq.s32.totalorder %s33, 1
      %p245 = por %p243, %p244
      %p247 = scmp.ne.s32.totalorder %s232, %s246
      %p248 = scmp.eq.s32.totalorder %s33, 0
      %p249 = por %p247, %p248
      %s251 = sadd.s32 %s250, 1
      %p254 = scmp.eq.s32.totalorder %s27, 1
      %p255 = scmp.ne.s32.totalorder %s250, %s252
      %p256 = scmp.eq.s32.totalorder %s27, 0
      %p257 = por %p255, %p256
      %p258 = scmp.ne.s32.totalorder %s250, %s252
      %p259 = scmp.eq.s32.totalorder %s32, 1
      %p260 = por %p258, %p259
      %p261 = scmp.ne.s32.totalorder %s252, %s253
      %p262 = scmp.eq.s32.totalorder %s32, 0
      %p263 = por %p261, %p262
      %p264 = scmp.ne.s32.totalorder %s252, %s253
      %p265 = scmp.eq.s32.totalorder %s33, 1
      %p266 = por %p264, %p265
      %p268 = scmp.ne.s32.totalorder %s253, %s267
      %p269 = scmp.eq.s32.totalorder %s33, 0
      %p270 = por %p268, %p269
      %s272 = sadd.s32 %s271, 1
      %p275 = scmp.eq.s32.totalorder %s27, 1
      %p276 = scmp.ne.s32.totalorder %s271, %s273
      %p277 = scmp.eq.s32.totalorder %s27, 0
      %p278 = por %p276, %p277
      %p279 = scmp.ne.s32.totalorder %s271, %s273
      %p280 = scmp.eq.s32.totalorder %s32, 1
      %p281 = por %p279, %p280
      %p282 = scmp.ne.s32.totalorder %s273, %s274
      %p283 = scmp.eq.s32.totalorder %s32, 0
      %p284 = por %p282, %p283
      %p285 = scmp.ne.s32.totalorder %s273, %s274
      %p286 = scmp.eq.s32.totalorder %s33, 1
      %p287 = por %p285, %p286
      %p289 = scmp.ne.s32.totalorder %s274, %s288
      %p290 = scmp.eq.s32.totalorder %s33, 0
      %p291 = por %p289, %p290
      %s292 = ssub.s32 %s27, %s34
      %p293 = scmp.eq.s32.totalorder %s292, 0
      %s295 = sadd.s32 %s294, 1
      %s296 = scalar_select %p293, %s294, %s295
      %p299 = pneg %p293
      %p300 = scmp.eq.s32.totalorder %s27, 1
      %p301 = por %p299, %p300
      %p302 = scmp.ne.s32.totalorder %s294, %s297
      %p303 = scmp.eq.s32.totalorder %s27, 0
      %p304 = por %p302, %p303
      %p305 = scmp.ne.s32.totalorder %s294, %s297
      %p306 = scmp.eq.s32.totalorder %s32, 1
      %p307 = por %p305, %p306
      %p308 = scmp.ne.s32.totalorder %s297, %s298
      %p309 = scmp.eq.s32.totalorder %s32, 0
      %p310 = por %p308, %p309
      %p311 = scmp.ne.s32.totalorder %s297, %s298
      %p312 = scmp.eq.s32.totalorder %s33, 1
      %p313 = por %p311, %p312
      %p315 = scmp.ne.s32.totalorder %s298, %s314
      %p316 = scmp.eq.s32.totalorder %s33, 0
      %p317 = por %p315, %p316
      %p318 = scmp.le.s32.totalorder 1, %s27
      %p319 = scmp.lt.s32.totalorder %s27, 3
      %p320 = pnand %p318, %p319
      %p321 = pneg %p320
      // Predicated region
      $region9: #{tpu_custom_call.1} parent=5 // pred_check
        _
      $region10: #{tpu_custom_call.1} parent=5 // pred_check_branch
        %323 = sbr.rel (%p320) target = $region12
      $region11: #{tpu_custom_call.1} parent=5 // pred_region
        %s324 = ssub.s32 %s27, 1
        // Predicated region
        $region13: #{tpu_custom_call.1} parent=11 // pred_check
          %p325 = pneg %p74
        $region14: #{tpu_custom_call.1} parent=11 // pred_check_branch
          %327 = sbr.rel (%p325) target = $region16
        $region15: #{tpu_custom_call.1} parent=11 // pred_region
          _
        $region16: #{tpu_custom_call.1} parent=11 // pred_fallthru
          _
        // Predicated region
        $region17: #{tpu_custom_call.1} parent=11 // pred_check
          %p328 = pneg %p95
        $region18: #{tpu_custom_call.1} parent=11 // pred_check_branch
          %330 = sbr.rel (%p328) target = $region20
        $region19: #{tpu_custom_call.1} parent=11 // pred_region
          %332 = vsyncadd [#allocation6], 0
          %s333 = sshll.u32 %s2, 4
          %s334 = int_to_ptr.hbm [resolvable:$true] %s333
          %s335 = sshll.u32 [#allocation5], 4
          %s336 = int_to_ptr.vmem [resolvable:$true] %s335
          %341 = dma.hbm_to_vmem [thread:$0]  %s334, 32, %s336, [#allocation6], 16, 16, 1
        $region20: #{tpu_custom_call.1} parent=11 // pred_fallthru
          _
        // Predicated region
        $region21: #{tpu_custom_call.1} parent=11 // pred_check
          %p342 = pneg %p116
        $region22: #{tpu_custom_call.1} parent=11 // pred_check_branch
          %344 = sbr.rel (%p342) target = $region24
        $region23: #{tpu_custom_call.1} parent=11 // pred_region
          _
        $region24: #{tpu_custom_call.1} parent=11 // pred_fallthru
          _
        // Predicated region
        $region25: #{tpu_custom_call.1} parent=11 // pred_check
          %p345 = pneg %p137
        $region26: #{tpu_custom_call.1} parent=11 // pred_check_branch
          %347 = sbr.rel (%p345) target = $region28
        $region27: #{tpu_custom_call.1} parent=11 // pred_region
          %349 = vsyncadd [#allocation6], 0
          %s350 = sshll.u32 %s4, 4
          %s351 = int_to_ptr.hbm [resolvable:$true] %s350
          %s352 = sshll.u32 [#allocation7], 4
          %s353 = int_to_ptr.vmem [resolvable:$true] %s352
          %358 = dma.hbm_to_vmem [thread:$0]  %s351, 1024, %s353, [#allocation6], 128, 128, 8
        $region28: #{tpu_custom_call.1} parent=11 // pred_fallthru
          _
        // Predicated region
        $region29: #{tpu_custom_call.1} parent=11 // pred_check
          %p359 = pneg %p158
        $region30: #{tpu_custom_call.1} parent=11 // pred_check_branch
          %361 = sbr.rel (%p359) target = $region32
        $region31: #{tpu_custom_call.1} parent=11 // pred_region
          %363 = vsyncadd [#allocation9], 0
          %s364 = sshll.u32 %s5, 4
          %s365 = int_to_ptr.hbm [resolvable:$true] %s364
          %s366 = sshll.u32 [#allocation8], 4
          %s367 = int_to_ptr.vmem [resolvable:$true] %s366
          %372 = dma.hbm_to_vmem [thread:$0]  %s365, 32, %s367, [#allocation9], 16, 16, 1
        $region32: #{tpu_custom_call.1} parent=11 // pred_fallthru
          _
        // Predicated region
        $region33: #{tpu_custom_call.1} parent=11 // pred_check
          %p373 = pneg %p179
        $region34: #{tpu_custom_call.1} parent=11 // pred_check_branch
          %375 = sbr.rel (%p373) target = $region36
        $region35: #{tpu_custom_call.1} parent=11 // pred_region
          _
        $region36: #{tpu_custom_call.1} parent=11 // pred_fallthru
          _
        // Predicated region
        $region37: #{tpu_custom_call.1} parent=11 // pred_check
          %p376 = pneg %p200
        $region38: #{tpu_custom_call.1} parent=11 // pred_check_branch
          %378 = sbr.rel (%p376) target = $region40
        $region39: #{tpu_custom_call.1} parent=11 // pred_region
          %380 = vsyncadd [#allocation9], 0
          %s381 = sshll.u32 %s7, 4
          %s382 = int_to_ptr.hbm [resolvable:$true] %s381
          %s383 = sshll.u32 [#allocation10], 4
          %s384 = int_to_ptr.vmem [resolvable:$true] %s383
          %389 = dma.hbm_to_vmem [thread:$0]  %s382, 32, %s384, [#allocation9], 16, 16, 1
        $region40: #{tpu_custom_call.1} parent=11 // pred_fallthru
          _
        // Predicated region
        $region41: #{tpu_custom_call.1} parent=11 // pred_check
          %p390 = pneg %p221
        $region42: #{tpu_custom_call.1} parent=11 // pred_check_branch
          %392 = sbr.rel (%p390) target = $region44
        $region43: #{tpu_custom_call.1} parent=11 // pred_region
          %394 = vsyncadd [#allocation12], 0
          %s395 = sshll.u32 %s8, 4
          %s396 = int_to_ptr.hbm [resolvable:$true] %s395
          %s397 = sshll.u32 [#allocation11], 4
          %s398 = int_to_ptr.vmem [resolvable:$true] %s397
          %403 = dma.hbm_to_vmem [thread:$0]  %s396, 1024, %s398, [#allocation12], 128, 128, 8
        $region44: #{tpu_custom_call.1} parent=11 // pred_fallthru
          _
        // Predicated region
        $region45: #{tpu_custom_call.1} parent=11 // pred_check
          %p404 = pneg %p242
        $region46: #{tpu_custom_call.1} parent=11 // pred_check_branch
          %406 = sbr.rel (%p404) target = $region48
        $region47: #{tpu_custom_call.1} parent=11 // pred_region
          _
        $region48: #{tpu_custom_call.1} parent=11 // pred_fallthru
          _
        // Predicated region
        $region49: #{tpu_custom_call.1} parent=11 // pred_check
          %p407 = pneg %p263
        $region50: #{tpu_custom_call.1} parent=11 // pred_check_branch
          %409 = sbr.rel (%p407) target = $region52
        $region51: #{tpu_custom_call.1} parent=11 // pred_region
          _
        $region52: #{tpu_custom_call.1} parent=11 // pred_fallthru
          _
        // Predicated region
        $region53: #{tpu_custom_call.1} parent=11 // pred_check
          %p410 = pneg %p284
        $region54: #{tpu_custom_call.1} parent=11 // pred_check_branch
          %412 = sbr.rel (%p410) target = $region56
        $region55: #{tpu_custom_call.1} parent=11 // pred_region
          _
        $region56: #{tpu_custom_call.1} parent=11 // pred_fallthru
          _
      $region12: #{tpu_custom_call.1} parent=5 // pred_fallthru
        _
      %p413 = scmp.lt.s32.totalorder %s27, 2
      // Predicated region
      $region57: #{tpu_custom_call.1} parent=5 // pred_check
        %p414 = pneg %p413
      $region58: #{tpu_custom_call.1} parent=5 // pred_check_branch
        %416 = sbr.rel (%p414) target = $region60
      $region59: #{tpu_custom_call.1} parent=5 // pred_region
        // Predicated region
        $region61: #{tpu_custom_call.1} parent=59 // pred_check
          %p417 = pneg %p47
        $region62: #{tpu_custom_call.1} parent=59 // pred_check_branch
          %419 = sbr.rel (%p417) target = $region64
        $region63: #{tpu_custom_call.1} parent=59 // pred_region
          %s420 = sand.u32 %s37, 1
          %s421 = scalar_lea.sflag [#allocation3], %s420
          %s422 = sand.u32 %s37, 1
          %s423 = smul.addr %s422, 8
          %s424 = scalar_lea.vmem [#allocation2], %s423
          %426 = vsyncadd %s421, 0
          %s427 = smul.addr %s27, 8
          %s428 = scalar_lea.hbm %s0, %s427
          %s430 = sshll.u32 %s428, 4
          %s431 = int_to_ptr.hbm [resolvable:$true] %s430
          %s432 = sshll.u32 %s424, 4
          %s433 = int_to_ptr.vmem [resolvable:$true] %s432
          %435 = dma.hbm_to_vmem [thread:$0]  %s431, 128, %s433, %s421
        $region64: #{tpu_custom_call.1} parent=59 // pred_fallthru
          _
      $region60: #{tpu_custom_call.1} parent=5 // pred_fallthru
        _
      %p436 = scmp.le.s32.totalorder 1, %s27
      %p437 = scmp.lt.s32.totalorder %s27, 3
      %p438 = pnand %p436, %p437
      %p439 = pneg %p438
      // Predicated region
      $region65: #{tpu_custom_call.1} parent=5 // pred_check
        _
      $region66: #{tpu_custom_call.1} parent=5 // pred_check_branch
        %441 = sbr.rel (%p438) target = $region68
      $region67: #{tpu_custom_call.1} parent=5 // pred_region
        %s442 = ssub.s32 %s27, 1
        %s443 = sand.u32 %s40, 1
        %s444 = scalar_lea.sflag [#allocation3], %s443
        %s445 = sand.u32 %s40, 1
        %s446 = smul.addr %s445, 8
        %s447 = scalar_lea.vmem [#allocation2], %s446
        // Predicated region
        $region69: #{tpu_custom_call.1} parent=67 // pred_check
          %p448 = pneg %p53
        $region70: #{tpu_custom_call.1} parent=67 // pred_check_branch
          %450 = sbr.rel (%p448) target = $region72
        $region71: #{tpu_custom_call.1} parent=67 // pred_region
          %452 = dma.done %s444, 128
        $region72: #{tpu_custom_call.1} parent=67 // pred_fallthru
          _
        // Predicated region
        $region73: #{tpu_custom_call.1} parent=67 // pred_check
          %p453 = pneg %p95
        $region74: #{tpu_custom_call.1} parent=67 // pred_check_branch
          %455 = sbr.rel (%p453) target = $region76
        $region75: #{tpu_custom_call.1} parent=67 // pred_region
          %457 = dma.done [#allocation6], 32
        $region76: #{tpu_custom_call.1} parent=67 // pred_fallthru
          _
        // Predicated region
        $region77: #{tpu_custom_call.1} parent=67 // pred_check
          %p458 = pneg %p137
        $region78: #{tpu_custom_call.1} parent=67 // pred_check_branch
          %460 = sbr.rel (%p458) target = $region80
        $region79: #{tpu_custom_call.1} parent=67 // pred_region
          %462 = dma.done [#allocation6], 1024
        $region80: #{tpu_custom_call.1} parent=67 // pred_fallthru
          _
        // Predicated region
        $region81: #{tpu_custom_call.1} parent=67 // pred_check
          %p463 = pneg %p158
        $region82: #{tpu_custom_call.1} parent=67 // pred_check_branch
          %465 = sbr.rel (%p463) target = $region84
        $region83: #{tpu_custom_call.1} parent=67 // pred_region
          %467 = dma.done [#allocation9], 32
        $region84: #{tpu_custom_call.1} parent=67 // pred_fallthru
          _
        // Predicated region
        $region85: #{tpu_custom_call.1} parent=67 // pred_check
          %p468 = pneg %p200
        $region86: #{tpu_custom_call.1} parent=67 // pred_check_branch
          %470 = sbr.rel (%p468) target = $region88
        $region87: #{tpu_custom_call.1} parent=67 // pred_region
          %472 = dma.done [#allocation9], 32
        $region88: #{tpu_custom_call.1} parent=67 // pred_fallthru
          _
        // Predicated region
        $region89: #{tpu_custom_call.1} parent=67 // pred_check
          %p473 = pneg %p221
        $region90: #{tpu_custom_call.1} parent=67 // pred_check_branch
          %475 = sbr.rel (%p473) target = $region92
        $region91: #{tpu_custom_call.1} parent=67 // pred_region
          %477 = dma.done [#allocation12], 1024
        $region92: #{tpu_custom_call.1} parent=67 // pred_fallthru
          _
        %s478 = sand.u32 %s40, 1
        %s479 = scalar_lea.sflag [#allocation3], %s478
        %s480 = sand.u32 %s40, 1
        %s481 = smul.addr %s480, 8
        %s482 = scalar_lea.vmem [#allocation2], %s481
        %p483 = pneg %p53
        %p484 = pneg %p50
        %p485 = pneg %p74
        %p486 = pneg %p71
        %p487 = pneg %p95
        %p488 = pneg %p92
        %p489 = pneg %p116
        %p490 = pneg %p113
        %p491 = pneg %p137
        %p492 = pneg %p134
        %p493 = pneg %p158
        %p494 = pneg %p155
        %p495 = pneg %p179
        %p496 = pneg %p176
        %p497 = pneg %p200
        %p498 = pneg %p197
        %p499 = pneg %p221
        %p500 = pneg %p218
        %p501 = pneg %p242
        %p502 = pneg %p239
        %p503 = pneg %p263
        %p504 = pneg %p260
        %p505 = pneg %p284
        %p506 = pneg %p281
        %p507 = pneg %p310
        %p508 = pneg %p307
        %s509 = sand.u32 %s297, 1
        %s510 = scalar_lea.sflag [#allocation4], %s509
        %s511 = sand.u32 %s297, 1
        %s512 = smul.addr %s511, 8
        %s513 = scalar_lea.vmem [#allocation13], %s512
        %v514 = vld [vmem:[%s447] sm:$0xff]
        %v515 = vld [vmem:[%s1] sm:$0x1]
        %v516 = vld [vmem:[#allocation5] sm:$0x1]
        %vm517 = vcmask 261120
        %v518 = vsel %vm517, %v514, 0.0
        %519 = vadd.xlane.f32.xlu0 %v518
        %v520 = vpop.xlane.xlu0 %519
        %v521 = vrcp.pop 32.0
        %v522 = vmul.f32 32.0, %v521
        %v523 = vsub.f32 1.0, %v522
        %v524 = vmul.f32 %v521, %v523
        %v525 = vadd.f32 %v521, %v524
        %vm526 = vweird.f32 %v521
        %v527 = vsel %vm526, %v521, %v525
        %v528 = vmul.f32 %v520, %v527
        %v529 = vsub.f32 %v514, %v528
        %v530 = vmul.f32 %v529, %v529
        %v531 = vsel %vm517, %v530, 0.0
        %532 = vadd.xlane.f32.xlu0 %v531
        %v533 = vpop.xlane.xlu0 %532
        %v534 = vmul.f32 %v533, %v527
        %v535 = vadd.f32 %v534, 1e-05
        %v536 = vrsqrt.pop %v535
        %v537 = vmul.f32 %v536, %v535
        %v538 = vmul.f32 %v537, %v536
        %v539 = vmul.f32 0.5, %v538
        %v540 = vsub.f32 1.5, %v539
        %v541 = vmul.f32 %v536, %v540
        %vm542 = vweird.f32 %v535
        %vm543 = vweird.f32 %v536
        %vm544 = vmor %vm542, %vm543
        %v545 = vsel %vm544, %v536, %v541
        %v546 = vmul.f32 %v529, %v545
        %v548 = vperm.slane %v515, 0
        %v550 = vmul.f32 %v546, %v548
        %v552 = vperm.slane %v516, 0
        %v554 = vadd.f32 %v550, %v552
        %v555 = vld [vmem:[%s3] sm:$0xff]
        %v557 = vsel %vm517, %v554, 0
        %v560 = vsel %vm517, %v555, 0
        %562 = vmatpush.xpose.msra.mxu0 0.0
        %563 = vmatpush.xpose.msra.mxu0 0.0
        %564 = vmatpush.xpose.msra.mxu0 0.0
        %565 = vmatpush.xpose.msra.mxu0 0.0
        %566 = vmatpush.xpose.msra.mxu0 0.0
        %567 = vmatpush.xpose.msra.mxu0 0.0
        %568 = vmatpush.xpose.msra.mxu0 0.0
        %569 = vmatpush.xpose.msra.mxu0 0.0
        %570 = vmatpush.xpose.msra.mxu0 0.0
        %571 = vmatpush.xpose.msra.mxu0 0.0
        %572 = vmatpush.xpose.msra.mxu0 0.0
        %573 = vmatpush.xpose.msra.mxu0 0.0
        %574 = vmatpush.xpose.msra.mxu0 0.0
        %575 = vmatpush.xpose.msra.mxu0 0.0
        %576 = vmatpush.xpose.msra.mxu0 0.0
        %577 = vmatpush.xpose.msra.mxu0 %v560
        %578 = vmatmul.f32.gmra.mxu0 %v557
        %v579 = vpop.f32.mrf.mxu0
        %v580 = vadd.f32 0.0, %v579
        %581 = vdwg.mxu0
        %s582 = scalar_lea.vmem %s3, 32
        %v583 = vld [vmem:[%s582] sm:$0xff]
        %v585 = vsel %vm517, %v583, 0
        %587 = vmatpush.xpose.msra.mxu0 0.0
        %588 = vmatpush.xpose.msra.mxu0 0.0
        %589 = vmatpush.xpose.msra.mxu0 0.0
        %590 = vmatpush.xpose.msra.mxu0 0.0
        %591 = vmatpush.xpose.msra.mxu0 0.0
        %592 = vmatpush.xpose.msra.mxu0 0.0
        %593 = vmatpush.xpose.msra.mxu0 0.0
        %594 = vmatpush.xpose.msra.mxu0 0.0
        %595 = vmatpush.xpose.msra.mxu0 0.0
        %596 = vmatpush.xpose.msra.mxu0 0.0
        %597 = vmatpush.xpose.msra.mxu0 0.0
        %598 = vmatpush.xpose.msra.mxu0 0.0
        %599 = vmatpush.xpose.msra.mxu0 0.0
        %600 = vmatpush.xpose.msra.mxu0 0.0
        %601 = vmatpush.xpose.msra.mxu0 0.0
        %602 = vmatpush.xpose.msra.mxu0 %v585
        %603 = vmatmul.f32.gmra.mxu0 %v557
        %v604 = vpop.f32.mrf.mxu0
        %v605 = vadd.f32 0.0, %v604
        %606 = vdwg.mxu0
        %s607 = scalar_lea.vmem %s3, 64
        %v608 = vld [vmem:[%s607] sm:$0xff]
        %v610 = vsel %vm517, %v608, 0
        %612 = vmatpush.xpose.msra.mxu0 0.0
        %613 = vmatpush.xpose.msra.mxu0 0.0
        %614 = vmatpush.xpose.msra.mxu0 0.0
        %615 = vmatpush.xpose.msra.mxu0 0.0
        %616 = vmatpush.xpose.msra.mxu0 0.0
        %617 = vmatpush.xpose.msra.mxu0 0.0
        %618 = vmatpush.xpose.msra.mxu0 0.0
        %619 = vmatpush.xpose.msra.mxu0 0.0
        %620 = vmatpush.xpose.msra.mxu0 0.0
        %621 = vmatpush.xpose.msra.mxu0 0.0
        %622 = vmatpush.xpose.msra.mxu0 0.0
        %623 = vmatpush.xpose.msra.mxu0 0.0
        %624 = vmatpush.xpose.msra.mxu0 0.0
        %625 = vmatpush.xpose.msra.mxu0 0.0
        %626 = vmatpush.xpose.msra.mxu0 0.0
        %627 = vmatpush.xpose.msra.mxu0 %v610
        %628 = vmatmul.f32.gmra.mxu0 %v557
        %v629 = vpop.f32.mrf.mxu0
        %v630 = vadd.f32 0.0, %v629
        %631 = vdwg.mxu0
        %vm632 = vcmask 64512
        %v634 = vsel %vm632, %v580, 0
        %v637 = vsel %vm632, %v605, 0
        %639 = vmatpush.xpose.msra.mxu0 0.0
        %640 = vmatpush.xpose.msra.mxu0 0.0
        %641 = vmatpush.xpose.msra.mxu0 0.0
        %642 = vmatpush.xpose.msra.mxu0 0.0
        %643 = vmatpush.xpose.msra.mxu0 0.0
        %644 = vmatpush.xpose.msra.mxu0 0.0
        %645 = vmatpush.xpose.msra.mxu0 0.0
        %646 = vmatpush.xpose.msra.mxu0 0.0
        %647 = vmatpush.xpose.msra.mxu0 0.0
        %648 = vmatpush.xpose.msra.mxu0 0.0
        %649 = vmatpush.xpose.msra.mxu0 0.0
        %650 = vmatpush.xpose.msra.mxu0 0.0
        %651 = vmatpush.xpose.msra.mxu0 0.0
        %652 = vmatpush.xpose.msra.mxu0 0.0
        %653 = vmatpush.xpose.msra.mxu0 0.0
        %654 = vmatpush.xpose.msra.mxu0 %v637
        %655 = vmatmul.f32.gmra.mxu0 %v634
        %v656 = vpop.f32.mrf.mxu0
        %v657 = vadd.f32 0.0, %v656
        %658 = vdwg.mxu0
        %v659 = vsel %vm632, %v657, -inf
        %660 = vmax.xlane.f32.xlu0 %v659
        %v661 = vpop.xlane.xlu0 %660
        %v662 = vsub.f32 %v657, %v661
        %v663 = vmul.f32 %v662, 1.442695
        %v664 = vpow.pop %v663
        %v665 = vsel %vm632, %v664, 0.0
        %666 = vadd.xlane.f32.xlu0 %v665
        %v667 = vpop.xlane.xlu0 %666
        %v668 = vrcp.pop %v667
        %v669 = vmul.f32 %v664, %v668
        %v671 = vsel %vm632, %v669, 0
        %673 = vmatpush.msra.mxu0 0.0
        %674 = vmatpush.msra.mxu0 0.0
        %675 = vmatpush.msra.mxu0 0.0
        %676 = vmatpush.msra.mxu0 0.0
        %677 = vmatpush.msra.mxu0 0.0
        %678 = vmatpush.msra.mxu0 0.0
        %679 = vmatpush.msra.mxu0 0.0
        %680 = vmatpush.msra.mxu0 0.0
        %681 = vmatpush.msra.mxu0 0.0
        %682 = vmatpush.msra.mxu0 0.0
        %683 = vmatpush.msra.mxu0 0.0
        %684 = vmatpush.msra.mxu0 0.0
        %685 = vmatpush.msra.mxu0 0.0
        %686 = vmatpush.msra.mxu0 0.0
        %687 = vmatpush.msra.mxu0 0.0
        %688 = vmatpush.msra.mxu0 %v630
        %689 = vmatmul.f32.gmra.mxu0 %v671
        %v690 = vpop.f32.mrf.mxu0
        %v691 = vadd.f32 0.0, %v690
        %692 = vdwg.mxu0
        %v693 = vld [vmem:[#allocation7] sm:$0xff]
        %s694 = scalar_lea.vmem %s3, 8
        %v695 = vld [vmem:[%s694] sm:$0xff]
        %v697 = vsel %vm517, %v695, 0
        %699 = vmatpush.xpose.msra.mxu0 0.0
        %700 = vmatpush.xpose.msra.mxu0 0.0
        %701 = vmatpush.xpose.msra.mxu0 0.0
        %702 = vmatpush.xpose.msra.mxu0 0.0
        %703 = vmatpush.xpose.msra.mxu0 0.0
        %704 = vmatpush.xpose.msra.mxu0 0.0
        %705 = vmatpush.xpose.msra.mxu0 0.0
        %706 = vmatpush.xpose.msra.mxu0 0.0
        %707 = vmatpush.xpose.msra.mxu0 0.0
        %708 = vmatpush.xpose.msra.mxu0 0.0
        %709 = vmatpush.xpose.msra.mxu0 0.0
        %710 = vmatpush.xpose.msra.mxu0 0.0
        %711 = vmatpush.xpose.msra.mxu0 0.0
        %712 = vmatpush.xpose.msra.mxu0 0.0
        %713 = vmatpush.xpose.msra.mxu0 0.0
        %714 = vmatpush.xpose.msra.mxu0 %v697
        %715 = vmatmul.f32.gmra.mxu0 %v557
        %v716 = vpop.f32.mrf.mxu0
        %v717 = vadd.f32 0.0, %v716
        %718 = vdwg.mxu0
        %s719 = scalar_lea.vmem %s3, 40
        %v720 = vld [vmem:[%s719] sm:$0xff]
        %v722 = vsel %vm517, %v720, 0
        %724 = vmatpush.xpose.msra.mxu0 0.0
        %725 = vmatpush.xpose.msra.mxu0 0.0
        %726 = vmatpush.xpose.msra.mxu0 0.0
        %727 = vmatpush.xpose.msra.mxu0 0.0
        %728 = vmatpush.xpose.msra.mxu0 0.0
        %729 = vmatpush.xpose.msra.mxu0 0.0
        %730 = vmatpush.xpose.msra.mxu0 0.0
        %731 = vmatpush.xpose.msra.mxu0 0.0
        %732 = vmatpush.xpose.msra.mxu0 0.0
        %733 = vmatpush.xpose.msra.mxu0 0.0
        %734 = vmatpush.xpose.msra.mxu0 0.0
        %735 = vmatpush.xpose.msra.mxu0 0.0
        %736 = vmatpush.xpose.msra.mxu0 0.0
        %737 = vmatpush.xpose.msra.mxu0 0.0
        %738 = vmatpush.xpose.msra.mxu0 0.0
        %739 = vmatpush.xpose.msra.mxu0 %v722
        %740 = vmatmul.f32.gmra.mxu0 %v557
        %v741 = vpop.f32.mrf.mxu0
        %v742 = vadd.f32 0.0, %v741
        %743 = vdwg.mxu0
        %s744 = scalar_lea.vmem %s3, 72
        %v745 = vld [vmem:[%s744] sm:$0xff]
        %v747 = vsel %vm517, %v745, 0
        %749 = vmatpush.xpose.msra.mxu0 0.0
        %750 = vmatpush.xpose.msra.mxu0 0.0
        %751 = vmatpush.xpose.msra.mxu0 0.0
        %752 = vmatpush.xpose.msra.mxu0 0.0
        %753 = vmatpush.xpose.msra.mxu0 0.0
        %754 = vmatpush.xpose.msra.mxu0 0.0
        %755 = vmatpush.xpose.msra.mxu0 0.0
        %756 = vmatpush.xpose.msra.mxu0 0.0
        %757 = vmatpush.xpose.msra.mxu0 0.0
        %758 = vmatpush.xpose.msra.mxu0 0.0
        %759 = vmatpush.xpose.msra.mxu0 0.0
        %760 = vmatpush.xpose.msra.mxu0 0.0
        %761 = vmatpush.xpose.msra.mxu0 0.0
        %762 = vmatpush.xpose.msra.mxu0 0.0
        %763 = vmatpush.xpose.msra.mxu0 0.0
        %764 = vmatpush.xpose.msra.mxu0 %v747
        %765 = vmatmul.f32.gmra.mxu0 %v557
        %v766 = vpop.f32.mrf.mxu0
        %v767 = vadd.f32 0.0, %v766
        %768 = vdwg.mxu0
        %v770 = vsel %vm632, %v717, 0
        %v773 = vsel %vm632, %v742, 0
        %775 = vmatpush.xpose.msra.mxu0 0.0
        %776 = vmatpush.xpose.msra.mxu0 0.0
        %777 = vmatpush.xpose.msra.mxu0 0.0
        %778 = vmatpush.xpose.msra.mxu0 0.0
        %779 = vmatpush.xpose.msra.mxu0 0.0
        %780 = vmatpush.xpose.msra.mxu0 0.0
        %781 = vmatpush.xpose.msra.mxu0 0.0
        %782 = vmatpush.xpose.msra.mxu0 0.0
        %783 = vmatpush.xpose.msra.mxu0 0.0
        %784 = vmatpush.xpose.msra.mxu0 0.0
        %785 = vmatpush.xpose.msra.mxu0 0.0
        %786 = vmatpush.xpose.msra.mxu0 0.0
        %787 = vmatpush.xpose.msra.mxu0 0.0
        %788 = vmatpush.xpose.msra.mxu0 0.0
        %789 = vmatpush.xpose.msra.mxu0 0.0
        %790 = vmatpush.xpose.msra.mxu0 %v773
        %791 = vmatmul.f32.gmra.mxu0 %v770
        %v792 = vpop.f32.mrf.mxu0
        %v793 = vadd.f32 0.0, %v792
        %794 = vdwg.mxu0
        %v795 = vsel %vm632, %v793, -inf
        %796 = vmax.xlane.f32.xlu0 %v795
        %v797 = vpop.xlane.xlu0 %796
        %v798 = vsub.f32 %v793, %v797
        %v799 = vmul.f32 %v798, 1.442695
        %v800 = vpow.pop %v799
        %v801 = vsel %vm632, %v800, 0.0
        %802 = vadd.xlane.f32.xlu0 %v801
        %v803 = vpop.xlane.xlu0 %802
        %v804 = vrcp.pop %v803
        %v805 = vmul.f32 %v800, %v804
        %v807 = vsel %vm632, %v805, 0
        %809 = vmatpush.msra.mxu0 0.0
        %810 = vmatpush.msra.mxu0 0.0
        %811 = vmatpush.msra.mxu0 0.0
        %812 = vmatpush.msra.mxu0 0.0
        %813 = vmatpush.msra.mxu0 0.0
        %814 = vmatpush.msra.mxu0 0.0
        %815 = vmatpush.msra.mxu0 0.0
        %816 = vmatpush.msra.mxu0 0.0
        %817 = vmatpush.msra.mxu0 0.0
        %818 = vmatpush.msra.mxu0 0.0
        %819 = vmatpush.msra.mxu0 0.0
        %820 = vmatpush.msra.mxu0 0.0
        %821 = vmatpush.msra.mxu0 0.0
        %822 = vmatpush.msra.mxu0 0.0
        %823 = vmatpush.msra.mxu0 0.0
        %824 = vmatpush.msra.mxu0 %v767
        %825 = vmatmul.f32.gmra.mxu0 %v807
        %v826 = vpop.f32.mrf.mxu0
        %v827 = vadd.f32 0.0, %v826
        %828 = vdwg.mxu0
        %s829 = scalar_lea.vmem [#allocation7], 8
        %v830 = vld [vmem:[%s829] sm:$0xff]
        %v832 = vsel %vm632, %v827, 0
        %834 = vmatpush.msra.mxu0 0.0
        %835 = vmatpush.msra.mxu0 0.0
        %836 = vmatpush.msra.mxu0 0.0
        %837 = vmatpush.msra.mxu0 0.0
        %838 = vmatpush.msra.mxu0 0.0
        %839 = vmatpush.msra.mxu0 0.0
        %840 = vmatpush.msra.mxu0 0.0
        %841 = vmatpush.msra.mxu0 0.0
        %842 = vmatpush.msra.mxu0 0.0
        %843 = vmatpush.msra.mxu0 0.0
        %844 = vmatpush.msra.mxu0 0.0
        %845 = vmatpush.msra.mxu0 0.0
        %846 = vmatpush.msra.mxu0 0.0
        %847 = vmatpush.msra.mxu0 0.0
        %848 = vmatpush.msra.mxu0 0.0
        %849 = vmatpush.msra.mxu0 %v830
        %850 = vmatmul.f32.gmra.mxu0 %v832
        %v851 = vpop.f32.mrf.mxu0
        %v852 = vadd.f32 0.0, %v851
        %853 = vdwg.mxu0
        %v855 = vsel %vm632, %v691, 0
        %857 = vmatpush.msra.mxu0 0.0
        %858 = vmatpush.msra.mxu0 0.0
        %859 = vmatpush.msra.mxu0 0.0
        %860 = vmatpush.msra.mxu0 0.0
        %861 = vmatpush.msra.mxu0 0.0
        %862 = vmatpush.msra.mxu0 0.0
        %863 = vmatpush.msra.mxu0 0.0
        %864 = vmatpush.msra.mxu0 0.0
        %865 = vmatpush.msra.mxu0 0.0
        %866 = vmatpush.msra.mxu0 0.0
        %867 = vmatpush.msra.mxu0 0.0
        %868 = vmatpush.msra.mxu0 0.0
        %869 = vmatpush.msra.mxu0 0.0
        %870 = vmatpush.msra.mxu0 0.0
        %871 = vmatpush.msra.mxu0 0.0
        %872 = vmatpush.msra.mxu0 %v693
        %873 = vmatmul.f32.gmra.mxu0 %v855
        %v874 = vpop.f32.mrf.mxu0
        %v875 = vadd.f32 %v852, %v874
        %876 = vdwg.mxu0
        %s877 = scalar_lea.vmem %s3, 16
        %v878 = vld [vmem:[%s877] sm:$0xff]
        %v880 = vsel %vm517, %v878, 0
        %882 = vmatpush.xpose.msra.mxu0 0.0
        %883 = vmatpush.xpose.msra.mxu0 0.0
        %884 = vmatpush.xpose.msra.mxu0 0.0
        %885 = vmatpush.xpose.msra.mxu0 0.0
        %886 = vmatpush.xpose.msra.mxu0 0.0
        %887 = vmatpush.xpose.msra.mxu0 0.0
        %888 = vmatpush.xpose.msra.mxu0 0.0
        %889 = vmatpush.xpose.msra.mxu0 0.0
        %890 = vmatpush.xpose.msra.mxu0 0.0
        %891 = vmatpush.xpose.msra.mxu0 0.0
        %892 = vmatpush.xpose.msra.mxu0 0.0
        %893 = vmatpush.xpose.msra.mxu0 0.0
        %894 = vmatpush.xpose.msra.mxu0 0.0
        %895 = vmatpush.xpose.msra.mxu0 0.0
        %896 = vmatpush.xpose.msra.mxu0 0.0
        %897 = vmatpush.xpose.msra.mxu0 %v880
        %898 = vmatmul.f32.gmra.mxu0 %v557
        %v899 = vpop.f32.mrf.mxu0
        %v900 = vadd.f32 0.0, %v899
        %901 = vdwg.mxu0
        %s902 = scalar_lea.vmem %s3, 48
        %v903 = vld [vmem:[%s902] sm:$0xff]
        %v905 = vsel %vm517, %v903, 0
        %907 = vmatpush.xpose.msra.mxu0 0.0
        %908 = vmatpush.xpose.msra.mxu0 0.0
        %909 = vmatpush.xpose.msra.mxu0 0.0
        %910 = vmatpush.xpose.msra.mxu0 0.0
        %911 = vmatpush.xpose.msra.mxu0 0.0
        %912 = vmatpush.xpose.msra.mxu0 0.0
        %913 = vmatpush.xpose.msra.mxu0 0.0
        %914 = vmatpush.xpose.msra.mxu0 0.0
        %915 = vmatpush.xpose.msra.mxu0 0.0
        %916 = vmatpush.xpose.msra.mxu0 0.0
        %917 = vmatpush.xpose.msra.mxu0 0.0
        %918 = vmatpush.xpose.msra.mxu0 0.0
        %919 = vmatpush.xpose.msra.mxu0 0.0
        %920 = vmatpush.xpose.msra.mxu0 0.0
        %921 = vmatpush.xpose.msra.mxu0 0.0
        %922 = vmatpush.xpose.msra.mxu0 %v905
        %923 = vmatmul.f32.gmra.mxu0 %v557
        %v924 = vpop.f32.mrf.mxu0
        %v925 = vadd.f32 0.0, %v924
        %926 = vdwg.mxu0
        %s927 = scalar_lea.vmem %s3, 80
        %v928 = vld [vmem:[%s927] sm:$0xff]
        %v930 = vsel %vm517, %v928, 0
        %932 = vmatpush.xpose.msra.mxu0 0.0
        %933 = vmatpush.xpose.msra.mxu0 0.0
        %934 = vmatpush.xpose.msra.mxu0 0.0
        %935 = vmatpush.xpose.msra.mxu0 0.0
        %936 = vmatpush.xpose.msra.mxu0 0.0
        %937 = vmatpush.xpose.msra.mxu0 0.0
        %938 = vmatpush.xpose.msra.mxu0 0.0
        %939 = vmatpush.xpose.msra.mxu0 0.0
        %940 = vmatpush.xpose.msra.mxu0 0.0
        %941 = vmatpush.xpose.msra.mxu0 0.0
        %942 = vmatpush.xpose.msra.mxu0 0.0
        %943 = vmatpush.xpose.msra.mxu0 0.0
        %944 = vmatpush.xpose.msra.mxu0 0.0
        %945 = vmatpush.xpose.msra.mxu0 0.0
        %946 = vmatpush.xpose.msra.mxu0 0.0
        %947 = vmatpush.xpose.msra.mxu0 %v930
        %948 = vmatmul.f32.gmra.mxu0 %v557
        %v949 = vpop.f32.mrf.mxu0
        %v950 = vadd.f32 0.0, %v949
        %951 = vdwg.mxu0
        %v953 = vsel %vm632, %v900, 0
        %v956 = vsel %vm632, %v925, 0
        %958 = vmatpush.xpose.msra.mxu0 0.0
        %959 = vmatpush.xpose.msra.mxu0 0.0
        %960 = vmatpush.xpose.msra.mxu0 0.0
        %961 = vmatpush.xpose.msra.mxu0 0.0
        %962 = vmatpush.xpose.msra.mxu0 0.0
        %963 = vmatpush.xpose.msra.mxu0 0.0
        %964 = vmatpush.xpose.msra.mxu0 0.0
        %965 = vmatpush.xpose.msra.mxu0 0.0
        %966 = vmatpush.xpose.msra.mxu0 0.0
        %967 = vmatpush.xpose.msra.mxu0 0.0
        %968 = vmatpush.xpose.msra.mxu0 0.0
        %969 = vmatpush.xpose.msra.mxu0 0.0
        %970 = vmatpush.xpose.msra.mxu0 0.0
        %971 = vmatpush.xpose.msra.mxu0 0.0
        %972 = vmatpush.xpose.msra.mxu0 0.0
        %973 = vmatpush.xpose.msra.mxu0 %v956
        %974 = vmatmul.f32.gmra.mxu0 %v953
        %v975 = vpop.f32.mrf.mxu0
        %v976 = vadd.f32 0.0, %v975
        %977 = vdwg.mxu0
        %v978 = vsel %vm632, %v976, -inf
        %979 = vmax.xlane.f32.xlu0 %v978
        %v980 = vpop.xlane.xlu0 %979
        %v981 = vsub.f32 %v976, %v980
        %v982 = vmul.f32 %v981, 1.442695
        %v983 = vpow.pop %v982
        %v984 = vsel %vm632, %v983, 0.0
        %985 = vadd.xlane.f32.xlu0 %v984
        %v986 = vpop.xlane.xlu0 %985
        %v987 = vrcp.pop %v986
        %v988 = vmul.f32 %v983, %v987
        %v990 = vsel %vm632, %v988, 0
        %992 = vmatpush.msra.mxu0 0.0
        %993 = vmatpush.msra.mxu0 0.0
        %994 = vmatpush.msra.mxu0 0.0
        %995 = vmatpush.msra.mxu0 0.0
        %996 = vmatpush.msra.mxu0 0.0
        %997 = vmatpush.msra.mxu0 0.0
        %998 = vmatpush.msra.mxu0 0.0
        %999 = vmatpush.msra.mxu0 0.0
        %1000 = vmatpush.msra.mxu0 0.0
        %1001 = vmatpush.msra.mxu0 0.0
        %1002 = vmatpush.msra.mxu0 0.0
        %1003 = vmatpush.msra.mxu0 0.0
        %1004 = vmatpush.msra.mxu0 0.0
        %1005 = vmatpush.msra.mxu0 0.0
        %1006 = vmatpush.msra.mxu0 0.0
        %1007 = vmatpush.msra.mxu0 %v950
        %1008 = vmatmul.f32.gmra.mxu0 %v990
        %v1009 = vpop.f32.mrf.mxu0
        %v1010 = vadd.f32 0.0, %v1009
        %1011 = vdwg.mxu0
        %s1012 = scalar_lea.vmem [#allocation7], 16
        %v1013 = vld [vmem:[%s1012] sm:$0xff]
        %v1015 = vsel %vm632, %v1010, 0
        %1017 = vmatpush.msra.mxu0 0.0
        %1018 = vmatpush.msra.mxu0 0.0
        %1019 = vmatpush.msra.mxu0 0.0
        %1020 = vmatpush.msra.mxu0 0.0
        %1021 = vmatpush.msra.mxu0 0.0
        %1022 = vmatpush.msra.mxu0 0.0
        %1023 = vmatpush.msra.mxu0 0.0
        %1024 = vmatpush.msra.mxu0 0.0
        %1025 = vmatpush.msra.mxu0 0.0
        %1026 = vmatpush.msra.mxu0 0.0
        %1027 = vmatpush.msra.mxu0 0.0
        %1028 = vmatpush.msra.mxu0 0.0
        %1029 = vmatpush.msra.mxu0 0.0
        %1030 = vmatpush.msra.mxu0 0.0
        %1031 = vmatpush.msra.mxu0 0.0
        %1032 = vmatpush.msra.mxu0 %v1013
        %1033 = vmatmul.f32.gmra.mxu0 %v1015
        %v1034 = vpop.f32.mrf.mxu0
        %v1035 = vadd.f32 0.0, %v1034
        %1036 = vdwg.mxu0
        %v1037 = vadd.f32 %v875, %v1035
        %s1038 = scalar_lea.vmem %s3, 24
        %v1039 = vld [vmem:[%s1038] sm:$0xff]
        %v1041 = vsel %vm517, %v1039, 0
        %1043 = vmatpush.xpose.msra.mxu0 0.0
        %1044 = vmatpush.xpose.msra.mxu0 0.0
        %1045 = vmatpush.xpose.msra.mxu0 0.0
        %1046 = vmatpush.xpose.msra.mxu0 0.0
        %1047 = vmatpush.xpose.msra.mxu0 0.0
        %1048 = vmatpush.xpose.msra.mxu0 0.0
        %1049 = vmatpush.xpose.msra.mxu0 0.0
        %1050 = vmatpush.xpose.msra.mxu0 0.0
        %1051 = vmatpush.xpose.msra.mxu0 0.0
        %1052 = vmatpush.xpose.msra.mxu0 0.0
        %1053 = vmatpush.xpose.msra.mxu0 0.0
        %1054 = vmatpush.xpose.msra.mxu0 0.0
        %1055 = vmatpush.xpose.msra.mxu0 0.0
        %1056 = vmatpush.xpose.msra.mxu0 0.0
        %1057 = vmatpush.xpose.msra.mxu0 0.0
        %1058 = vmatpush.xpose.msra.mxu0 %v1041
        %1059 = vmatmul.f32.gmra.mxu0 %v557
        %v1060 = vpop.f32.mrf.mxu0
        %v1061 = vadd.f32 0.0, %v1060
        %1062 = vdwg.mxu0
        %s1063 = scalar_lea.vmem %s3, 56
        %v1064 = vld [vmem:[%s1063] sm:$0xff]
        %v1066 = vsel %vm517, %v1064, 0
        %1068 = vmatpush.xpose.msra.mxu0 0.0
        %1069 = vmatpush.xpose.msra.mxu0 0.0
        %1070 = vmatpush.xpose.msra.mxu0 0.0
        %1071 = vmatpush.xpose.msra.mxu0 0.0
        %1072 = vmatpush.xpose.msra.mxu0 0.0
        %1073 = vmatpush.xpose.msra.mxu0 0.0
        %1074 = vmatpush.xpose.msra.mxu0 0.0
        %1075 = vmatpush.xpose.msra.mxu0 0.0
        %1076 = vmatpush.xpose.msra.mxu0 0.0
        %1077 = vmatpush.xpose.msra.mxu0 0.0
        %1078 = vmatpush.xpose.msra.mxu0 0.0
        %1079 = vmatpush.xpose.msra.mxu0 0.0
        %1080 = vmatpush.xpose.msra.mxu0 0.0
        %1081 = vmatpush.xpose.msra.mxu0 0.0
        %1082 = vmatpush.xpose.msra.mxu0 0.0
        %1083 = vmatpush.xpose.msra.mxu0 %v1066
        %1084 = vmatmul.f32.gmra.mxu0 %v557
        %v1085 = vpop.f32.mrf.mxu0
        %v1086 = vadd.f32 0.0, %v1085
        %1087 = vdwg.mxu0
        %s1088 = scalar_lea.vmem %s3, 88
        %v1089 = vld [vmem:[%s1088] sm:$0xff]
        %v1091 = vsel %vm517, %v1089, 0
        %1093 = vmatpush.xpose.msra.mxu0 0.0
        %1094 = vmatpush.xpose.msra.mxu0 0.0
        %1095 = vmatpush.xpose.msra.mxu0 0.0
        %1096 = vmatpush.xpose.msra.mxu0 0.0
        %1097 = vmatpush.xpose.msra.mxu0 0.0
        %1098 = vmatpush.xpose.msra.mxu0 0.0
        %1099 = vmatpush.xpose.msra.mxu0 0.0
        %1100 = vmatpush.xpose.msra.mxu0 0.0
        %1101 = vmatpush.xpose.msra.mxu0 0.0
        %1102 = vmatpush.xpose.msra.mxu0 0.0
        %1103 = vmatpush.xpose.msra.mxu0 0.0
        %1104 = vmatpush.xpose.msra.mxu0 0.0
        %1105 = vmatpush.xpose.msra.mxu0 0.0
        %1106 = vmatpush.xpose.msra.mxu0 0.0
        %1107 = vmatpush.xpose.msra.mxu0 0.0
        %1108 = vmatpush.xpose.msra.mxu0 %v1091
        %1109 = vmatmul.f32.gmra.mxu0 %v557
        %v1110 = vpop.f32.mrf.mxu0
        %v1111 = vadd.f32 0.0, %v1110
        %1112 = vdwg.mxu0
        %v1114 = vsel %vm632, %v1061, 0
        %v1117 = vsel %vm632, %v1086, 0
        %1119 = vmatpush.xpose.msra.mxu0 0.0
        %1120 = vmatpush.xpose.msra.mxu0 0.0
        %1121 = vmatpush.xpose.msra.mxu0 0.0
        %1122 = vmatpush.xpose.msra.mxu0 0.0
        %1123 = vmatpush.xpose.msra.mxu0 0.0
        %1124 = vmatpush.xpose.msra.mxu0 0.0
        %1125 = vmatpush.xpose.msra.mxu0 0.0
        %1126 = vmatpush.xpose.msra.mxu0 0.0
        %1127 = vmatpush.xpose.msra.mxu0 0.0
        %1128 = vmatpush.xpose.msra.mxu0 0.0
        %1129 = vmatpush.xpose.msra.mxu0 0.0
        %1130 = vmatpush.xpose.msra.mxu0 0.0
        %1131 = vmatpush.xpose.msra.mxu0 0.0
        %1132 = vmatpush.xpose.msra.mxu0 0.0
        %1133 = vmatpush.xpose.msra.mxu0 0.0
        %1134 = vmatpush.xpose.msra.mxu0 %v1117
        %1135 = vmatmul.f32.gmra.mxu0 %v1114
        %v1136 = vpop.f32.mrf.mxu0
        %v1137 = vadd.f32 0.0, %v1136
        %1138 = vdwg.mxu0
        %v1139 = vsel %vm632, %v1137, -inf
        %1140 = vmax.xlane.f32.xlu0 %v1139
        %v1141 = vpop.xlane.xlu0 %1140
        %v1142 = vsub.f32 %v1137, %v1141
        %v1143 = vmul.f32 %v1142, 1.442695
        %v1144 = vpow.pop %v1143
        %v1145 = vsel %vm632, %v1144, 0.0
        %1146 = vadd.xlane.f32.xlu0 %v1145
        %v1147 = vpop.xlane.xlu0 %1146
        %v1148 = vrcp.pop %v1147
        %v1149 = vmul.f32 %v1144, %v1148
        %v1151 = vsel %vm632, %v1149, 0
        %1153 = vmatpush.msra.mxu0 0.0
        %1154 = vmatpush.msra.mxu0 0.0
        %1155 = vmatpush.msra.mxu0 0.0
        %1156 = vmatpush.msra.mxu0 0.0
        %1157 = vmatpush.msra.mxu0 0.0
        %1158 = vmatpush.msra.mxu0 0.0
        %1159 = vmatpush.msra.mxu0 0.0
        %1160 = vmatpush.msra.mxu0 0.0
        %1161 = vmatpush.msra.mxu0 0.0
        %1162 = vmatpush.msra.mxu0 0.0
        %1163 = vmatpush.msra.mxu0 0.0
        %1164 = vmatpush.msra.mxu0 0.0
        %1165 = vmatpush.msra.mxu0 0.0
        %1166 = vmatpush.msra.mxu0 0.0
        %1167 = vmatpush.msra.mxu0 0.0
        %1168 = vmatpush.msra.mxu0 %v1111
        %1169 = vmatmul.f32.gmra.mxu0 %v1151
        %v1170 = vpop.f32.mrf.mxu0
        %v1171 = vadd.f32 0.0, %v1170
        %1172 = vdwg.mxu0
        %s1173 = scalar_lea.vmem [#allocation7], 24
        %v1174 = vld [vmem:[%s1173] sm:$0xff]
        %v1176 = vsel %vm632, %v1171, 0
        %1178 = vmatpush.msra.mxu0 0.0
        %1179 = vmatpush.msra.mxu0 0.0
        %1180 = vmatpush.msra.mxu0 0.0
        %1181 = vmatpush.msra.mxu0 0.0
        %1182 = vmatpush.msra.mxu0 0.0
        %1183 = vmatpush.msra.mxu0 0.0
        %1184 = vmatpush.msra.mxu0 0.0
        %1185 = vmatpush.msra.mxu0 0.0
        %1186 = vmatpush.msra.mxu0 0.0
        %1187 = vmatpush.msra.mxu0 0.0
        %1188 = vmatpush.msra.mxu0 0.0
        %1189 = vmatpush.msra.mxu0 0.0
        %1190 = vmatpush.msra.mxu0 0.0
        %1191 = vmatpush.msra.mxu0 0.0
        %1192 = vmatpush.msra.mxu0 0.0
        %1193 = vmatpush.msra.mxu0 %v1174
        %1194 = vmatmul.f32.gmra.mxu0 %v1176
        %v1195 = vpop.f32.mrf.mxu0
        %v1196 = vadd.f32 0.0, %v1195
        %1197 = vdwg.mxu0
        %v1198 = vadd.f32 %v1037, %v1196
        %v1199 = vadd.f32 %v514, %v1198
        %v1200 = vld [vmem:[#allocation8] sm:$0x1]
        %v1202 = vperm.slane %v1200, 0
        %v1204 = vadd.f32 %v1199, %v1202
        %v1205 = vld [vmem:[%s6] sm:$0x1]
        %v1206 = vld [vmem:[#allocation10] sm:$0x1]
        %v1207 = vsel %vm517, %v1204, 0.0
        %1208 = vadd.xlane.f32.xlu0 %v1207
        %v1209 = vpop.xlane.xlu0 %1208
        %v1210 = vmul.f32 %v1209, %v527
        %v1211 = vsub.f32 %v1204, %v1210
        %v1212 = vmul.f32 %v1211, %v1211
        %v1213 = vsel %vm517, %v1212, 0.0
        %1214 = vadd.xlane.f32.xlu0 %v1213
        %v1215 = vpop.xlane.xlu0 %1214
        %v1216 = vmul.f32 %v1215, %v527
        %v1217 = vadd.f32 %v1216, 1e-05
        %v1218 = vrsqrt.pop %v1217
        %v1219 = vmul.f32 %v1218, %v1217
        %v1220 = vmul.f32 %v1219, %v1218
        %v1221 = vmul.f32 0.5, %v1220
        %v1222 = vsub.f32 1.5, %v1221
        %v1223 = vmul.f32 %v1218, %v1222
        %vm1224 = vweird.f32 %v1217
        %vm1225 = vweird.f32 %v1218
        %vm1226 = vmor %vm1224, %vm1225
        %v1227 = vsel %vm1226, %v1218, %v1223
        %v1228 = vmul.f32 %v1211, %v1227
        %v1230 = vperm.slane %v1205, 0
        %v1232 = vmul.f32 %v1228, %v1230
        %v1234 = vperm.slane %v1206, 0
        %v1236 = vadd.f32 %v1232, %v1234
        %v1237 = vld [vmem:[#allocation11] sm:$0xff]
        %v1238 = vld [vmem:[#allocation11 + $0x8] sm:$0xff]
        %v1239 = vld [vmem:[#allocation11 + $0x10] sm:$0xff]
        %v1240 = vld [vmem:[#allocation11 + $0x18] sm:$0xff]
        %v1241 = vld [vmem:[%s9] sm:$0x1]
        %v1243 = vperm.slane %v1241, 0
        %v1246 = vsel %vm517, %v1236, 0
        %1248 = vmatpush.msra.mxu0 0.0
        %1249 = vmatpush.msra.mxu0 0.0
        %1250 = vmatpush.msra.mxu0 0.0
        %1251 = vmatpush.msra.mxu0 0.0
        %1252 = vmatpush.msra.mxu0 0.0
        %1253 = vmatpush.msra.mxu0 0.0
        %1254 = vmatpush.msra.mxu0 0.0
        %1255 = vmatpush.msra.mxu0 0.0
        %1256 = vmatpush.msra.mxu0 0.0
        %1257 = vmatpush.msra.mxu0 0.0
        %1258 = vmatpush.msra.mxu0 0.0
        %1259 = vmatpush.msra.mxu0 0.0
        %1260 = vmatpush.msra.mxu0 %v1240
        %1261 = vmatpush.msra.mxu0 %v1239
        %1262 = vmatpush.msra.mxu0 %v1238
        %1263 = vmatpush.msra.mxu0 %v1237
        %1264 = vmatmul.f32.gmra.mxu0 %v1246
        %v1265 = vpop.f32.mrf.mxu0
        %v1266 = vadd.f32 %v1243, %v1265
        %1267 = vdwg.mxu0
        %v1268 = vmul.f32 %v1266, %v1266
        %v1269 = vmul.f32 %v1266, %v1268
        %v1270 = vmul.f32 %v1269, 0.044715
        %v1271 = vadd.f32 %v1266, %v1270
        %v1272 = vmul.f32 %v1271, 0.7978846
        %v1273 = vtanh.pop %v1272
        %v1274 = vadd.f32 %v1273, 1.0
        %v1275 = vmul.f32 %v1274, 0.5
        %v1276 = vmul.f32 %v1266, %v1275
        %v1277 = vld [vmem:[%s10] sm:$0xff]
        %v1278 = vld [vmem:[%s10 + $0x8] sm:$0xff]
        %v1279 = vld [vmem:[%s10 + $0x10] sm:$0xff]
        %v1280 = vld [vmem:[%s10 + $0x18] sm:$0xff]
        %v1281 = vld [vmem:[%s10 + $0x20] sm:$0xff]
        %v1282 = vld [vmem:[%s10 + $0x28] sm:$0xff]
        %v1283 = vld [vmem:[%s10 + $0x30] sm:$0xff]
        %v1284 = vld [vmem:[%s10 + $0x38] sm:$0xff]
        %vm1285 = vcmask 523264
        %v1287 = vsel %vm1285, %v1276, 0
        %1289 = vmatpush.msra.mxu0 0.0
        %1290 = vmatpush.msra.mxu0 0.0
        %1291 = vmatpush.msra.mxu0 0.0
        %1292 = vmatpush.msra.mxu0 0.0
        %1293 = vmatpush.msra.mxu0 0.0
        %1294 = vmatpush.msra.mxu0 0.0
        %1295 = vmatpush.msra.mxu0 0.0
        %1296 = vmatpush.msra.mxu0 0.0
        %1297 = vmatpush.msra.mxu0 %v1284
        %1298 = vmatpush.msra.mxu0 %v1283
        %1299 = vmatpush.msra.mxu0 %v1282
        %1300 = vmatpush.msra.mxu0 %v1281
        %1301 = vmatpush.msra.mxu0 %v1280
        %1302 = vmatpush.msra.mxu0 %v1279
        %1303 = vmatpush.msra.mxu0 %v1278
        %1304 = vmatpush.msra.mxu0 %v1277
        %1305 = vmatmul.f32.gmra.mxu0 %v1287
        %v1306 = vpop.f32.mrf.mxu0
        %v1307 = vadd.f32 0.0, %v1306
        %1308 = vdwg.mxu0
        %v1309 = vadd.f32 %v1204, %v1307
        %v1310 = vld [vmem:[%s11] sm:$0x1]
        %v1312 = vperm.slane %v1310, 0
        %v1314 = vadd.f32 %v1309, %v1312
        %s1315 = scalar_lea.vmem %s1, 1
        %v1316 = vld [vmem:[%s1315] sm:$0x1]
        %s1317 = scalar_lea.vmem [#allocation5], 1
        %v1318 = vld [vmem:[%s1317] sm:$0x1]
        %v1319 = vsel %vm517, %v1314, 0.0
        %1320 = vadd.xlane.f32.xlu0 %v1319
        %v1321 = vpop.xlane.xlu0 %1320
        %v1322 = vmul.f32 %v1321, %v527
        %v1323 = vsub.f32 %v1314, %v1322
        %v1324 = vmul.f32 %v1323, %v1323
        %v1325 = vsel %vm517, %v1324, 0.0
        %1326 = vadd.xlane.f32.xlu0 %v1325
        %v1327 = vpop.xlane.xlu0 %1326
        %v1328 = vmul.f32 %v1327, %v527
        %v1329 = vadd.f32 %v1328, 1e-05
        %v1330 = vrsqrt.pop %v1329
        %v1331 = vmul.f32 %v1330, %v1329
        %v1332 = vmul.f32 %v1331, %v1330
        %v1333 = vmul.f32 0.5, %v1332
        %v1334 = vsub.f32 1.5, %v1333
        %v1335 = vmul.f32 %v1330, %v1334
        %vm1336 = vweird.f32 %v1329
        %vm1337 = vweird.f32 %v1330
        %vm1338 = vmor %vm1336, %vm1337
        %v1339 = vsel %vm1338, %v1330, %v1335
        %v1340 = vmul.f32 %v1323, %v1339
        %v1342 = vperm.slane %v1316, 0
        %v1344 = vmul.f32 %v1340, %v1342
        %v1346 = vperm.slane %v1318, 0
        %v1348 = vadd.f32 %v1344, %v1346
        %s1349 = scalar_lea.vmem %s3, 96
        %v1350 = vld [vmem:[%s1349] sm:$0xff]
        %v1352 = vsel %vm517, %v1348, 0
        %v1355 = vsel %vm517, %v1350, 0
        %1357 = vmatpush.xpose.msra.mxu0 0.0
        %1358 = vmatpush.xpose.msra.mxu0 0.0
        %1359 = vmatpush.xpose.msra.mxu0 0.0
        %1360 = vmatpush.xpose.msra.mxu0 0.0
        %1361 = vmatpush.xpose.msra.mxu0 0.0
        %1362 = vmatpush.xpose.msra.mxu0 0.0
        %1363 = vmatpush.xpose.msra.mxu0 0.0
        %1364 = vmatpush.xpose.msra.mxu0 0.0
        %1365 = vmatpush.xpose.msra.mxu0 0.0
        %1366 = vmatpush.xpose.msra.mxu0 0.0
        %1367 = vmatpush.xpose.msra.mxu0 0.0
        %1368 = vmatpush.xpose.msra.mxu0 0.0
        %1369 = vmatpush.xpose.msra.mxu0 0.0
        %1370 = vmatpush.xpose.msra.mxu0 0.0
        %1371 = vmatpush.xpose.msra.mxu0 0.0
        %1372 = vmatpush.xpose.msra.mxu0 %v1355
        %1373 = vmatmul.f32.gmra.mxu0 %v1352
        %v1374 = vpop.f32.mrf.mxu0
        %v1375 = vadd.f32 0.0, %v1374
        %1376 = vdwg.mxu0
        %s1377 = scalar_lea.vmem %s3, 128
        %v1378 = vld [vmem:[%s1377] sm:$0xff]
        %v1380 = vsel %vm517, %v1378, 0
        %1382 = vmatpush.xpose.msra.mxu0 0.0
        %1383 = vmatpush.xpose.msra.mxu0 0.0
        %1384 = vmatpush.xpose.msra.mxu0 0.0
        %1385 = vmatpush.xpose.msra.mxu0 0.0
        %1386 = vmatpush.xpose.msra.mxu0 0.0
        %1387 = vmatpush.xpose.msra.mxu0 0.0
        %1388 = vmatpush.xpose.msra.mxu0 0.0
        %1389 = vmatpush.xpose.msra.mxu0 0.0
        %1390 = vmatpush.xpose.msra.mxu0 0.0
        %1391 = vmatpush.xpose.msra.mxu0 0.0
        %1392 = vmatpush.xpose.msra.mxu0 0.0
        %1393 = vmatpush.xpose.msra.mxu0 0.0
        %1394 = vmatpush.xpose.msra.mxu0 0.0
        %1395 = vmatpush.xpose.msra.mxu0 0.0
        %1396 = vmatpush.xpose.msra.mxu0 0.0
        %1397 = vmatpush.xpose.msra.mxu0 %v1380
        %1398 = vmatmul.f32.gmra.mxu0 %v1352
        %v1399 = vpop.f32.mrf.mxu0
        %v1400 = vadd.f32 0.0, %v1399
        %1401 = vdwg.mxu0
        %s1402 = scalar_lea.vmem %s3, 160
        %v1403 = vld [vmem:[%s1402] sm:$0xff]
        %v1405 = vsel %vm517, %v1403, 0
        %1407 = vmatpush.xpose.msra.mxu0 0.0
        %1408 = vmatpush.xpose.msra.mxu0 0.0
        %1409 = vmatpush.xpose.msra.mxu0 0.0
        %1410 = vmatpush.xpose.msra.mxu0 0.0
        %1411 = vmatpush.xpose.msra.mxu0 0.0
        %1412 = vmatpush.xpose.msra.mxu0 0.0
        %1413 = vmatpush.xpose.msra.mxu0 0.0
        %1414 = vmatpush.xpose.msra.mxu0 0.0
        %1415 = vmatpush.xpose.msra.mxu0 0.0
        %1416 = vmatpush.xpose.msra.mxu0 0.0
        %1417 = vmatpush.xpose.msra.mxu0 0.0
        %1418 = vmatpush.xpose.msra.mxu0 0.0
        %1419 = vmatpush.xpose.msra.mxu0 0.0
        %1420 = vmatpush.xpose.msra.mxu0 0.0
        %1421 = vmatpush.xpose.msra.mxu0 0.0
        %1422 = vmatpush.xpose.msra.mxu0 %v1405
        %1423 = vmatmul.f32.gmra.mxu0 %v1352
        %v1424 = vpop.f32.mrf.mxu0
        %v1425 = vadd.f32 0.0, %v1424
        %1426 = vdwg.mxu0
        %v1428 = vsel %vm632, %v1375, 0
        %v1431 = vsel %vm632, %v1400, 0
        %1433 = vmatpush.xpose.msra.mxu0 0.0
        %1434 = vmatpush.xpose.msra.mxu0 0.0
        %1435 = vmatpush.xpose.msra.mxu0 0.0
        %1436 = vmatpush.xpose.msra.mxu0 0.0
        %1437 = vmatpush.xpose.msra.mxu0 0.0
        %1438 = vmatpush.xpose.msra.mxu0 0.0
        %1439 = vmatpush.xpose.msra.mxu0 0.0
        %1440 = vmatpush.xpose.msra.mxu0 0.0
        %1441 = vmatpush.xpose.msra.mxu0 0.0
        %1442 = vmatpush.xpose.msra.mxu0 0.0
        %1443 = vmatpush.xpose.msra.mxu0 0.0
        %1444 = vmatpush.xpose.msra.mxu0 0.0
        %1445 = vmatpush.xpose.msra.mxu0 0.0
        %1446 = vmatpush.xpose.msra.mxu0 0.0
        %1447 = vmatpush.xpose.msra.mxu0 0.0
        %1448 = vmatpush.xpose.msra.mxu0 %v1431
        %1449 = vmatmul.f32.gmra.mxu0 %v1428
        %v1450 = vpop.f32.mrf.mxu0
        %v1451 = vadd.f32 0.0, %v1450
        %1452 = vdwg.mxu0
        %v1453 = vsel %vm632, %v1451, -inf
        %1454 = vmax.xlane.f32.xlu0 %v1453
        %v1455 = vpop.xlane.xlu0 %1454
        %v1456 = vsub.f32 %v1451, %v1455
        %v1457 = vmul.f32 %v1456, 1.442695
        %v1458 = vpow.pop %v1457
        %v1459 = vsel %vm632, %v1458, 0.0
        %1460 = vadd.xlane.f32.xlu0 %v1459
        %v1461 = vpop.xlane.xlu0 %1460
        %v1462 = vrcp.pop %v1461
        %v1463 = vmul.f32 %v1458, %v1462
        %v1465 = vsel %vm632, %v1463, 0
        %1467 = vmatpush.msra.mxu0 0.0
        %1468 = vmatpush.msra.mxu0 0.0
        %1469 = vmatpush.msra.mxu0 0.0
        %1470 = vmatpush.msra.mxu0 0.0
        %1471 = vmatpush.msra.mxu0 0.0
        %1472 = vmatpush.msra.mxu0 0.0
        %1473 = vmatpush.msra.mxu0 0.0
        %1474 = vmatpush.msra.mxu0 0.0
        %1475 = vmatpush.msra.mxu0 0.0
        %1476 = vmatpush.msra.mxu0 0.0
        %1477 = vmatpush.msra.mxu0 0.0
        %1478 = vmatpush.msra.mxu0 0.0
        %1479 = vmatpush.msra.mxu0 0.0
        %1480 = vmatpush.msra.mxu0 0.0
        %1481 = vmatpush.msra.mxu0 0.0
        %1482 = vmatpush.msra.mxu0 %v1425
        %1483 = vmatmul.f32.gmra.mxu0 %v1465
        %v1484 = vpop.f32.mrf.mxu0
        %v1485 = vadd.f32 0.0, %v1484
        %1486 = vdwg.mxu0
        %s1487 = scalar_lea.vmem [#allocation7], 32
        %v1488 = vld [vmem:[%s1487] sm:$0xff]
        %s1489 = scalar_lea.vmem %s3, 104
        %v1490 = vld [vmem:[%s1489] sm:$0xff]
        %v1492 = vsel %vm517, %v1490, 0
        %1494 = vmatpush.xpose.msra.mxu0 0.0
        %1495 = vmatpush.xpose.msra.mxu0 0.0
        %1496 = vmatpush.xpose.msra.mxu0 0.0
        %1497 = vmatpush.xpose.msra.mxu0 0.0
        %1498 = vmatpush.xpose.msra.mxu0 0.0
        %1499 = vmatpush.xpose.msra.mxu0 0.0
        %1500 = vmatpush.xpose.msra.mxu0 0.0
        %1501 = vmatpush.xpose.msra.mxu0 0.0
        %1502 = vmatpush.xpose.msra.mxu0 0.0
        %1503 = vmatpush.xpose.msra.mxu0 0.0
        %1504 = vmatpush.xpose.msra.mxu0 0.0
        %1505 = vmatpush.xpose.msra.mxu0 0.0
        %1506 = vmatpush.xpose.msra.mxu0 0.0
        %1507 = vmatpush.xpose.msra.mxu0 0.0
        %1508 = vmatpush.xpose.msra.mxu0 0.0
        %1509 = vmatpush.xpose.msra.mxu0 %v1492
        %1510 = vmatmul.f32.gmra.mxu0 %v1352
        %v1511 = vpop.f32.mrf.mxu0
        %v1512 = vadd.f32 0.0, %v1511
        %1513 = vdwg.mxu0
        %s1514 = scalar_lea.vmem %s3, 136
        %v1515 = vld [vmem:[%s1514] sm:$0xff]
        %v1517 = vsel %vm517, %v1515, 0
        %1519 = vmatpush.xpose.msra.mxu0 0.0
        %1520 = vmatpush.xpose.msra.mxu0 0.0
        %1521 = vmatpush.xpose.msra.mxu0 0.0
        %1522 = vmatpush.xpose.msra.mxu0 0.0
        %1523 = vmatpush.xpose.msra.mxu0 0.0
        %1524 = vmatpush.xpose.msra.mxu0 0.0
        %1525 = vmatpush.xpose.msra.mxu0 0.0
        %1526 = vmatpush.xpose.msra.mxu0 0.0
        %1527 = vmatpush.xpose.msra.mxu0 0.0
        %1528 = vmatpush.xpose.msra.mxu0 0.0
        %1529 = vmatpush.xpose.msra.mxu0 0.0
        %1530 = vmatpush.xpose.msra.mxu0 0.0
        %1531 = vmatpush.xpose.msra.mxu0 0.0
        %1532 = vmatpush.xpose.msra.mxu0 0.0
        %1533 = vmatpush.xpose.msra.mxu0 0.0
        %1534 = vmatpush.xpose.msra.mxu0 %v1517
        %1535 = vmatmul.f32.gmra.mxu0 %v1352
        %v1536 = vpop.f32.mrf.mxu0
        %v1537 = vadd.f32 0.0, %v1536
        %1538 = vdwg.mxu0
        %s1539 = scalar_lea.vmem %s3, 168
        %v1540 = vld [vmem:[%s1539] sm:$0xff]
        %v1542 = vsel %vm517, %v1540, 0
        %1544 = vmatpush.xpose.msra.mxu0 0.0
        %1545 = vmatpush.xpose.msra.mxu0 0.0
        %1546 = vmatpush.xpose.msra.mxu0 0.0
        %1547 = vmatpush.xpose.msra.mxu0 0.0
        %1548 = vmatpush.xpose.msra.mxu0 0.0
        %1549 = vmatpush.xpose.msra.mxu0 0.0
        %1550 = vmatpush.xpose.msra.mxu0 0.0
        %1551 = vmatpush.xpose.msra.mxu0 0.0
        %1552 = vmatpush.xpose.msra.mxu0 0.0
        %1553 = vmatpush.xpose.msra.mxu0 0.0
        %1554 = vmatpush.xpose.msra.mxu0 0.0
        %1555 = vmatpush.xpose.msra.mxu0 0.0
        %1556 = vmatpush.xpose.msra.mxu0 0.0
        %1557 = vmatpush.xpose.msra.mxu0 0.0
        %1558 = vmatpush.xpose.msra.mxu0 0.0
        %1559 = vmatpush.xpose.msra.mxu0 %v1542
        %1560 = vmatmul.f32.gmra.mxu0 %v1352
        %v1561 = vpop.f32.mrf.mxu0
        %v1562 = vadd.f32 0.0, %v1561
        %1563 = vdwg.mxu0
        %v1565 = vsel %vm632, %v1512, 0
        %v1568 = vsel %vm632, %v1537, 0
        %1570 = vmatpush.xpose.msra.mxu0 0.0
        %1571 = vmatpush.xpose.msra.mxu0 0.0
        %1572 = vmatpush.xpose.msra.mxu0 0.0
        %1573 = vmatpush.xpose.msra.mxu0 0.0
        %1574 = vmatpush.xpose.msra.mxu0 0.0
        %1575 = vmatpush.xpose.msra.mxu0 0.0
        %1576 = vmatpush.xpose.msra.mxu0 0.0
        %1577 = vmatpush.xpose.msra.mxu0 0.0
        %1578 = vmatpush.xpose.msra.mxu0 0.0
        %1579 = vmatpush.xpose.msra.mxu0 0.0
        %1580 = vmatpush.xpose.msra.mxu0 0.0
        %1581 = vmatpush.xpose.msra.mxu0 0.0
        %1582 = vmatpush.xpose.msra.mxu0 0.0
        %1583 = vmatpush.xpose.msra.mxu0 0.0
        %1584 = vmatpush.xpose.msra.mxu0 0.0
        %1585 = vmatpush.xpose.msra.mxu0 %v1568
        %1586 = vmatmul.f32.gmra.mxu0 %v1565
        %v1587 = vpop.f32.mrf.mxu0
        %v1588 = vadd.f32 0.0, %v1587
        %1589 = vdwg.mxu0
        %v1590 = vsel %vm632, %v1588, -inf
        %1591 = vmax.xlane.f32.xlu0 %v1590
        %v1592 = vpop.xlane.xlu0 %1591
        %v1593 = vsub.f32 %v1588, %v1592
        %v1594 = vmul.f32 %v1593, 1.442695
        %v1595 = vpow.pop %v1594
        %v1596 = vsel %vm632, %v1595, 0.0
        %1597 = vadd.xlane.f32.xlu0 %v1596
        %v1598 = vpop.xlane.xlu0 %1597
        %v1599 = vrcp.pop %v1598
        %v1600 = vmul.f32 %v1595, %v1599
        %v1602 = vsel %vm632, %v1600, 0
        %1604 = vmatpush.msra.mxu0 0.0
        %1605 = vmatpush.msra.mxu0 0.0
        %1606 = vmatpush.msra.mxu0 0.0
        %1607 = vmatpush.msra.mxu0 0.0
        %1608 = vmatpush.msra.mxu0 0.0
        %1609 = vmatpush.msra.mxu0 0.0
        %1610 = vmatpush.msra.mxu0 0.0
        %1611 = vmatpush.msra.mxu0 0.0
        %1612 = vmatpush.msra.mxu0 0.0
        %1613 = vmatpush.msra.mxu0 0.0
        %1614 = vmatpush.msra.mxu0 0.0
        %1615 = vmatpush.msra.mxu0 0.0
        %1616 = vmatpush.msra.mxu0 0.0
        %1617 = vmatpush.msra.mxu0 0.0
        %1618 = vmatpush.msra.mxu0 0.0
        %1619 = vmatpush.msra.mxu0 %v1562
        %1620 = vmatmul.f32.gmra.mxu0 %v1602
        %v1621 = vpop.f32.mrf.mxu0
        %v1622 = vadd.f32 0.0, %v1621
        %1623 = vdwg.mxu0
        %s1624 = scalar_lea.vmem [#allocation7], 40
        %v1625 = vld [vmem:[%s1624] sm:$0xff]
        %v1627 = vsel %vm632, %v1622, 0
        %1629 = vmatpush.msra.mxu0 0.0
        %1630 = vmatpush.msra.mxu0 0.0
        %1631 = vmatpush.msra.mxu0 0.0
        %1632 = vmatpush.msra.mxu0 0.0
        %1633 = vmatpush.msra.mxu0 0.0
        %1634 = vmatpush.msra.mxu0 0.0
        %1635 = vmatpush.msra.mxu0 0.0
        %1636 = vmatpush.msra.mxu0 0.0
        %1637 = vmatpush.msra.mxu0 0.0
        %1638 = vmatpush.msra.mxu0 0.0
        %1639 = vmatpush.msra.mxu0 0.0
        %1640 = vmatpush.msra.mxu0 0.0
        %1641 = vmatpush.msra.mxu0 0.0
        %1642 = vmatpush.msra.mxu0 0.0
        %1643 = vmatpush.msra.mxu0 0.0
        %1644 = vmatpush.msra.mxu0 %v1625
        %1645 = vmatmul.f32.gmra.mxu0 %v1627
        %v1646 = vpop.f32.mrf.mxu0
        %v1647 = vadd.f32 0.0, %v1646
        %1648 = vdwg.mxu0
        %v1650 = vsel %vm632, %v1485, 0
        %1652 = vmatpush.msra.mxu0 0.0
        %1653 = vmatpush.msra.mxu0 0.0
        %1654 = vmatpush.msra.mxu0 0.0
        %1655 = vmatpush.msra.mxu0 0.0
        %1656 = vmatpush.msra.mxu0 0.0
        %1657 = vmatpush.msra.mxu0 0.0
        %1658 = vmatpush.msra.mxu0 0.0
        %1659 = vmatpush.msra.mxu0 0.0
        %1660 = vmatpush.msra.mxu0 0.0
        %1661 = vmatpush.msra.mxu0 0.0
        %1662 = vmatpush.msra.mxu0 0.0
        %1663 = vmatpush.msra.mxu0 0.0
        %1664 = vmatpush.msra.mxu0 0.0
        %1665 = vmatpush.msra.mxu0 0.0
        %1666 = vmatpush.msra.mxu0 0.0
        %1667 = vmatpush.msra.mxu0 %v1488
        %1668 = vmatmul.f32.gmra.mxu0 %v1650
        %v1669 = vpop.f32.mrf.mxu0
        %v1670 = vadd.f32 %v1647, %v1669
        %1671 = vdwg.mxu0
        %s1672 = scalar_lea.vmem %s3, 112
        %v1673 = vld [vmem:[%s1672] sm:$0xff]
        %v1675 = vsel %vm517, %v1673, 0
        %1677 = vmatpush.xpose.msra.mxu0 0.0
        %1678 = vmatpush.xpose.msra.mxu0 0.0
        %1679 = vmatpush.xpose.msra.mxu0 0.0
        %1680 = vmatpush.xpose.msra.mxu0 0.0
        %1681 = vmatpush.xpose.msra.mxu0 0.0
        %1682 = vmatpush.xpose.msra.mxu0 0.0
        %1683 = vmatpush.xpose.msra.mxu0 0.0
        %1684 = vmatpush.xpose.msra.mxu0 0.0
        %1685 = vmatpush.xpose.msra.mxu0 0.0
        %1686 = vmatpush.xpose.msra.mxu0 0.0
        %1687 = vmatpush.xpose.msra.mxu0 0.0
        %1688 = vmatpush.xpose.msra.mxu0 0.0
        %1689 = vmatpush.xpose.msra.mxu0 0.0
        %1690 = vmatpush.xpose.msra.mxu0 0.0
        %1691 = vmatpush.xpose.msra.mxu0 0.0
        %1692 = vmatpush.xpose.msra.mxu0 %v1675
        %1693 = vmatmul.f32.gmra.mxu0 %v1352
        %v1694 = vpop.f32.mrf.mxu0
        %v1695 = vadd.f32 0.0, %v1694
        %1696 = vdwg.mxu0
        %s1697 = scalar_lea.vmem %s3, 144
        %v1698 = vld [vmem:[%s1697] sm:$0xff]
        %v1700 = vsel %vm517, %v1698, 0
        %1702 = vmatpush.xpose.msra.mxu0 0.0
        %1703 = vmatpush.xpose.msra.mxu0 0.0
        %1704 = vmatpush.xpose.msra.mxu0 0.0
        %1705 = vmatpush.xpose.msra.mxu0 0.0
        %1706 = vmatpush.xpose.msra.mxu0 0.0
        %1707 = vmatpush.xpose.msra.mxu0 0.0
        %1708 = vmatpush.xpose.msra.mxu0 0.0
        %1709 = vmatpush.xpose.msra.mxu0 0.0
        %1710 = vmatpush.xpose.msra.mxu0 0.0
        %1711 = vmatpush.xpose.msra.mxu0 0.0
        %1712 = vmatpush.xpose.msra.mxu0 0.0
        %1713 = vmatpush.xpose.msra.mxu0 0.0
        %1714 = vmatpush.xpose.msra.mxu0 0.0
        %1715 = vmatpush.xpose.msra.mxu0 0.0
        %1716 = vmatpush.xpose.msra.mxu0 0.0
        %1717 = vmatpush.xpose.msra.mxu0 %v1700
        %1718 = vmatmul.f32.gmra.mxu0 %v1352
        %v1719 = vpop.f32.mrf.mxu0
        %v1720 = vadd.f32 0.0, %v1719
        %1721 = vdwg.mxu0
        %s1722 = scalar_lea.vmem %s3, 176
        %v1723 = vld [vmem:[%s1722] sm:$0xff]
        %v1725 = vsel %vm517, %v1723, 0
        %1727 = vmatpush.xpose.msra.mxu0 0.0
        %1728 = vmatpush.xpose.msra.mxu0 0.0
        %1729 = vmatpush.xpose.msra.mxu0 0.0
        %1730 = vmatpush.xpose.msra.mxu0 0.0
        %1731 = vmatpush.xpose.msra.mxu0 0.0
        %1732 = vmatpush.xpose.msra.mxu0 0.0
        %1733 = vmatpush.xpose.msra.mxu0 0.0
        %1734 = vmatpush.xpose.msra.mxu0 0.0
        %1735 = vmatpush.xpose.msra.mxu0 0.0
        %1736 = vmatpush.xpose.msra.mxu0 0.0
        %1737 = vmatpush.xpose.msra.mxu0 0.0
        %1738 = vmatpush.xpose.msra.mxu0 0.0
        %1739 = vmatpush.xpose.msra.mxu0 0.0
        %1740 = vmatpush.xpose.msra.mxu0 0.0
        %1741 = vmatpush.xpose.msra.mxu0 0.0
        %1742 = vmatpush.xpose.msra.mxu0 %v1725
        %1743 = vmatmul.f32.gmra.mxu0 %v1352
        %v1744 = vpop.f32.mrf.mxu0
        %v1745 = vadd.f32 0.0, %v1744
        %1746 = vdwg.mxu0
        %v1748 = vsel %vm632, %v1695, 0
        %v1751 = vsel %vm632, %v1720, 0
        %1753 = vmatpush.xpose.msra.mxu0 0.0
        %1754 = vmatpush.xpose.msra.mxu0 0.0
        %1755 = vmatpush.xpose.msra.mxu0 0.0
        %1756 = vmatpush.xpose.msra.mxu0 0.0
        %1757 = vmatpush.xpose.msra.mxu0 0.0
        %1758 = vmatpush.xpose.msra.mxu0 0.0
        %1759 = vmatpush.xpose.msra.mxu0 0.0
        %1760 = vmatpush.xpose.msra.mxu0 0.0
        %1761 = vmatpush.xpose.msra.mxu0 0.0
        %1762 = vmatpush.xpose.msra.mxu0 0.0
        %1763 = vmatpush.xpose.msra.mxu0 0.0
        %1764 = vmatpush.xpose.msra.mxu0 0.0
        %1765 = vmatpush.xpose.msra.mxu0 0.0
        %1766 = vmatpush.xpose.msra.mxu0 0.0
        %1767 = vmatpush.xpose.msra.mxu0 0.0
        %1768 = vmatpush.xpose.msra.mxu0 %v1751
        %1769 = vmatmul.f32.gmra.mxu0 %v1748
        %v1770 = vpop.f32.mrf.mxu0
        %v1771 = vadd.f32 0.0, %v1770
        %1772 = vdwg.mxu0
        %v1773 = vsel %vm632, %v1771, -inf
        %1774 = vmax.xlane.f32.xlu0 %v1773
        %v1775 = vpop.xlane.xlu0 %1774
        %v1776 = vsub.f32 %v1771, %v1775
        %v1777 = vmul.f32 %v1776, 1.442695
        %v1778 = vpow.pop %v1777
        %v1779 = vsel %vm632, %v1778, 0.0
        %1780 = vadd.xlane.f32.xlu0 %v1779
        %v1781 = vpop.xlane.xlu0 %1780
        %v1782 = vrcp.pop %v1781
        %v1783 = vmul.f32 %v1778, %v1782
        %v1785 = vsel %vm632, %v1783, 0
        %1787 = vmatpush.msra.mxu0 0.0
        %1788 = vmatpush.msra.mxu0 0.0
        %1789 = vmatpush.msra.mxu0 0.0
        %1790 = vmatpush.msra.mxu0 0.0
        %1791 = vmatpush.msra.mxu0 0.0
        %1792 = vmatpush.msra.mxu0 0.0
        %1793 = vmatpush.msra.mxu0 0.0
        %1794 = vmatpush.msra.mxu0 0.0
        %1795 = vmatpush.msra.mxu0 0.0
        %1796 = vmatpush.msra.mxu0 0.0
        %1797 = vmatpush.msra.mxu0 0.0
        %1798 = vmatpush.msra.mxu0 0.0
        %1799 = vmatpush.msra.mxu0 0.0
        %1800 = vmatpush.msra.mxu0 0.0
        %1801 = vmatpush.msra.mxu0 0.0
        %1802 = vmatpush.msra.mxu0 %v1745
        %1803 = vmatmul.f32.gmra.mxu0 %v1785
        %v1804 = vpop.f32.mrf.mxu0
        %v1805 = vadd.f32 0.0, %v1804
        %1806 = vdwg.mxu0
        %s1807 = scalar_lea.vmem [#allocation7], 48
        %v1808 = vld [vmem:[%s1807] sm:$0xff]
        %v1810 = vsel %vm632, %v1805, 0
        %1812 = vmatpush.msra.mxu0 0.0
        %1813 = vmatpush.msra.mxu0 0.0
        %1814 = vmatpush.msra.mxu0 0.0
        %1815 = vmatpush.msra.mxu0 0.0
        %1816 = vmatpush.msra.mxu0 0.0
        %1817 = vmatpush.msra.mxu0 0.0
        %1818 = vmatpush.msra.mxu0 0.0
        %1819 = vmatpush.msra.mxu0 0.0
        %1820 = vmatpush.msra.mxu0 0.0
        %1821 = vmatpush.msra.mxu0 0.0
        %1822 = vmatpush.msra.mxu0 0.0
        %1823 = vmatpush.msra.mxu0 0.0
        %1824 = vmatpush.msra.mxu0 0.0
        %1825 = vmatpush.msra.mxu0 0.0
        %1826 = vmatpush.msra.mxu0 0.0
        %1827 = vmatpush.msra.mxu0 %v1808
        %1828 = vmatmul.f32.gmra.mxu0 %v1810
        %v1829 = vpop.f32.mrf.mxu0
        %v1830 = vadd.f32 0.0, %v1829
        %1831 = vdwg.mxu0
        %v1832 = vadd.f32 %v1670, %v1830
        %s1833 = scalar_lea.vmem %s3, 120
        %v1834 = vld [vmem:[%s1833] sm:$0xff]
        %v1836 = vsel %vm517, %v1834, 0
        %1838 = vmatpush.xpose.msra.mxu0 0.0
        %1839 = vmatpush.xpose.msra.mxu0 0.0
        %1840 = vmatpush.xpose.msra.mxu0 0.0
        %1841 = vmatpush.xpose.msra.mxu0 0.0
        %1842 = vmatpush.xpose.msra.mxu0 0.0
        %1843 = vmatpush.xpose.msra.mxu0 0.0
        %1844 = vmatpush.xpose.msra.mxu0 0.0
        %1845 = vmatpush.xpose.msra.mxu0 0.0
        %1846 = vmatpush.xpose.msra.mxu0 0.0
        %1847 = vmatpush.xpose.msra.mxu0 0.0
        %1848 = vmatpush.xpose.msra.mxu0 0.0
        %1849 = vmatpush.xpose.msra.mxu0 0.0
        %1850 = vmatpush.xpose.msra.mxu0 0.0
        %1851 = vmatpush.xpose.msra.mxu0 0.0
        %1852 = vmatpush.xpose.msra.mxu0 0.0
        %1853 = vmatpush.xpose.msra.mxu0 %v1836
        %1854 = vmatmul.f32.gmra.mxu0 %v1352
        %v1855 = vpop.f32.mrf.mxu0
        %v1856 = vadd.f32 0.0, %v1855
        %1857 = vdwg.mxu0
        %s1858 = scalar_lea.vmem %s3, 152
        %v1859 = vld [vmem:[%s1858] sm:$0xff]
        %v1861 = vsel %vm517, %v1859, 0
        %1863 = vmatpush.xpose.msra.mxu0 0.0
        %1864 = vmatpush.xpose.msra.mxu0 0.0
        %1865 = vmatpush.xpose.msra.mxu0 0.0
        %1866 = vmatpush.xpose.msra.mxu0 0.0
        %1867 = vmatpush.xpose.msra.mxu0 0.0
        %1868 = vmatpush.xpose.msra.mxu0 0.0
        %1869 = vmatpush.xpose.msra.mxu0 0.0
        %1870 = vmatpush.xpose.msra.mxu0 0.0
        %1871 = vmatpush.xpose.msra.mxu0 0.0
        %1872 = vmatpush.xpose.msra.mxu0 0.0
        %1873 = vmatpush.xpose.msra.mxu0 0.0
        %1874 = vmatpush.xpose.msra.mxu0 0.0
        %1875 = vmatpush.xpose.msra.mxu0 0.0
        %1876 = vmatpush.xpose.msra.mxu0 0.0
        %1877 = vmatpush.xpose.msra.mxu0 0.0
        %1878 = vmatpush.xpose.msra.mxu0 %v1861
        %1879 = vmatmul.f32.gmra.mxu0 %v1352
        %v1880 = vpop.f32.mrf.mxu0
        %v1881 = vadd.f32 0.0, %v1880
        %1882 = vdwg.mxu0
        %s1883 = scalar_lea.vmem %s3, 184
        %v1884 = vld [vmem:[%s1883] sm:$0xff]
        %v1886 = vsel %vm517, %v1884, 0
        %1888 = vmatpush.xpose.msra.mxu0 0.0
        %1889 = vmatpush.xpose.msra.mxu0 0.0
        %1890 = vmatpush.xpose.msra.mxu0 0.0
        %1891 = vmatpush.xpose.msra.mxu0 0.0
        %1892 = vmatpush.xpose.msra.mxu0 0.0
        %1893 = vmatpush.xpose.msra.mxu0 0.0
        %1894 = vmatpush.xpose.msra.mxu0 0.0
        %1895 = vmatpush.xpose.msra.mxu0 0.0
        %1896 = vmatpush.xpose.msra.mxu0 0.0
        %1897 = vmatpush.xpose.msra.mxu0 0.0
        %1898 = vmatpush.xpose.msra.mxu0 0.0
        %1899 = vmatpush.xpose.msra.mxu0 0.0
        %1900 = vmatpush.xpose.msra.mxu0 0.0
        %1901 = vmatpush.xpose.msra.mxu0 0.0
        %1902 = vmatpush.xpose.msra.mxu0 0.0
        %1903 = vmatpush.xpose.msra.mxu0 %v1886
        %1904 = vmatmul.f32.gmra.mxu0 %v1352
        %v1905 = vpop.f32.mrf.mxu0
        %v1906 = vadd.f32 0.0, %v1905
        %1907 = vdwg.mxu0
        %v1909 = vsel %vm632, %v1856, 0
        %v1912 = vsel %vm632, %v1881, 0
        %1914 = vmatpush.xpose.msra.mxu0 0.0
        %1915 = vmatpush.xpose.msra.mxu0 0.0
        %1916 = vmatpush.xpose.msra.mxu0 0.0
        %1917 = vmatpush.xpose.msra.mxu0 0.0
        %1918 = vmatpush.xpose.msra.mxu0 0.0
        %1919 = vmatpush.xpose.msra.mxu0 0.0
        %1920 = vmatpush.xpose.msra.mxu0 0.0
        %1921 = vmatpush.xpose.msra.mxu0 0.0
        %1922 = vmatpush.xpose.msra.mxu0 0.0
        %1923 = vmatpush.xpose.msra.mxu0 0.0
        %1924 = vmatpush.xpose.msra.mxu0 0.0
        %1925 = vmatpush.xpose.msra.mxu0 0.0
        %1926 = vmatpush.xpose.msra.mxu0 0.0
        %1927 = vmatpush.xpose.msra.mxu0 0.0
        %1928 = vmatpush.xpose.msra.mxu0 0.0
        %1929 = vmatpush.xpose.msra.mxu0 %v1912
        %1930 = vmatmul.f32.gmra.mxu0 %v1909
        %v1931 = vpop.f32.mrf.mxu0
        %v1932 = vadd.f32 0.0, %v1931
        %1933 = vdwg.mxu0
        %v1934 = vsel %vm632, %v1932, -inf
        %1935 = vmax.xlane.f32.xlu0 %v1934
        %v1936 = vpop.xlane.xlu0 %1935
        %v1937 = vsub.f32 %v1932, %v1936
        %v1938 = vmul.f32 %v1937, 1.442695
        %v1939 = vpow.pop %v1938
        %v1940 = vsel %vm632, %v1939, 0.0
        %1941 = vadd.xlane.f32.xlu0 %v1940
        %v1942 = vpop.xlane.xlu0 %1941
        %v1943 = vrcp.pop %v1942
        %v1944 = vmul.f32 %v1939, %v1943
        %v1946 = vsel %vm632, %v1944, 0
        %1948 = vmatpush.msra.mxu0 0.0
        %1949 = vmatpush.msra.mxu0 0.0
        %1950 = vmatpush.msra.mxu0 0.0
        %1951 = vmatpush.msra.mxu0 0.0
        %1952 = vmatpush.msra.mxu0 0.0
        %1953 = vmatpush.msra.mxu0 0.0
        %1954 = vmatpush.msra.mxu0 0.0
        %1955 = vmatpush.msra.mxu0 0.0
        %1956 = vmatpush.msra.mxu0 0.0
        %1957 = vmatpush.msra.mxu0 0.0
        %1958 = vmatpush.msra.mxu0 0.0
        %1959 = vmatpush.msra.mxu0 0.0
        %1960 = vmatpush.msra.mxu0 0.0
        %1961 = vmatpush.msra.mxu0 0.0
        %1962 = vmatpush.msra.mxu0 0.0
        %1963 = vmatpush.msra.mxu0 %v1906
        %1964 = vmatmul.f32.gmra.mxu0 %v1946
        %v1965 = vpop.f32.mrf.mxu0
        %v1966 = vadd.f32 0.0, %v1965
        %1967 = vdwg.mxu0
        %s1968 = scalar_lea.vmem [#allocation7], 56
        %v1969 = vld [vmem:[%s1968] sm:$0xff]
        %v1971 = vsel %vm632, %v1966, 0
        %1973 = vmatpush.msra.mxu0 0.0
        %1974 = vmatpush.msra.mxu0 0.0
        %1975 = vmatpush.msra.mxu0 0.0
        %1976 = vmatpush.msra.mxu0 0.0
        %1977 = vmatpush.msra.mxu0 0.0
        %1978 = vmatpush.msra.mxu0 0.0
        %1979 = vmatpush.msra.mxu0 0.0
        %1980 = vmatpush.msra.mxu0 0.0
        %1981 = vmatpush.msra.mxu0 0.0
        %1982 = vmatpush.msra.mxu0 0.0
        %1983 = vmatpush.msra.mxu0 0.0
        %1984 = vmatpush.msra.mxu0 0.0
        %1985 = vmatpush.msra.mxu0 0.0
        %1986 = vmatpush.msra.mxu0 0.0
        %1987 = vmatpush.msra.mxu0 0.0
        %1988 = vmatpush.msra.mxu0 %v1969
        %1989 = vmatmul.f32.gmra.mxu0 %v1971
        %v1990 = vpop.f32.mrf.mxu0
        %v1991 = vadd.f32 0.0, %v1990
        %1992 = vdwg.mxu0
        %v1993 = vadd.f32 %v1832, %v1991
        %v1994 = vadd.f32 %v1314, %v1993
        %s1995 = scalar_lea.vmem [#allocation8], 1
        %v1996 = vld [vmem:[%s1995] sm:$0x1]
        %v1998 = vperm.slane %v1996, 0
        %v2000 = vadd.f32 %v1994, %v1998
        %s2001 = scalar_lea.vmem %s6, 1
        %v2002 = vld [vmem:[%s2001] sm:$0x1]
        %s2003 = scalar_lea.vmem [#allocation10], 1
        %v2004 = vld [vmem:[%s2003] sm:$0x1]
        %v2005 = vsel %vm517, %v2000, 0.0
        %2006 = vadd.xlane.f32.xlu0 %v2005
        %v2007 = vpop.xlane.xlu0 %2006
        %v2008 = vmul.f32 %v2007, %v527
        %v2009 = vsub.f32 %v2000, %v2008
        %v2010 = vmul.f32 %v2009, %v2009
        %v2011 = vsel %vm517, %v2010, 0.0
        %2012 = vadd.xlane.f32.xlu0 %v2011
        %v2013 = vpop.xlane.xlu0 %2012
        %v2014 = vmul.f32 %v2013, %v527
        %v2015 = vadd.f32 %v2014, 1e-05
        %v2016 = vrsqrt.pop %v2015
        %v2017 = vmul.f32 %v2016, %v2015
        %v2018 = vmul.f32 %v2017, %v2016
        %v2019 = vmul.f32 0.5, %v2018
        %v2020 = vsub.f32 1.5, %v2019
        %v2021 = vmul.f32 %v2016, %v2020
        %vm2022 = vweird.f32 %v2015
        %vm2023 = vweird.f32 %v2016
        %vm2024 = vmor %vm2022, %vm2023
        %v2025 = vsel %vm2024, %v2016, %v2021
        %v2026 = vmul.f32 %v2009, %v2025
        %v2028 = vperm.slane %v2002, 0
        %v2030 = vmul.f32 %v2026, %v2028
        %v2032 = vperm.slane %v2004, 0
        %v2034 = vadd.f32 %v2030, %v2032
        %s2035 = scalar_lea.vmem [#allocation11], 32
        %v2036 = vld [vmem:[%s2035] sm:$0xff]
        %v2037 = vld [vmem:[%s2035 + $0x8] sm:$0xff]
        %v2038 = vld [vmem:[%s2035 + $0x10] sm:$0xff]
        %v2039 = vld [vmem:[%s2035 + $0x18] sm:$0xff]
        %s2040 = scalar_lea.vmem %s9, 1
        %v2041 = vld [vmem:[%s2040] sm:$0x1]
        %v2043 = vperm.slane %v2041, 0
        %v2046 = vsel %vm517, %v2034, 0
        %2048 = vmatpush.msra.mxu0 0.0
        %2049 = vmatpush.msra.mxu0 0.0
        %2050 = vmatpush.msra.mxu0 0.0
        %2051 = vmatpush.msra.mxu0 0.0
        %2052 = vmatpush.msra.mxu0 0.0
        %2053 = vmatpush.msra.mxu0 0.0
        %2054 = vmatpush.msra.mxu0 0.0
        %2055 = vmatpush.msra.mxu0 0.0
        %2056 = vmatpush.msra.mxu0 0.0
        %2057 = vmatpush.msra.mxu0 0.0
        %2058 = vmatpush.msra.mxu0 0.0
        %2059 = vmatpush.msra.mxu0 0.0
        %2060 = vmatpush.msra.mxu0 %v2039
        %2061 = vmatpush.msra.mxu0 %v2038
        %2062 = vmatpush.msra.mxu0 %v2037
        %2063 = vmatpush.msra.mxu0 %v2036
        %2064 = vmatmul.f32.gmra.mxu0 %v2046
        %v2065 = vpop.f32.mrf.mxu0
        %v2066 = vadd.f32 %v2043, %v2065
        %2067 = vdwg.mxu0
        %v2068 = vmul.f32 %v2066, %v2066
        %v2069 = vmul.f32 %v2066, %v2068
        %v2070 = vmul.f32 %v2069, 0.044715
        %v2071 = vadd.f32 %v2066, %v2070
        %v2072 = vmul.f32 %v2071, 0.7978846
        %v2073 = vtanh.pop %v2072
        %v2074 = vadd.f32 %v2073, 1.0
        %v2075 = vmul.f32 %v2074, 0.5
        %v2076 = vmul.f32 %v2066, %v2075
        %s2077 = scalar_lea.vmem %s10, 64
        %v2078 = vld [vmem:[%s2077] sm:$0xff]
        %v2079 = vld [vmem:[%s2077 + $0x8] sm:$0xff]
        %v2080 = vld [vmem:[%s2077 + $0x10] sm:$0xff]
        %v2081 = vld [vmem:[%s2077 + $0x18] sm:$0xff]
        %v2082 = vld [vmem:[%s2077 + $0x20] sm:$0xff]
        %v2083 = vld [vmem:[%s2077 + $0x28] sm:$0xff]
        %v2084 = vld [vmem:[%s2077 + $0x30] sm:$0xff]
        %v2085 = vld [vmem:[%s2077 + $0x38] sm:$0xff]
        %v2087 = vsel %vm1285, %v2076, 0
        %2089 = vmatpush.msra.mxu0 0.0
        %2090 = vmatpush.msra.mxu0 0.0
        %2091 = vmatpush.msra.mxu0 0.0
        %2092 = vmatpush.msra.mxu0 0.0
        %2093 = vmatpush.msra.mxu0 0.0
        %2094 = vmatpush.msra.mxu0 0.0
        %2095 = vmatpush.msra.mxu0 0.0
        %2096 = vmatpush.msra.mxu0 0.0
        %2097 = vmatpush.msra.mxu0 %v2085
        %2098 = vmatpush.msra.mxu0 %v2084
        %2099 = vmatpush.msra.mxu0 %v2083
        %2100 = vmatpush.msra.mxu0 %v2082
        %2101 = vmatpush.msra.mxu0 %v2081
        %2102 = vmatpush.msra.mxu0 %v2080
        %2103 = vmatpush.msra.mxu0 %v2079
        %2104 = vmatpush.msra.mxu0 %v2078
        %2105 = vmatmul.f32.gmra.mxu0 %v2087
        %v2106 = vpop.f32.mrf.mxu0
        %v2107 = vadd.f32 0.0, %v2106
        %2108 = vdwg.mxu0
        %v2109 = vadd.f32 %v2000, %v2107
        %s2110 = scalar_lea.vmem %s11, 1
        %v2111 = vld [vmem:[%s2110] sm:$0x1]
        %v2113 = vperm.slane %v2111, 0
        %v2115 = vadd.f32 %v2109, %v2113
        %2116 = vst.msk [vmem:[%s513] sm:$0xff] %vm517, %v2115
        %s2117 = sand.u32 %s297, 1
        %s2118 = scalar_lea.sflag [#allocation4], %s2117
        %s2119 = sand.u32 %s297, 1
        %s2120 = smul.addr %s2119, 8
        %s2121 = scalar_lea.vmem [#allocation13], %s2120
        // Predicated region
        $region93: #{tpu_custom_call.1} parent=67 // pred_check
          %p2122 = pneg %p307
        $region94: #{tpu_custom_call.1} parent=67 // pred_check_branch
          %2124 = sbr.rel (%p2122) target = $region96
        $region95: #{tpu_custom_call.1} parent=67 // pred_region
          %2126 = vsyncadd %s2118, 0
          %s2127 = smul.addr %s32, 8
          %s2128 = scalar_lea.hbm %s12, %s2127
          %s2130 = sshll.u32 %s2121, 4
          %s2131 = int_to_ptr.vmem [resolvable:$true] %s2130
          %s2132 = sshll.u32 %s2128, 4
          %s2133 = int_to_ptr.hbm [resolvable:$true] %s2132
          %2135 = dma.vmem_to_hbm [thread:$0]  %s2131, 128, %s2133, %s2118
        $region96: #{tpu_custom_call.1} parent=67 // pred_fallthru
          _
      $region68: #{tpu_custom_call.1} parent=5 // pred_fallthru
        _
      %p2136 = scmp.le.s32.totalorder 2, %s27
      // Predicated region
      $region97: #{tpu_custom_call.1} parent=5 // pred_check
        %p2137 = pneg %p2136
      $region98: #{tpu_custom_call.1} parent=5 // pred_check_branch
        %2139 = sbr.rel (%p2137) target = $region100
      $region99: #{tpu_custom_call.1} parent=5 // pred_region
        %s2140 = ssub.s32 %s27, 2
        // Predicated region
        $region101: #{tpu_custom_call.1} parent=99 // pred_check
          %p2141 = pneg %p313
        $region102: #{tpu_custom_call.1} parent=99 // pred_check_branch
          %2143 = sbr.rel (%p2141) target = $region104
        $region103: #{tpu_custom_call.1} parent=99 // pred_region
          %s2144 = sand.u32 %s298, 1
          %s2145 = scalar_lea.sflag [#allocation4], %s2144
          %s2146 = sand.u32 %s298, 1
          %s2147 = smul.addr %s2146, 8
          %s2148 = scalar_lea.vmem [#allocation13], %s2147
          %2150 = dma.done %s2145, 128
        $region104: #{tpu_custom_call.1} parent=99 // pred_fallthru
          _
      $region100: #{tpu_custom_call.1} parent=5 // pred_fallthru
        _
    $region6: #{tpu_custom_call.1} parent=1 // loop_footer
      %s31 = sadd.s32 1, %s27
    $region7: #{tpu_custom_call.1} parent=1 // loop_footer_branch
      %26 = sbr.rel target = $region3
    $region8: #{tpu_custom_call.1} parent=1 // loop_exit
      _
    %2151 = vsyncpa [#allocation3], 1
    %s2152 = scalar_lea.sflag [#allocation3], 1
    %2153 = vsyncpa %s2152, 1
    %2154 = vsyncpa [#allocation6], 1
    %2155 = vsyncpa [#allocation9], 1
    %2156 = vsyncpa [#allocation12], 1
    %2157 = vsyncpa [#allocation4], 1
    %s2158 = scalar_lea.sflag [#allocation4], 1
    %2159 = vsyncpa %s2158, 1

</llo_original>
